<compile_context>
chip_gen: v7x
topology: tpu7x:2x2x1
jax: 0.10.0
libtpu: 0.0.40
codegen_flags: <defaults>
</compile_context>

<pallas_src>
import functools

import jax
import jax.numpy as jnp
from jax import lax
from jax.experimental import pallas as pl
from jax.experimental.pallas import tpu as pltpu


def _round_up(x, m):
    return (x + m - 1) // m * m


def _vmem_tile_bytes(shape, dtype):
    """Rough VMEM footprint of one buffered tile (minor dim -> 128 lanes, 2nd minor -> 8)."""
    s = list(shape)
    if len(s) >= 1:
        s[-1] = _round_up(s[-1], 128)
    if len(s) >= 2:
        s[-2] = _round_up(s[-2], 8)
    n = 1
    for d in s:
        n *= int(d)
    return n * jnp.dtype(dtype).itemsize


def _conv_stats_kernel(x_ref, w_ref, y_ref, st_ref, *, kh, kw, stride, hout):
    """Direct conv for one (image, output-row tile) + centered per-tile BN partial stats.

    x_ref : (1, Hp, Wp, Cin)    bf16  whole padded image (resident while n is fixed)
    w_ref : (kh*kw, Cin, Cout)  bf16  resident weights
    y_ref : (1, th, Wout, Cout) bf16  conv output tile (NHWC, real channels only)
    st_ref: (1, 1, 2, Cout)     f32   [tile mean, tile centered M2]
    """
    _, th, wout, cout = y_ref.shape
    cin = x_ref.shape[-1]
    rows = th * wout

    hb = pl.program_id(1)
    h0 = hb * th                      # first output row of this tile
    r0 = h0 * stride                  # corresponding input row offset (before +di)

    acc = jnp.zeros((rows, cout), jnp.float32)
    for di in range(kh):              # static unroll: kh*kw small MXU matmuls, f32 accumulate
        for dj in range(kw):
            if stride == 1:
                rows_sl = pl.ds(r0 + di, th)
                cols_sl = pl.ds(dj, wout)
            else:
                rows_sl = pl.ds(r0 + di, th, stride)
                cols_sl = pl.ds(dj, wout, stride)
            xs = x_ref[0, rows_sl, cols_sl, :]                 # (th, Wout, Cin) bf16, in VMEM
            acc += jnp.dot(xs.reshape(rows, cin), w_ref[di * kw + dj],
                           preferred_element_type=jnp.float32)

    # Compact bf16 NHWC tile; stats below use the f32 accumulator (no precision loss).
    y_ref[...] = acc.reshape(y_ref.shape).astype(y_ref.dtype)

    # Centered per-tile BN partials over the *valid* rows (last h-tile may overrun Hout).
    n_valid_rows = jnp.minimum(th, hout - h0)
    n_valid = (n_valid_rows * wout).astype(jnp.float32)
    row_ids = lax.broadcasted_iota(jnp.int32, (rows, 1), 0)
    valid = row_ids < n_valid_rows * wout
    tile_sum = jnp.sum(jnp.where(valid, acc, 0.0), axis=0, keepdims=True)    # (1, Cout)
    tile_mean = tile_sum / n_valid
    dev = jnp.where(valid, acc - tile_mean, 0.0)
    tile_m2 = jnp.sum(dev * dev, axis=0, keepdims=True)                      # (1, Cout)
    st_ref[...] = jnp.concatenate([tile_mean, tile_m2], axis=0).reshape(st_ref.shape)


def _bn_relu_nchw_kernel(y_ref, scale_ref, shift_ref, o_ref):
    """Folded BN scale/shift + ReLU; writes the final NCHW tile (on-chip NHWC->NCHW)."""
    _, th, wout, cout = y_ref.shape
    y = y_ref[...].reshape(th * wout, cout).astype(jnp.float32)
    v = jnp.maximum(y * scale_ref[...] + shift_ref[...], 0.0)      # (th*Wout, Cout)
    for t in range(th):                      # static unroll: tiny (Wout, Cout) 2-D transposes
        o_ref[0, :, t, :] = v[t * wout:(t + 1) * wout, :].T        # (Cout, Wout)


def conv_bn_relu_forward(x, weight, bias, gamma, beta, *, stride, padding, eps=1e-5):
    # NOTE: the conv bias cancels exactly inside BatchNorm's normalization, so it is
    # intentionally unused; the output matches the PyTorch module in exact arithmetic.
    del bias

    N, Cin, H, W = x.shape
    Cout, Cin_w, kh, kw = weight.shape
    assert Cin == Cin_w
    Hout = (H + 2 * padding - kh) // stride + 1
    Wout = (W + 2 * padding - kw) // stride + 1
    M = N * Hout * Wout

    # Output-row tile: multiple of 8 sublanes; small enough that the (N, HB) grid has several
    # steps so v7x's second TensorCore gets work via the "parallel" dimension semantics.
    if Hout <= 8:
        th = Hout
    else:
        th = max(8, min(32, (Hout // 2) // 8 * 8))
    HB = pl.cdiv(Hout, th)
    Hout_pad = HB * th

    # Zero-pad the input (NHWC, bf16).  Extra H rows guarantee the last (possibly overrunning)
    # h-tile only ever reads zeros -- no OOB reads; its garbage rows are masked out of stats.
    Hp_needed = (Hout_pad - 1) * stride + kh
    Wp = W + 2 * padding
    extra_h = max(0, Hp_needed - (H + 2 * padding))
    Hp = H + 2 * padding + extra_h
    x_nhwc = jnp.transpose(x, (0, 2, 3, 1))
    xp = jnp.pad(x_nhwc, ((0, 0), (padding, padding + extra_h),
                          (padding, padding), (0, 0))).astype(jnp.bfloat16)

    # Weights as (kh*kw, Cin, Cout) bf16 so w_ref[di*kw + dj] is the (Cin, Cout) matmul operand.
    w_r = jnp.transpose(weight, (2, 3, 1, 0)).reshape(kh * kw, Cin, Cout).astype(jnp.bfloat16)

    x_block = (1, Hp, Wp, Cin)
    w_block = (kh * kw, Cin, Cout)
    y_block = (1, th, Wout, Cout)
    st_block = (1, 1, 2, Cout)
    # TODO(synk): for very large Cin*H*W images (whole-image block > ~16 MiB) band the input
    # block over H instead of loading the full image per grid step.

    k1_vmem = 2 * (_vmem_tile_bytes(x_block, jnp.bfloat16)
                   + _vmem_tile_bytes(w_block, jnp.bfloat16)
                   + _vmem_tile_bytes(y_block, jnp.bfloat16)
                   + _vmem_tile_bytes(st_block, jnp.float32))
    k1_vmem = int(min(100 * 1024 * 1024, max(4 * 1024 * 1024, 2 * k1_vmem)))

    # ---- kernel 1: direct conv (no HBM im2col) + centered per-tile BN partial stats ----
    kernel1 = functools.partial(_conv_stats_kernel, kh=kh, kw=kw, stride=stride, hout=Hout)
    y, stats = pl.pallas_call(
        kernel1,
        out_shape=(
            jax.ShapeDtypeStruct((N, Hout_pad, Wout, Cout), jnp.bfloat16),
            jax.ShapeDtypeStruct((N, HB, 2, Cout), jnp.float32),
        ),
        grid_spec=pltpu.PrefetchScalarGridSpec(
            num_scalar_prefetch=0,
            grid=(N, HB),
            in_specs=[
                pl.BlockSpec(x_block, lambda n, hb: (n, 0, 0, 0)),   # whole image, resident per n
                pl.BlockSpec(w_block, lambda n, hb: (0, 0, 0)),      # resident weights
            ],
            out_specs=(
                pl.BlockSpec(y_block, lambda n, hb: (n, hb, 0, 0)),
                pl.BlockSpec(st_block, lambda n, hb: (n, hb, 0, 0)),
            ),
        ),
        compiler_params=pltpu.CompilerParams(
            dimension_semantics=("parallel", "parallel"),   # no cross-step state
            vmem_limit_bytes=k1_vmem,
        ),
        cost_estimate=pl.CostEstimate(
            flops=2 * N * Hout_pad * Wout * kh * kw * Cin * Cout,
            transcendentals=0,
            bytes_accessed=int(xp.size * 2 + w_r.size * 2
                               + N * Hout_pad * Wout * Cout * 2 + N * HB * 2 * Cout * 4),
        ),
    )(xp, w_r)

    # ---- combine centered per-tile partials (Chan) -> biased variance, like torch BN ----
    counts = (jnp.minimum(th, Hout - jnp.arange(HB) * th) * Wout).astype(jnp.float32)  # (HB,)
    tile_mean = stats[:, :, 0, :]                       # (N, HB, Cout)
    tile_m2 = stats[:, :, 1, :]
    wgt = counts[None, :, None]
    mean = jnp.sum(wgt * tile_mean, axis=(0, 1)) / M                     # (Cout,)
    m2 = (jnp.sum(tile_m2, axis=(0, 1))
          + jnp.sum(wgt * (tile_mean - mean) ** 2, axis=(0, 1)))
    var = m2 / M
    scale = (gamma * lax.rsqrt(var + eps)).astype(jnp.float32)
    shift = (beta - mean * scale).astype(jnp.float32)
    scale_row = scale.reshape(1, Cout)
    shift_row = shift.reshape(1, Cout)

    # ---- kernel 2: fused BN + ReLU, writes the final NCHW output directly ----
    o_block = (1, Cout, th, Wout)
    k2_vmem = 2 * (_vmem_tile_bytes(y_block, jnp.bfloat16)
                   + 2 * _vmem_tile_bytes((1, Cout), jnp.float32)
                   + _vmem_tile_bytes(o_block, jnp.float32))
    k2_vmem = int(min(100 * 1024 * 1024, max(4 * 1024 * 1024, 2 * k2_vmem)))

    out = pl.pallas_call(
        _bn_relu_nchw_kernel,
        out_shape=jax.ShapeDtypeStruct((N, Cout, Hout, Wout), jnp.float32),
        grid_spec=pltpu.PrefetchScalarGridSpec(
            num_scalar_prefetch=0,
            grid=(N, HB),
            in_specs=[
                pl.BlockSpec(y_block, lambda n, hb: (n, hb, 0, 0)),
                pl.BlockSpec((1, Cout), lambda n, hb: (0, 0)),
                pl.BlockSpec((1, Cout), lambda n, hb: (0, 0)),
            ],
            out_specs=pl.BlockSpec(o_block, lambda n, hb: (n, 0, hb, 0)),
        ),
        compiler_params=pltpu.CompilerParams(
            dimension_semantics=("parallel", "parallel"),
            vmem_limit_bytes=k2_vmem,
        ),
        cost_estimate=pl.CostEstimate(
            flops=3 * N * Hout * Wout * Cout,
            transcendentals=0,
            bytes_accessed=int(N * Hout_pad * Wout * Cout * 2 + N * Cout * Hout * Wout * 4),
        ),
    )(y, scale_row, shift_row)

    return out


def _reference(x, weight, bias, gamma, beta, *, stride, padding, eps=1e-5):
    y = lax.conv_general_dilated(
        x, weight, (stride, stride),
        [(padding, padding), (padding, padding)],
        dimension_numbers=("NCHW", "OIHW", "NCHW"),
        precision=lax.Precision.HIGHEST)
    y = y + bias.reshape(1, -1, 1, 1)
    mean = jnp.mean(y, axis=(0, 2, 3), keepdims=True)
    var = jnp.mean((y - mean) ** 2, axis=(0, 2, 3), keepdims=True)   # biased, like torch
    yhat = (y - mean) * lax.rsqrt(var + eps)
    return jnp.maximum(gamma.reshape(1, -1, 1, 1) * yhat + beta.reshape(1, -1, 1, 1), 0.0)


if __name__ == "__main__":
    # conv_bn_relu(input=4, output=8, kernel=3, stride=1, padding=1)
    N, Cin, H, W = 2, 4, 16, 16
    Cout, kh, kw = 8, 3, 3
    stride, padding = 1, 1

    key = jax.random.PRNGKey(0)
    kx, kw_, kb, kg, kbeta = jax.random.split(key, 5)

    x = jax.random.normal(kx, (N, Cin, H, W), dtype=jnp.float32)
    weight = 0.1 * jax.random.normal(kw_, (Cout, Cin, kh, kw), dtype=jnp.float32)
    bias = 0.1 * jax.random.normal(kb, (Cout,), dtype=jnp.float32)
    gamma = 1.0 + 0.1 * jax.random.normal(kg, (Cout,), dtype=jnp.float32)
    beta = 0.1 * jax.random.normal(kbeta, (Cout,), dtype=jnp.float32)

    fwd = jax.jit(functools.partial(conv_bn_relu_forward, stride=stride, padding=padding))
    out = jax.block_until_ready(fwd(x, weight, bias, gamma, beta))

    ref = _reference(x, weight, bias, gamma, beta, stride=stride, padding=padding)
    assert out.shape == (N, Cout, H, W), out.shape
    # Tolerance reflects bf16 MXU inputs (f32 accumulation) vs the f32-HIGHEST reference.
    assert jnp.allclose(out, ref, atol=1e-2, rtol=1e-2), float(jnp.max(jnp.abs(out - ref)))

    print("KERNEL_OK")
</pallas_src>

<mosaic_0001>
module attributes {stable_mosaic.version = 11 : i64} {
  func.func @_bn_relu_nchw_kernel(%arg0: i32, %arg1: i32, %arg2: memref<1x8x16x8xbf16, #tpu.memory_space<vmem>>, %arg3: memref<1x8xf32, #tpu.memory_space<vmem>>, %arg4: memref<1x8xf32, #tpu.memory_space<vmem>>, %arg5: memref<1x8x8x16xf32, #tpu.memory_space<vmem>>) attributes {dimension_semantics = [#tpu.dimension_semantics<parallel>, #tpu.dimension_semantics<parallel>], iteration_bounds = array<i64: 2, 2>, scalar_prefetch = 0 : i64, scratch_operands = 0 : i64, tpu.core_type = #tpu.core_type<tc>, window_params = [{transform_indices = @transform_0, window_bounds = array<i64: 1, 8, 16, 8>}, {pipeline_mode = #tpu.pipeline_mode<synchronous>, transform_indices = @transform_1, window_bounds = array<i64: 1, 8>}, {pipeline_mode = #tpu.pipeline_mode<synchronous>, transform_indices = @transform_2, window_bounds = array<i64: 1, 8>}, {transform_indices = @transform_3, window_bounds = array<i64: 1, 8, 8, 16>}]} {
    %c0 = arith.constant 0 : index
    %c0_0 = arith.constant 0 : index
    %c0_1 = arith.constant 0 : index
    %c0_2 = arith.constant 0 : index
    %0 = vector.load %arg2[%c0, %c0_0, %c0_1, %c0_2] : memref<1x8x16x8xbf16, #tpu.memory_space<vmem>>, vector<1x8x16x8xbf16>
    %1 = vector.shape_cast %0 : vector<1x8x16x8xbf16> to vector<128x8xbf16>
    %2 = arith.extf %1 : vector<128x8xbf16> to vector<128x8xf32>
    %c0_3 = arith.constant 0 : index
    %c0_4 = arith.constant 0 : index
    %3 = vector.load %arg3[%c0_3, %c0_4] : memref<1x8xf32, #tpu.memory_space<vmem>>, vector<1x8xf32>
    %4 = vector.broadcast %3 : vector<1x8xf32> to vector<128x8xf32>
    %5 = arith.mulf %2, %4 : vector<128x8xf32>
    %c0_5 = arith.constant 0 : index
    %c0_6 = arith.constant 0 : index
    %6 = vector.load %arg4[%c0_5, %c0_6] : memref<1x8xf32, #tpu.memory_space<vmem>>, vector<1x8xf32>
    %7 = vector.broadcast %6 : vector<1x8xf32> to vector<128x8xf32>
    %8 = arith.addf %5, %7 : vector<128x8xf32>
    %cst = arith.constant 0.000000e+00 : f32
    %9 = vector.broadcast %cst : f32 to vector<128x8xf32>
    %10 = arith.maximumf %8, %9 : vector<128x8xf32>
    %11 = vector.extract_strided_slice %10 {offsets = [0, 0], sizes = [16, 8], strides = [1, 1]} : vector<128x8xf32> to vector<16x8xf32>
    %12 = tpu.transpose %11, [1, 0] : vector<16x8xf32> -> vector<8x16xf32>
    %c0_7 = arith.constant 0 : index
    %c0_8 = arith.constant 0 : index
    %c0_9 = arith.constant 0 : index
    %c0_10 = arith.constant 0 : index
    %13 = vector.load %arg5[%c0_7, %c0_8, %c0_9, %c0_10] : memref<1x8x8x16xf32, #tpu.memory_space<vmem>>, vector<1x8x1x16xf32>
    %14 = vector.shape_cast %13 : vector<1x8x1x16xf32> to vector<8x16xf32>
    %15 = vector.shape_cast %12 : vector<8x16xf32> to vector<1x8x1x16xf32>
    tpu.vector_store %arg5[%c0_7, %c0_8, %c0_9, %c0_10], %15 {strides = array<i32>} : memref<1x8x8x16xf32, #tpu.memory_space<vmem>>, vector<1x8x1x16xf32>,
    %16 = vector.extract_strided_slice %10 {offsets = [16, 0], sizes = [16, 8], strides = [1, 1]} : vector<128x8xf32> to vector<16x8xf32>
    %17 = tpu.transpose %16, [1, 0] : vector<16x8xf32> -> vector<8x16xf32>
    %c0_11 = arith.constant 0 : index
    %c0_12 = arith.constant 0 : index
    %c1 = arith.constant 1 : index
    %c0_13 = arith.constant 0 : index
    %18 = vector.load %arg5[%c0_11, %c0_12, %c1, %c0_13] : memref<1x8x8x16xf32, #tpu.memory_space<vmem>>, vector<1x8x1x16xf32>
    %19 = vector.shape_cast %18 : vector<1x8x1x16xf32> to vector<8x16xf32>
    %20 = vector.shape_cast %17 : vector<8x16xf32> to vector<1x8x1x16xf32>
    tpu.vector_store %arg5[%c0_11, %c0_12, %c1, %c0_13], %20 {strides = array<i32>} : memref<1x8x8x16xf32, #tpu.memory_space<vmem>>, vector<1x8x1x16xf32>,
    %21 = vector.extract_strided_slice %10 {offsets = [32, 0], sizes = [16, 8], strides = [1, 1]} : vector<128x8xf32> to vector<16x8xf32>
    %22 = tpu.transpose %21, [1, 0] : vector<16x8xf32> -> vector<8x16xf32>
    %c0_14 = arith.constant 0 : index
    %c0_15 = arith.constant 0 : index
    %c2 = arith.constant 2 : index
    %c0_16 = arith.constant 0 : index
    %23 = vector.load %arg5[%c0_14, %c0_15, %c2, %c0_16] : memref<1x8x8x16xf32, #tpu.memory_space<vmem>>, vector<1x8x1x16xf32>
    %24 = vector.shape_cast %23 : vector<1x8x1x16xf32> to vector<8x16xf32>
    %25 = vector.shape_cast %22 : vector<8x16xf32> to vector<1x8x1x16xf32>
    tpu.vector_store %arg5[%c0_14, %c0_15, %c2, %c0_16], %25 {strides = array<i32>} : memref<1x8x8x16xf32, #tpu.memory_space<vmem>>, vector<1x8x1x16xf32>,
    %26 = vector.extract_strided_slice %10 {offsets = [48, 0], sizes = [16, 8], strides = [1, 1]} : vector<128x8xf32> to vector<16x8xf32>
    %27 = tpu.transpose %26, [1, 0] : vector<16x8xf32> -> vector<8x16xf32>
    %c0_17 = arith.constant 0 : index
    %c0_18 = arith.constant 0 : index
    %c3 = arith.constant 3 : index
    %c0_19 = arith.constant 0 : index
    %28 = vector.load %arg5[%c0_17, %c0_18, %c3, %c0_19] : memref<1x8x8x16xf32, #tpu.memory_space<vmem>>, vector<1x8x1x16xf32>
    %29 = vector.shape_cast %28 : vector<1x8x1x16xf32> to vector<8x16xf32>
    %30 = vector.shape_cast %27 : vector<8x16xf32> to vector<1x8x1x16xf32>
    tpu.vector_store %arg5[%c0_17, %c0_18, %c3, %c0_19], %30 {strides = array<i32>} : memref<1x8x8x16xf32, #tpu.memory_space<vmem>>, vector<1x8x1x16xf32>,
    %31 = vector.extract_strided_slice %10 {offsets = [64, 0], sizes = [16, 8], strides = [1, 1]} : vector<128x8xf32> to vector<16x8xf32>
    %32 = tpu.transpose %31, [1, 0] : vector<16x8xf32> -> vector<8x16xf32>
    %c0_20 = arith.constant 0 : index
    %c0_21 = arith.constant 0 : index
    %c4 = arith.constant 4 : index
    %c0_22 = arith.constant 0 : index
    %33 = vector.load %arg5[%c0_20, %c0_21, %c4, %c0_22] : memref<1x8x8x16xf32, #tpu.memory_space<vmem>>, vector<1x8x1x16xf32>
    %34 = vector.shape_cast %33 : vector<1x8x1x16xf32> to vector<8x16xf32>
    %35 = vector.shape_cast %32 : vector<8x16xf32> to vector<1x8x1x16xf32>
    tpu.vector_store %arg5[%c0_20, %c0_21, %c4, %c0_22], %35 {strides = array<i32>} : memref<1x8x8x16xf32, #tpu.memory_space<vmem>>, vector<1x8x1x16xf32>,
    %36 = vector.extract_strided_slice %10 {offsets = [80, 0], sizes = [16, 8], strides = [1, 1]} : vector<128x8xf32> to vector<16x8xf32>
    %37 = tpu.transpose %36, [1, 0] : vector<16x8xf32> -> vector<8x16xf32>
    %c0_23 = arith.constant 0 : index
    %c0_24 = arith.constant 0 : index
    %c5 = arith.constant 5 : index
    %c0_25 = arith.constant 0 : index
    %38 = vector.load %arg5[%c0_23, %c0_24, %c5, %c0_25] : memref<1x8x8x16xf32, #tpu.memory_space<vmem>>, vector<1x8x1x16xf32>
    %39 = vector.shape_cast %38 : vector<1x8x1x16xf32> to vector<8x16xf32>
    %40 = vector.shape_cast %37 : vector<8x16xf32> to vector<1x8x1x16xf32>
    tpu.vector_store %arg5[%c0_23, %c0_24, %c5, %c0_25], %40 {strides = array<i32>} : memref<1x8x8x16xf32, #tpu.memory_space<vmem>>, vector<1x8x1x16xf32>,
    %41 = vector.extract_strided_slice %10 {offsets = [96, 0], sizes = [16, 8], strides = [1, 1]} : vector<128x8xf32> to vector<16x8xf32>
    %42 = tpu.transpose %41, [1, 0] : vector<16x8xf32> -> vector<8x16xf32>
    %c0_26 = arith.constant 0 : index
    %c0_27 = arith.constant 0 : index
    %c6 = arith.constant 6 : index
    %c0_28 = arith.constant 0 : index
    %43 = vector.load %arg5[%c0_26, %c0_27, %c6, %c0_28] : memref<1x8x8x16xf32, #tpu.memory_space<vmem>>, vector<1x8x1x16xf32>
    %44 = vector.shape_cast %43 : vector<1x8x1x16xf32> to vector<8x16xf32>
    %45 = vector.shape_cast %42 : vector<8x16xf32> to vector<1x8x1x16xf32>
    tpu.vector_store %arg5[%c0_26, %c0_27, %c6, %c0_28], %45 {strides = array<i32>} : memref<1x8x8x16xf32, #tpu.memory_space<vmem>>, vector<1x8x1x16xf32>,
    %46 = vector.extract_strided_slice %10 {offsets = [112, 0], sizes = [16, 8], strides = [1, 1]} : vector<128x8xf32> to vector<16x8xf32>
    %47 = tpu.transpose %46, [1, 0] : vector<16x8xf32> -> vector<8x16xf32>
    %c0_29 = arith.constant 0 : index
    %c0_30 = arith.constant 0 : index
    %c7 = arith.constant 7 : index
    %c0_31 = arith.constant 0 : index
    %48 = vector.load %arg5[%c0_29, %c0_30, %c7, %c0_31] : memref<1x8x8x16xf32, #tpu.memory_space<vmem>>, vector<1x8x1x16xf32>
    %49 = vector.shape_cast %48 : vector<1x8x1x16xf32> to vector<8x16xf32>
    %50 = vector.shape_cast %47 : vector<8x16xf32> to vector<1x8x1x16xf32>
    tpu.vector_store %arg5[%c0_29, %c0_30, %c7, %c0_31], %50 {strides = array<i32>} : memref<1x8x8x16xf32, #tpu.memory_space<vmem>>, vector<1x8x1x16xf32>,
    return
  }
  func.func @transform_0(%arg0: i32, %arg1: i32) -> (i32, i32, i32, i32) {
    %c0_i32 = arith.constant 0 : i32
    %c0_i32_0 = arith.constant 0 : i32
    %c0_i32_1 = arith.constant 0 : i32
    return %arg0, %arg1, %c0_i32, %c0_i32_0 : i32, i32, i32, i32
  }
  func.func @transform_1(%arg0: i32, %arg1: i32) -> (i32, i32) {
    %c0_i32 = arith.constant 0 : i32
    %c0_i32_0 = arith.constant 0 : i32
    %c0_i32_1 = arith.constant 0 : i32
    return %c0_i32, %c0_i32_0 : i32, i32
  }
  func.func @transform_2(%arg0: i32, %arg1: i32) -> (i32, i32) {
    %c0_i32 = arith.constant 0 : i32
    %c0_i32_0 = arith.constant 0 : i32
    %c0_i32_1 = arith.constant 0 : i32
    return %c0_i32, %c0_i32_0 : i32, i32
  }
  func.func @transform_3(%arg0: i32, %arg1: i32) -> (i32, i32, i32, i32) {
    %c0_i32 = arith.constant 0 : i32
    %c0_i32_0 = arith.constant 0 : i32
    %c0_i32_1 = arith.constant 0 : i32
    return %arg0, %c0_i32, %arg1, %c0_i32_0 : i32, i32, i32, i32
  }
}

module attributes {stable_mosaic.version = 11 : i64} {
  func.func @_conv_stats_kernel(%arg0: i32, %arg1: i32, %arg2: memref<1x18x18x4xbf16, #tpu.memory_space<vmem>>, %arg3: memref<9x4x8xbf16, #tpu.memory_space<vmem>>, %arg4: memref<1x8x16x8xbf16, #tpu.memory_space<vmem>>, %arg5: memref<1x1x2x8xf32, #tpu.memory_space<vmem>>) attributes {dimension_semantics = [#tpu.dimension_semantics<parallel>, #tpu.dimension_semantics<parallel>], iteration_bounds = array<i64: 2, 2>, scalar_prefetch = 0 : i64, scratch_operands = 0 : i64, tpu.core_type = #tpu.core_type<tc>, window_params = [{transform_indices = @transform_0, window_bounds = array<i64: 1, 18, 18, 4>}, {pipeline_mode = #tpu.pipeline_mode<synchronous>, transform_indices = @transform_1, window_bounds = array<i64: 9, 4, 8>}, {transform_indices = @transform_2, window_bounds = array<i64: 1, 8, 16, 8>}, {transform_indices = @transform_3, window_bounds = array<i64: 1, 1, 2, 8>}]} {
    %c8_i32 = arith.constant 8 : i32
    %0 = arith.muli %arg1, %c8_i32 : i32
    %c1_i32 = arith.constant 1 : i32
    %1 = arith.muli %0, %c1_i32 : i32
    %cst = arith.constant 0.000000e+00 : f32
    %2 = vector.broadcast %cst : f32 to vector<128x8xf32>
    %c0_i32 = arith.constant 0 : i32
    %3 = arith.addi %1, %c0_i32 : i32
    %c0 = arith.constant 0 : index
    %4 = arith.index_cast %3 : i32 to index
    %c0_0 = arith.constant 0 : index
    %c0_1 = arith.constant 0 : index
    %5 = vector.load %arg2[%c0, %4, %c0_0, %c0_1] : memref<1x18x18x4xbf16, #tpu.memory_space<vmem>>, vector<1x8x16x4xbf16>
    %6 = vector.shape_cast %5 : vector<1x8x16x4xbf16> to vector<8x16x4xbf16>
    %7 = vector.shape_cast %6 : vector<8x16x4xbf16> to vector<128x4xbf16>
    %c0_2 = arith.constant 0 : index
    %c0_3 = arith.constant 0 : index
    %c0_4 = arith.constant 0 : index
    %8 = vector.load %arg3[%c0_2, %c0_3, %c0_4] : memref<9x4x8xbf16, #tpu.memory_space<vmem>>, vector<1x4x8xbf16>
    %9 = vector.shape_cast %8 : vector<1x4x8xbf16> to vector<4x8xbf16>
    %cst_5 = arith.constant dense<0.000000e+00> : vector<128x8xf32>
    %10 = tpu.matmul %7, %9, %cst_5 {dimension_numbers = #tpu.dot_dimension_numbers<[1], [0], [0], [1], [0, 0, 1, 1], [], []>} : vector<128x4xbf16>, vector<4x8xbf16>, vector<128x8xf32> -> vector<128x8xf32>
    %11 = arith.addf %2, %10 : vector<128x8xf32>
    %c0_i32_6 = arith.constant 0 : i32
    %12 = arith.addi %1, %c0_i32_6 : i32
    %c0_7 = arith.constant 0 : index
    %13 = arith.index_cast %12 : i32 to index
    %c1 = arith.constant 1 : index
    %c0_8 = arith.constant 0 : index
    %14 = vector.load %arg2[%c0_7, %13, %c1, %c0_8] : memref<1x18x18x4xbf16, #tpu.memory_space<vmem>>, vector<1x8x16x4xbf16>
    %15 = vector.shape_cast %14 : vector<1x8x16x4xbf16> to vector<8x16x4xbf16>
    %16 = vector.shape_cast %15 : vector<8x16x4xbf16> to vector<128x4xbf16>
    %c1_9 = arith.constant 1 : index
    %c0_10 = arith.constant 0 : index
    %c0_11 = arith.constant 0 : index
    %17 = vector.load %arg3[%c1_9, %c0_10, %c0_11] : memref<9x4x8xbf16, #tpu.memory_space<vmem>>, vector<1x4x8xbf16>
    %18 = vector.shape_cast %17 : vector<1x4x8xbf16> to vector<4x8xbf16>
    %cst_12 = arith.constant dense<0.000000e+00> : vector<128x8xf32>
    %19 = tpu.matmul %16, %18, %cst_12 {dimension_numbers = #tpu.dot_dimension_numbers<[1], [0], [0], [1], [0, 0, 1, 1], [], []>} : vector<128x4xbf16>, vector<4x8xbf16>, vector<128x8xf32> -> vector<128x8xf32>
    %20 = arith.addf %11, %19 : vector<128x8xf32>
    %c0_i32_13 = arith.constant 0 : i32
    %21 = arith.addi %1, %c0_i32_13 : i32
    %c0_14 = arith.constant 0 : index
    %22 = arith.index_cast %21 : i32 to index
    %c2 = arith.constant 2 : index
    %c0_15 = arith.constant 0 : index
    %23 = vector.load %arg2[%c0_14, %22, %c2, %c0_15] : memref<1x18x18x4xbf16, #tpu.memory_space<vmem>>, vector<1x8x16x4xbf16>
    %24 = vector.shape_cast %23 : vector<1x8x16x4xbf16> to vector<8x16x4xbf16>
    %25 = vector.shape_cast %24 : vector<8x16x4xbf16> to vector<128x4xbf16>
    %c2_16 = arith.constant 2 : index
    %c0_17 = arith.constant 0 : index
    %c0_18 = arith.constant 0 : index
    %26 = vector.load %arg3[%c2_16, %c0_17, %c0_18] : memref<9x4x8xbf16, #tpu.memory_space<vmem>>, vector<1x4x8xbf16>
    %27 = vector.shape_cast %26 : vector<1x4x8xbf16> to vector<4x8xbf16>
    %cst_19 = arith.constant dense<0.000000e+00> : vector<128x8xf32>
    %28 = tpu.matmul %25, %27, %cst_19 {dimension_numbers = #tpu.dot_dimension_numbers<[1], [0], [0], [1], [0, 0, 1, 1], [], []>} : vector<128x4xbf16>, vector<4x8xbf16>, vector<128x8xf32> -> vector<128x8xf32>
    %29 = arith.addf %20, %28 : vector<128x8xf32>
    %c1_i32_20 = arith.constant 1 : i32
    %30 = arith.addi %1, %c1_i32_20 : i32
    %c0_21 = arith.constant 0 : index
    %31 = arith.index_cast %30 : i32 to index
    %c0_22 = arith.constant 0 : index
    %c0_23 = arith.constant 0 : index
    %32 = vector.load %arg2[%c0_21, %31, %c0_22, %c0_23] : memref<1x18x18x4xbf16, #tpu.memory_space<vmem>>, vector<1x8x16x4xbf16>
    %33 = vector.shape_cast %32 : vector<1x8x16x4xbf16> to vector<8x16x4xbf16>
    %34 = vector.shape_cast %33 : vector<8x16x4xbf16> to vector<128x4xbf16>
    %c3 = arith.constant 3 : index
    %c0_24 = arith.constant 0 : index
    %c0_25 = arith.constant 0 : index
    %35 = vector.load %arg3[%c3, %c0_24, %c0_25] : memref<9x4x8xbf16, #tpu.memory_space<vmem>>, vector<1x4x8xbf16>
    %36 = vector.shape_cast %35 : vector<1x4x8xbf16> to vector<4x8xbf16>
    %cst_26 = arith.constant dense<0.000000e+00> : vector<128x8xf32>
    %37 = tpu.matmul %34, %36, %cst_26 {dimension_numbers = #tpu.dot_dimension_numbers<[1], [0], [0], [1], [0, 0, 1, 1], [], []>} : vector<128x4xbf16>, vector<4x8xbf16>, vector<128x8xf32> -> vector<128x8xf32>
    %38 = arith.addf %29, %37 : vector<128x8xf32>
    %c1_i32_27 = arith.constant 1 : i32
    %39 = arith.addi %1, %c1_i32_27 : i32
    %c0_28 = arith.constant 0 : index
    %40 = arith.index_cast %39 : i32 to index
    %c1_29 = arith.constant 1 : index
    %c0_30 = arith.constant 0 : index
    %41 = vector.load %arg2[%c0_28, %40, %c1_29, %c0_30] : memref<1x18x18x4xbf16, #tpu.memory_space<vmem>>, vector<1x8x16x4xbf16>
    %42 = vector.shape_cast %41 : vector<1x8x16x4xbf16> to vector<8x16x4xbf16>
    %43 = vector.shape_cast %42 : vector<8x16x4xbf16> to vector<128x4xbf16>
    %c4 = arith.constant 4 : index
    %c0_31 = arith.constant 0 : index
    %c0_32 = arith.constant 0 : index
    %44 = vector.load %arg3[%c4, %c0_31, %c0_32] : memref<9x4x8xbf16, #tpu.memory_space<vmem>>, vector<1x4x8xbf16>
    %45 = vector.shape_cast %44 : vector<1x4x8xbf16> to vector<4x8xbf16>
    %cst_33 = arith.constant dense<0.000000e+00> : vector<128x8xf32>
    %46 = tpu.matmul %43, %45, %cst_33 {dimension_numbers = #tpu.dot_dimension_numbers<[1], [0], [0], [1], [0, 0, 1, 1], [], []>} : vector<128x4xbf16>, vector<4x8xbf16>, vector<128x8xf32> -> vector<128x8xf32>
    %47 = arith.addf %38, %46 : vector<128x8xf32>
    %c1_i32_34 = arith.constant 1 : i32
    %48 = arith.addi %1, %c1_i32_34 : i32
    %c0_35 = arith.constant 0 : index
    %49 = arith.index_cast %48 : i32 to index
    %c2_36 = arith.constant 2 : index
    %c0_37 = arith.constant 0 : index
    %50 = vector.load %arg2[%c0_35, %49, %c2_36, %c0_37] : memref<1x18x18x4xbf16, #tpu.memory_space<vmem>>, vector<1x8x16x4xbf16>
    %51 = vector.shape_cast %50 : vector<1x8x16x4xbf16> to vector<8x16x4xbf16>
    %52 = vector.shape_cast %51 : vector<8x16x4xbf16> to vector<128x4xbf16>
    %c5 = arith.constant 5 : index
    %c0_38 = arith.constant 0 : index
    %c0_39 = arith.constant 0 : index
    %53 = vector.load %arg3[%c5, %c0_38, %c0_39] : memref<9x4x8xbf16, #tpu.memory_space<vmem>>, vector<1x4x8xbf16>
    %54 = vector.shape_cast %53 : vector<1x4x8xbf16> to vector<4x8xbf16>
    %cst_40 = arith.constant dense<0.000000e+00> : vector<128x8xf32>
    %55 = tpu.matmul %52, %54, %cst_40 {dimension_numbers = #tpu.dot_dimension_numbers<[1], [0], [0], [1], [0, 0, 1, 1], [], []>} : vector<128x4xbf16>, vector<4x8xbf16>, vector<128x8xf32> -> vector<128x8xf32>
    %56 = arith.addf %47, %55 : vector<128x8xf32>
    %c2_i32 = arith.constant 2 : i32
    %57 = arith.addi %1, %c2_i32 : i32
    %c0_41 = arith.constant 0 : index
    %58 = arith.index_cast %57 : i32 to index
    %c0_42 = arith.constant 0 : index
    %c0_43 = arith.constant 0 : index
    %59 = vector.load %arg2[%c0_41, %58, %c0_42, %c0_43] : memref<1x18x18x4xbf16, #tpu.memory_space<vmem>>, vector<1x8x16x4xbf16>
    %60 = vector.shape_cast %59 : vector<1x8x16x4xbf16> to vector<8x16x4xbf16>
    %61 = vector.shape_cast %60 : vector<8x16x4xbf16> to vector<128x4xbf16>
    %c6 = arith.constant 6 : index
    %c0_44 = arith.constant 0 : index
    %c0_45 = arith.constant 0 : index
    %62 = vector.load %arg3[%c6, %c0_44, %c0_45] : memref<9x4x8xbf16, #tpu.memory_space<vmem>>, vector<1x4x8xbf16>
    %63 = vector.shape_cast %62 : vector<1x4x8xbf16> to vector<4x8xbf16>
    %cst_46 = arith.constant dense<0.000000e+00> : vector<128x8xf32>
    %64 = tpu.matmul %61, %63, %cst_46 {dimension_numbers = #tpu.dot_dimension_numbers<[1], [0], [0], [1], [0, 0, 1, 1], [], []>} : vector<128x4xbf16>, vector<4x8xbf16>, vector<128x8xf32> -> vector<128x8xf32>
    %65 = arith.addf %56, %64 : vector<128x8xf32>
    %c2_i32_47 = arith.constant 2 : i32
    %66 = arith.addi %1, %c2_i32_47 : i32
    %c0_48 = arith.constant 0 : index
    %67 = arith.index_cast %66 : i32 to index
    %c1_49 = arith.constant 1 : index
    %c0_50 = arith.constant 0 : index
    %68 = vector.load %arg2[%c0_48, %67, %c1_49, %c0_50] : memref<1x18x18x4xbf16, #tpu.memory_space<vmem>>, vector<1x8x16x4xbf16>
    %69 = vector.shape_cast %68 : vector<1x8x16x4xbf16> to vector<8x16x4xbf16>
    %70 = vector.shape_cast %69 : vector<8x16x4xbf16> to vector<128x4xbf16>
    %c7 = arith.constant 7 : index
    %c0_51 = arith.constant 0 : index
    %c0_52 = arith.constant 0 : index
    %71 = vector.load %arg3[%c7, %c0_51, %c0_52] : memref<9x4x8xbf16, #tpu.memory_space<vmem>>, vector<1x4x8xbf16>
    %72 = vector.shape_cast %71 : vector<1x4x8xbf16> to vector<4x8xbf16>
    %cst_53 = arith.constant dense<0.000000e+00> : vector<128x8xf32>
    %73 = tpu.matmul %70, %72, %cst_53 {dimension_numbers = #tpu.dot_dimension_numbers<[1], [0], [0], [1], [0, 0, 1, 1], [], []>} : vector<128x4xbf16>, vector<4x8xbf16>, vector<128x8xf32> -> vector<128x8xf32>
    %74 = arith.addf %65, %73 : vector<128x8xf32>
    %c2_i32_54 = arith.constant 2 : i32
    %75 = arith.addi %1, %c2_i32_54 : i32
    %c0_55 = arith.constant 0 : index
    %76 = arith.index_cast %75 : i32 to index
    %c2_56 = arith.constant 2 : index
    %c0_57 = arith.constant 0 : index
    %77 = vector.load %arg2[%c0_55, %76, %c2_56, %c0_57] : memref<1x18x18x4xbf16, #tpu.memory_space<vmem>>, vector<1x8x16x4xbf16>
    %78 = vector.shape_cast %77 : vector<1x8x16x4xbf16> to vector<8x16x4xbf16>
    %79 = vector.shape_cast %78 : vector<8x16x4xbf16> to vector<128x4xbf16>
    %c8 = arith.constant 8 : index
    %c0_58 = arith.constant 0 : index
    %c0_59 = arith.constant 0 : index
    %80 = vector.load %arg3[%c8, %c0_58, %c0_59] : memref<9x4x8xbf16, #tpu.memory_space<vmem>>, vector<1x4x8xbf16>
    %81 = vector.shape_cast %80 : vector<1x4x8xbf16> to vector<4x8xbf16>
    %cst_60 = arith.constant dense<0.000000e+00> : vector<128x8xf32>
    %82 = tpu.matmul %79, %81, %cst_60 {dimension_numbers = #tpu.dot_dimension_numbers<[1], [0], [0], [1], [0, 0, 1, 1], [], []>} : vector<128x4xbf16>, vector<4x8xbf16>, vector<128x8xf32> -> vector<128x8xf32>
    %83 = arith.addf %74, %82 : vector<128x8xf32>
    %84 = vector.shape_cast %83 : vector<128x8xf32> to vector<1x8x16x8xf32>
    %85 = arith.truncf %84 : vector<1x8x16x8xf32> to vector<1x8x16x8xbf16>
    %c0_61 = arith.constant 0 : index
    %c0_62 = arith.constant 0 : index
    %c0_63 = arith.constant 0 : index
    %c0_64 = arith.constant 0 : index
    %86 = vector.load %arg4[%c0_61, %c0_62, %c0_63, %c0_64] : memref<1x8x16x8xbf16, #tpu.memory_space<vmem>>, vector<1x8x16x8xbf16>
    tpu.vector_store %arg4[%c0_61, %c0_62, %c0_63, %c0_64], %85 {strides = array<i32>} : memref<1x8x16x8xbf16, #tpu.memory_space<vmem>>, vector<1x8x16x8xbf16>,
    %c16_i32 = arith.constant 16 : i32
    %87 = arith.subi %c16_i32, %0 : i32
    %c8_i32_65 = arith.constant 8 : i32
    %88 = arith.minsi %c8_i32_65, %87 : i32
    %c16_i32_66 = arith.constant 16 : i32
    %89 = arith.muli %88, %c16_i32_66 : i32
    %90 = arith.sitofp %89 : i32 to f32
    %91 = tpu.iota {dimensions = array<i32: 0>} : vector<128x1xi32>
    %c16_i32_67 = arith.constant 16 : i32
    %92 = arith.muli %88, %c16_i32_67 : i32
    %93 = vector.broadcast %92 : i32 to vector<128x1xi32>
    %94 = arith.cmpi slt, %91, %93 : vector<128x1xi32>
    %cst_68 = arith.constant 0.000000e+00 : f32
    %95 = vector.shape_cast %94 : vector<128x1xi1> to vector<128x1xi1>
    %96 = vector.broadcast %95 : vector<128x1xi1> to vector<128x8xi1>
    %97 = vector.broadcast %cst_68 : f32 to vector<128x8xf32>
    %98 = arith.select %96, %83, %97 : vector<128x8xi1>, vector<128x8xf32>
    %cst_69 = arith.constant dense<0.000000e+00> : vector<8xf32>
    %99 = vector.multi_reduction <add>, %98, %cst_69 [0] : vector<128x8xf32> to vector<8xf32>
    %100 = vector.shape_cast %99 : vector<8xf32> to vector<1x8xf32>
    %101 = vector.broadcast %90 : f32 to vector<1x8xf32>
    %102 = arith.divf %100, %101 : vector<1x8xf32>
    %103 = vector.broadcast %102 : vector<1x8xf32> to vector<128x8xf32>
    %104 = arith.subf %83, %103 : vector<128x8xf32>
    %cst_70 = arith.constant 0.000000e+00 : f32
    %105 = vector.shape_cast %94 : vector<128x1xi1> to vector<128x1xi1>
    %106 = vector.broadcast %105 : vector<128x1xi1> to vector<128x8xi1>
    %107 = vector.broadcast %cst_70 : f32 to vector<128x8xf32>
    %108 = arith.select %106, %104, %107 : vector<128x8xi1>, vector<128x8xf32>
    %109 = arith.mulf %108, %108 : vector<128x8xf32>
    %cst_71 = arith.constant dense<0.000000e+00> : vector<8xf32>
    %110 = vector.multi_reduction <add>, %109, %cst_71 [0] : vector<128x8xf32> to vector<8xf32>
    %111 = vector.shape_cast %110 : vector<8xf32> to vector<1x8xf32>
    %112 = tpu.concatenate %102, %111 in 0 : vector<1x8xf32>, vector<1x8xf32> -> vector<2x8xf32>
    %113 = vector.shape_cast %112 : vector<2x8xf32> to vector<1x1x2x8xf32>
    %c0_72 = arith.constant 0 : index
    %c0_73 = arith.constant 0 : index
    %c0_74 = arith.constant 0 : index
    %c0_75 = arith.constant 0 : index
    %114 = vector.load %arg5[%c0_72, %c0_73, %c0_74, %c0_75] : memref<1x1x2x8xf32, #tpu.memory_space<vmem>>, vector<1x1x2x8xf32>
    tpu.vector_store %arg5[%c0_72, %c0_73, %c0_74, %c0_75], %113 {strides = array<i32>} : memref<1x1x2x8xf32, #tpu.memory_space<vmem>>, vector<1x1x2x8xf32>,
    return
  }
  func.func @transform_0(%arg0: i32, %arg1: i32) -> (i32, i32, i32, i32) {
    %c0_i32 = arith.constant 0 : i32
    %c0_i32_0 = arith.constant 0 : i32
    %c0_i32_1 = arith.constant 0 : i32
    %c0_i32_2 = arith.constant 0 : i32
    return %arg0, %c0_i32, %c0_i32_0, %c0_i32_1 : i32, i32, i32, i32
  }
  func.func @transform_1(%arg0: i32, %arg1: i32) -> (i32, i32, i32) {
    %c0_i32 = arith.constant 0 : i32
    %c0_i32_0 = arith.constant 0 : i32
    %c0_i32_1 = arith.constant 0 : i32
    %c0_i32_2 = arith.constant 0 : i32
    return %c0_i32, %c0_i32_0, %c0_i32_1 : i32, i32, i32
  }
  func.func @transform_2(%arg0: i32, %arg1: i32) -> (i32, i32, i32, i32) {
    %c0_i32 = arith.constant 0 : i32
    %c0_i32_0 = arith.constant 0 : i32
    %c0_i32_1 = arith.constant 0 : i32
    return %arg0, %arg1, %c0_i32, %c0_i32_0 : i32, i32, i32, i32
  }
  func.func @transform_3(%arg0: i32, %arg1: i32) -> (i32, i32, i32, i32) {
    %c0_i32 = arith.constant 0 : i32
    %c0_i32_0 = arith.constant 0 : i32
    %c0_i32_1 = arith.constant 0 : i32
    return %arg0, %arg1, %c0_i32, %c0_i32_0 : i32, i32, i32, i32
  }
}

</mosaic_0001>

<llo_original>
// kernel: conv_bn_relu_forward.3
$region0: #{conv_bn_relu_forward.3}
  #allocation0 [shape = 'u32[]', space=smem, size = 0x4, offset = 0x4, fixed_abs, tag = 'smem constant byte address 0x4 - core index']
  #allocation1 [shape = 'u32[144,128]{1,0:T(1,128)}', space=vmem, size = 0x12000, scoped, tag = 'internal scratch']
  %s0 = inlined_call_operand.vmem [shape: bf16[2,16,16,8], index: 0, kind: input, shape index: {}]
  %s1 = inlined_call_operand.vmem [shape: f32[1,8], index: 1, kind: input, shape index: {}]
  %s2 = inlined_call_operand.vmem [shape: f32[1,8], index: 2, kind: input, shape index: {}]
  %s3 = inlined_call_operand.hbm [shape: f32[2,8,16,16], index: 3, kind: output, shape index: {}]
  %s4 = sld [smem:[#allocation0]]
  $region45: #{conv_bn_relu_forward.3} parent=0
    _
  %s6 = ssub.s32 1, %s4
  %s7 = scalar_select 0, %s6, %s4
  $region1: #{conv_bn_relu_forward.3} parent=0
    #allocation2 [shape = 'u8[65536]{0}', space=vmem, size = 0x10000, scoped, tag = 'output window, operand 0']
    #allocation3 [shape = 's32[2]{0}', space=sflag, size = 0x8, scoped, tag = 'scoped memory for conv_bn_relu_forward.3']
    %8 = vsyncpa [#allocation3], 0
    %s9 = scalar_lea.sflag [#allocation3], 1
    %10 = vsyncpa %s9, 0
    loop: start=0, step=1, limit=6
    $region2: #{conv_bn_relu_forward.3} parent=1 // loop_pre_header
      _
    $region3: #{conv_bn_relu_forward.3} parent=1 // loop_header
      %s12 = sphi 0, %s16
      %p13 = scmp.ge.s32.totalorder %s12, 6
      %s19 = sphi 0, %s31
      %s20 = sphi 0, %s27
      %s21 = sphi 0, %s19
      %s22 = sphi 0, %s20
      %s23 = sphi 0, %s21
      %s24 = sphi 0, %s22
      %s36 = sphi 0, %s38
      %s39 = sphi 0, %s36
      %s40 = sphi 0, %s39
      %s56 = sphi 0, %s40
      %s60 = sphi 0, %s60
      %s62 = sphi 0, %s60
      %s63 = sphi 0, %s62
      %s77 = sphi 0, %s63
      %s81 = sphi 0, %s81
      %s83 = sphi 0, %s81
      %s84 = sphi 0, %s83
      %s98 = sphi 0, %s84
      %s106 = sphi 0, %s108
      %s109 = sphi 0, %s106
      %s110 = sphi 0, %s109
      %s126 = sphi 0, %s110
    $region4: #{conv_bn_relu_forward.3} parent=1 // loop_header_branch
      %15 = sbr.rel (%p13) target = $region8
    $region5: #{conv_bn_relu_forward.3} parent=1 // loop_body
      %s17 = ssub.s32 %s12, 1
      %s18 = ssub.s32 %s12, 2
      %s25 = sadd.s32 1, %s20
      %p26 = scmp.ge.s32.totalorder %s25, 2
      %s27 = scalar_select %p26, 0, %s25
      %s28 = sadd.s32 1, %s19
      %s29 = scalar_select %p26, %s28, %s19
      %p30 = scmp.ge.s32.totalorder %s29, 2
      %s31 = scalar_select %p30, 0, %s29
      %s32 = ssub.s32 %s19, %s31
      %s33 = ssub.s32 %s20, %s27
      %s34 = sor.u32 %s32, %s33
      %p35 = scmp.eq.s32.totalorder %s34, 0
      %s37 = sadd.s32 %s36, 1
      %s38 = scalar_select %p35, %s36, %s37
      %p41 = pneg %p35
      %p42 = scmp.eq.s32.totalorder %s12, 3
      %p43 = por %p41, %p42
      %p44 = scmp.ne.s32.totalorder %s36, %s39
      %p45 = scmp.eq.s32.totalorder %s12, 0
      %p46 = por %p44, %p45
      %p47 = scmp.ne.s32.totalorder %s36, %s39
      %p48 = scmp.eq.s32.totalorder %s17, 3
      %p49 = por %p47, %p48
      %p50 = scmp.ne.s32.totalorder %s39, %s40
      %p51 = scmp.eq.s32.totalorder %s17, 0
      %p52 = por %p50, %p51
      %p53 = scmp.ne.s32.totalorder %s39, %s40
      %p54 = scmp.eq.s32.totalorder %s18, 3
      %p55 = por %p53, %p54
      %p57 = scmp.ne.s32.totalorder %s40, %s56
      %p58 = scmp.eq.s32.totalorder %s18, 0
      %p59 = por %p57, %p58
      %s61 = sadd.s32 %s60, 1
      %p64 = scmp.eq.s32.totalorder %s12, 3
      %p65 = scmp.ne.s32.totalorder %s60, %s62
      %p66 = scmp.eq.s32.totalorder %s12, 0
      %p67 = por %p65, %p66
      %p68 = scmp.ne.s32.totalorder %s60, %s62
      %p69 = scmp.eq.s32.totalorder %s17, 3
      %p70 = por %p68, %p69
      %p71 = scmp.ne.s32.totalorder %s62, %s63
      %p72 = scmp.eq.s32.totalorder %s17, 0
      %p73 = por %p71, %p72
      %p74 = scmp.ne.s32.totalorder %s62, %s63
      %p75 = scmp.eq.s32.totalorder %s18, 3
      %p76 = por %p74, %p75
      %p78 = scmp.ne.s32.totalorder %s63, %s77
      %p79 = scmp.eq.s32.totalorder %s18, 0
      %p80 = por %p78, %p79
      %s82 = sadd.s32 %s81, 1
      %p85 = scmp.eq.s32.totalorder %s12, 3
      %p86 = scmp.ne.s32.totalorder %s81, %s83
      %p87 = scmp.eq.s32.totalorder %s12, 0
      %p88 = por %p86, %p87
      %p89 = scmp.ne.s32.totalorder %s81, %s83
      %p90 = scmp.eq.s32.totalorder %s17, 3
      %p91 = por %p89, %p90
      %p92 = scmp.ne.s32.totalorder %s83, %s84
      %p93 = scmp.eq.s32.totalorder %s17, 0
      %p94 = por %p92, %p93
      %p95 = scmp.ne.s32.totalorder %s83, %s84
      %p96 = scmp.eq.s32.totalorder %s18, 3
      %p97 = por %p95, %p96
      %p99 = scmp.ne.s32.totalorder %s84, %s98
      %p100 = scmp.eq.s32.totalorder %s18, 0
      %p101 = por %p99, %p100
      %s102 = ssub.s32 %s19, %s31
      %s103 = ssub.s32 %s20, %s27
      %s104 = sor.u32 %s102, %s103
      %p105 = scmp.eq.s32.totalorder %s104, 0
      %s107 = sadd.s32 %s106, 1
      %s108 = scalar_select %p105, %s106, %s107
      %p111 = pneg %p105
      %p112 = scmp.eq.s32.totalorder %s12, 3
      %p113 = por %p111, %p112
      %p114 = scmp.ne.s32.totalorder %s106, %s109
      %p115 = scmp.eq.s32.totalorder %s12, 0
      %p116 = por %p114, %p115
      %p117 = scmp.ne.s32.totalorder %s106, %s109
      %p118 = scmp.eq.s32.totalorder %s17, 3
      %p119 = por %p117, %p118
      %p120 = scmp.ne.s32.totalorder %s109, %s110
      %p121 = scmp.eq.s32.totalorder %s17, 0
      %p122 = por %p120, %p121
      %p123 = scmp.ne.s32.totalorder %s109, %s110
      %p124 = scmp.eq.s32.totalorder %s18, 3
      %p125 = por %p123, %p124
      %p127 = scmp.ne.s32.totalorder %s110, %s126
      %p128 = scmp.eq.s32.totalorder %s18, 0
      %p129 = por %p127, %p128
      %p130 = scmp.le.s32.totalorder 1, %s12
      %p131 = scmp.lt.s32.totalorder %s12, 5
      %p132 = pnand %p130, %p131
      %p133 = pneg %p132
      // Predicated region
      $region9: #{conv_bn_relu_forward.3} parent=5 // pred_check
        _
      $region10: #{conv_bn_relu_forward.3} parent=5 // pred_check_branch
        %135 = sbr.rel (%p132) target = $region12
      $region11: #{conv_bn_relu_forward.3} parent=5 // pred_region
        %s136 = ssub.s32 %s12, 1
        // Predicated region
        $region13: #{conv_bn_relu_forward.3} parent=11 // pred_check
          %p137 = pneg %p73
        $region14: #{conv_bn_relu_forward.3} parent=11 // pred_check_branch
          %139 = sbr.rel (%p137) target = $region16
        $region15: #{conv_bn_relu_forward.3} parent=11 // pred_region
          _
        $region16: #{conv_bn_relu_forward.3} parent=11 // pred_fallthru
          _
        // Predicated region
        $region17: #{conv_bn_relu_forward.3} parent=11 // pred_check
          %p140 = pneg %p94
        $region18: #{conv_bn_relu_forward.3} parent=11 // pred_check_branch
          %142 = sbr.rel (%p140) target = $region20
        $region19: #{conv_bn_relu_forward.3} parent=11 // pred_region
          _
        $region20: #{conv_bn_relu_forward.3} parent=11 // pred_fallthru
          _
      $region12: #{conv_bn_relu_forward.3} parent=5 // pred_fallthru
        _
      %p143 = scmp.lt.s32.totalorder %s12, 4
      // Predicated region
      $region21: #{conv_bn_relu_forward.3} parent=5 // pred_check
        %p144 = pneg %p143
      $region22: #{conv_bn_relu_forward.3} parent=5 // pred_check_branch
        %146 = sbr.rel (%p144) target = $region24
      $region23: #{conv_bn_relu_forward.3} parent=5 // pred_region
        // Predicated region
        $region25: #{conv_bn_relu_forward.3} parent=23 // pred_check
          %p147 = pneg %p46
        $region26: #{conv_bn_relu_forward.3} parent=23 // pred_check_branch
          %149 = sbr.rel (%p147) target = $region28
        $region27: #{conv_bn_relu_forward.3} parent=23 // pred_region
          %s150 = smul.u32 8, %s20
          %p151 = scmp.lt.s32.totalorder %s19, 1
          %s152 = scalar_select %p151, %s19, 1
          %p153 = scmp.lt.s32.totalorder %s150, 15
          %s154 = scalar_select %p153, %s150, 15
          %s155 = smul.addr %s154, 2
          %s156 = smul.addr %s152, 32
          %s157 = sadd.s32 %s155, %s156
          %s158 = smul.addr %s157, 4
          %s159 = scalar_lea.vmem %s0, %s158
          %s160 = smul.u32 8, %s20
        $region28: #{conv_bn_relu_forward.3} parent=23 // pred_fallthru
          _
      $region24: #{conv_bn_relu_forward.3} parent=5 // pred_fallthru
        _
      %p161 = scmp.le.s32.totalorder 1, %s12
      %p162 = scmp.lt.s32.totalorder %s12, 5
      %p163 = pnand %p161, %p162
      %p164 = pneg %p163
      // Predicated region
      $region29: #{conv_bn_relu_forward.3} parent=5 // pred_check
        _
      $region30: #{conv_bn_relu_forward.3} parent=5 // pred_check_branch
        %166 = sbr.rel (%p163) target = $region32
      $region31: #{conv_bn_relu_forward.3} parent=5 // pred_region
        %s167 = ssub.s32 %s12, 1
        %s168 = smul.u32 8, %s22
        %p169 = scmp.lt.s32.totalorder %s21, 1
        %s170 = scalar_select %p169, %s21, 1
        %p171 = scmp.lt.s32.totalorder %s168, 15
        %s172 = scalar_select %p171, %s168, 15
        %s173 = smul.addr %s172, 2
        %s174 = smul.addr %s170, 32
        %s175 = sadd.s32 %s173, %s174
        %s176 = smul.addr %s175, 4
        %s177 = scalar_lea.vmem %s0, %s176
        %p178 = pneg %p52
        %p179 = pneg %p49
        %p180 = pneg %p73
        %p181 = pneg %p70
        %p182 = pneg %p94
        %p183 = pneg %p91
        %p184 = pneg %p122
        %p185 = pneg %p119
        %s186 = sand.u32 %s109, 1
        %s187 = scalar_lea.sflag [#allocation3], %s186
        %s188 = sand.u32 %s109, 1
        %s189 = smul.addr %s188, 64
        %s190 = scalar_lea.vmem [#allocation2], %s189
        %s191 = smul.u32 8, %s22
        %p192 = scmp.lt.s32.totalorder %s21, 1
        %s193 = scalar_select %p192, %s21, 1
        %p194 = scmp.lt.s32.totalorder %s191, 15
        %s195 = scalar_select %p194, %s191, 15
        %s196 = smul.addr %s195, 2
        %s197 = smul.addr %s193, 32
        %s198 = sadd.s32 %s196, %s197
        %s199 = smul.addr %s198, 4
        %s200 = scalar_lea.vmem %s0, %s199
        %s201 = smul.u32 8, %s22
        %v202 = vld [vmem:[%s200] sm:$0xf]
        %v203 = vld [vmem:[%s200 + $0x4] sm:$0xf]
        %v204 = vld [vmem:[%s200 + $0x8] sm:$0xf]
        %v205 = vld [vmem:[%s200 + $0xc] sm:$0xf]
        %v206 = vld [vmem:[%s200 + $0x10] sm:$0xf]
        %v207 = vld [vmem:[%s200 + $0x14] sm:$0xf]
        %v208 = vld [vmem:[%s200 + $0x18] sm:$0xf]
        %v209 = vld [vmem:[%s200 + $0x1c] sm:$0xf]
        %v210 = vld [vmem:[%s200 + $0x20] sm:$0xf]
        %v211 = vld [vmem:[%s200 + $0x24] sm:$0xf]
        %v212 = vld [vmem:[%s200 + $0x28] sm:$0xf]
        %v213 = vld [vmem:[%s200 + $0x2c] sm:$0xf]
        %v214 = vld [vmem:[%s200 + $0x30] sm:$0xf]
        %v215 = vld [vmem:[%s200 + $0x34] sm:$0xf]
        %v216 = vld [vmem:[%s200 + $0x38] sm:$0xf]
        %v217 = vld [vmem:[%s200 + $0x3c] sm:$0xf]
        %v218 = vunpack.c.l.bf16 %v202
        %v219 = vunpack.c.l.bf16 %v203
        %v220 = vunpack.c.l.bf16 %v204
        %v221 = vunpack.c.l.bf16 %v205
        %v222 = vunpack.c.l.bf16 %v206
        %v223 = vunpack.c.l.bf16 %v207
        %v224 = vunpack.c.l.bf16 %v208
        %v225 = vunpack.c.l.bf16 %v209
        %v226 = vunpack.c.l.bf16 %v210
        %v227 = vunpack.c.l.bf16 %v211
        %v228 = vunpack.c.l.bf16 %v212
        %v229 = vunpack.c.l.bf16 %v213
        %v230 = vunpack.c.l.bf16 %v214
        %v231 = vunpack.c.l.bf16 %v215
        %v232 = vunpack.c.l.bf16 %v216
        %v233 = vunpack.c.l.bf16 %v217
        %v234 = vld [vmem:[%s1] sm:$0x1]
        %v236 = vlaneseq
        %v237 = vshrl.u32 %v236, 7
        %v238 = vsub.s32 0, %v237
        %v239 = vrot.slane %v234, %v238
        %v241 = vmul.f32 %v218, %v239
        %v242 = vmul.f32 %v219, %v239
        %v243 = vmul.f32 %v220, %v239
        %v244 = vmul.f32 %v221, %v239
        %v245 = vmul.f32 %v222, %v239
        %v246 = vmul.f32 %v223, %v239
        %v247 = vmul.f32 %v224, %v239
        %v248 = vmul.f32 %v225, %v239
        %v249 = vmul.f32 %v226, %v239
        %v250 = vmul.f32 %v227, %v239
        %v251 = vmul.f32 %v228, %v239
        %v252 = vmul.f32 %v229, %v239
        %v253 = vmul.f32 %v230, %v239
        %v254 = vmul.f32 %v231, %v239
        %v255 = vmul.f32 %v232, %v239
        %v256 = vmul.f32 %v233, %v239
        %v257 = vld [vmem:[%s2] sm:$0x1]
        %v259 = vlaneseq
        %v260 = vshrl.u32 %v259, 7
        %v261 = vsub.s32 0, %v260
        %v262 = vrot.slane %v257, %v261
        %v264 = vadd.f32 %v241, %v262
        %v265 = vadd.f32 %v242, %v262
        %v266 = vadd.f32 %v243, %v262
        %v267 = vadd.f32 %v244, %v262
        %v268 = vadd.f32 %v245, %v262
        %v269 = vadd.f32 %v246, %v262
        %v270 = vadd.f32 %v247, %v262
        %v271 = vadd.f32 %v248, %v262
        %v272 = vadd.f32 %v249, %v262
        %v273 = vadd.f32 %v250, %v262
        %v274 = vadd.f32 %v251, %v262
        %v275 = vadd.f32 %v252, %v262
        %v276 = vadd.f32 %v253, %v262
        %v277 = vadd.f32 %v254, %v262
        %v278 = vadd.f32 %v255, %v262
        %v279 = vadd.f32 %v256, %v262
        %v280 = vmax.f32 %v264, 0.0
        %v281 = vmax.f32 %v265, 0.0
        %v282 = vmax.f32 %v266, 0.0
        %v283 = vmax.f32 %v267, 0.0
        %v284 = vmax.f32 %v268, 0.0
        %v285 = vmax.f32 %v269, 0.0
        %v286 = vmax.f32 %v270, 0.0
        %v287 = vmax.f32 %v271, 0.0
        %v288 = vmax.f32 %v272, 0.0
        %v289 = vmax.f32 %v273, 0.0
        %v290 = vmax.f32 %v274, 0.0
        %v291 = vmax.f32 %v275, 0.0
        %v292 = vmax.f32 %v276, 0.0
        %v293 = vmax.f32 %v277, 0.0
        %v294 = vmax.f32 %v278, 0.0
        %v295 = vmax.f32 %v279, 0.0
        %296 = vxpose.xlu0.b32.start [1/16] %v280, 128
        %297 = vxpose.xlu0.b32.cont [2/16] %v281, 128
        %298 = vxpose.xlu0.b32.cont [3/16] 0.0, 128
        %299 = vxpose.xlu0.b32.cont [4/16] 0.0, 128
        %300 = vxpose.xlu0.b32.cont [5/16] 0.0, 128
        %301 = vxpose.xlu0.b32.cont [6/16] 0.0, 128
        %302 = vxpose.xlu0.b32.cont [7/16] 0.0, 128
        %303 = vxpose.xlu0.b32.cont [8/16] 0.0, 128
        %304 = vxpose.xlu0.b32.cont [9/16] 0.0, 128
        %305 = vxpose.xlu0.b32.cont [10/16] 0.0, 128
        %306 = vxpose.xlu0.b32.cont [11/16] 0.0, 128
        %307 = vxpose.xlu0.b32.cont [12/16] 0.0, 128
        %308 = vxpose.xlu0.b32.cont [13/16] 0.0, 128
        %309 = vxpose.xlu0.b32.cont [14/16] 0.0, 128
        %310 = vxpose.xlu0.b32.cont [15/16] 0.0, 128
        %311 = vxpose.xlu0.b32.end [16/16] 0.0, 128
        %v312 = vpop.trf.xlu0
        %v313 = vpop.trf.xlu0
        %v314 = vpop.trf.xlu0
        %v315 = vpop.trf.xlu0
        %v316 = vpop.trf.xlu0
        %v317 = vpop.trf.xlu0
        %v318 = vpop.trf.xlu0
        %v319 = vpop.trf.xlu0
        %v320 = vpop.trf.xlu0
        %v321 = vpop.trf.xlu0
        %v322 = vpop.trf.xlu0
        %v323 = vpop.trf.xlu0
        %v324 = vpop.trf.xlu0
        %v325 = vpop.trf.xlu0
        %v326 = vpop.trf.xlu0
        %v327 = vpop.trf.xlu0
        %v329 = vcombine.high %v312, %v312
        %v331 = vunpack.c.l.s4 1966171168
        %v332 = vunpack.c.0.s8 %v331
        %v333 = vlaneseq
        %v334 = vshrl.u32 %v333, 7
        %v335 = vsub.s32 %v332, %v334
        %v336 = vrot.slane %v312, %v335
        %v338 = vunpack.c.l.s4 1966171168
        %v339 = vunpack.c.0.s8 %v338
        %v340 = vlaneseq
        %v341 = vshrl.u32 %v340, 7
        %v342 = vsub.s32 %v339, %v341
        %v343 = vrot.slane %v329, %v342
        %v344 = vcombine.high %v336, %v336
        %v345 = vcombine.high %v343, %v343
        %v347 = vunpack.c.l.s4 1966171168
        %v348 = vunpack.c.0.s8 %v347
        %v349 = vlaneseq
        %v350 = vshrl.u32 %v349, 7
        %v351 = vsub.s32 %v348, %v350
        %v352 = vrot.slane %v336, %v351
        %v354 = vunpack.c.l.s4 1966171168
        %v355 = vunpack.c.0.s8 %v354
        %v356 = vlaneseq
        %v357 = vshrl.u32 %v356, 7
        %v358 = vsub.s32 %v355, %v357
        %v359 = vrot.slane %v343, %v358
        %v361 = vunpack.c.l.s4 1966171168
        %v362 = vunpack.c.0.s8 %v361
        %v363 = vlaneseq
        %v364 = vshrl.u32 %v363, 7
        %v365 = vsub.s32 %v362, %v364
        %v366 = vrot.slane %v344, %v365
        %v368 = vunpack.c.l.s4 1966171168
        %v369 = vunpack.c.0.s8 %v368
        %v370 = vlaneseq
        %v371 = vshrl.u32 %v370, 7
        %v372 = vsub.s32 %v369, %v371
        %v373 = vrot.slane %v345, %v372
        %v374 = vcombine.high %v352, %v352
        %v375 = vcombine.high %v359, %v359
        %v376 = vcombine.high %v366, %v366
        %v377 = vcombine.high %v373, %v373
        %vm386 = vcmask 122880
        %387 = vst.msk [vmem:[%s190] sm:$0x1] %vm386, %v352
        %388 = vst.msk [vmem:[%s190 + $0x8] sm:$0x1] %vm386, %v366
        %389 = vst.msk [vmem:[%s190 + $0x10] sm:$0x1] %vm386, %v374
        %390 = vst.msk [vmem:[%s190 + $0x18] sm:$0x1] %vm386, %v376
        %391 = vst.msk [vmem:[%s190 + $0x20] sm:$0x1] %vm386, %v359
        %392 = vst.msk [vmem:[%s190 + $0x28] sm:$0x1] %vm386, %v373
        %393 = vst.msk [vmem:[%s190 + $0x30] sm:$0x1] %vm386, %v375
        %394 = vst.msk [vmem:[%s190 + $0x38] sm:$0x1] %vm386, %v377
        %395 = vxpose.xlu0.b32.start [1/16] %v282, 128
        %396 = vxpose.xlu0.b32.cont [2/16] %v283, 128
        %397 = vxpose.xlu0.b32.cont [3/16] 0.0, 128
        %398 = vxpose.xlu0.b32.cont [4/16] 0.0, 128
        %399 = vxpose.xlu0.b32.cont [5/16] 0.0, 128
        %400 = vxpose.xlu0.b32.cont [6/16] 0.0, 128
        %401 = vxpose.xlu0.b32.cont [7/16] 0.0, 128
        %402 = vxpose.xlu0.b32.cont [8/16] 0.0, 128
        %403 = vxpose.xlu0.b32.cont [9/16] 0.0, 128
        %404 = vxpose.xlu0.b32.cont [10/16] 0.0, 128
        %405 = vxpose.xlu0.b32.cont [11/16] 0.0, 128
        %406 = vxpose.xlu0.b32.cont [12/16] 0.0, 128
        %407 = vxpose.xlu0.b32.cont [13/16] 0.0, 128
        %408 = vxpose.xlu0.b32.cont [14/16] 0.0, 128
        %409 = vxpose.xlu0.b32.cont [15/16] 0.0, 128
        %410 = vxpose.xlu0.b32.end [16/16] 0.0, 128
        %v411 = vpop.trf.xlu0
        %v412 = vpop.trf.xlu0
        %v413 = vpop.trf.xlu0
        %v414 = vpop.trf.xlu0
        %v415 = vpop.trf.xlu0
        %v416 = vpop.trf.xlu0
        %v417 = vpop.trf.xlu0
        %v418 = vpop.trf.xlu0
        %v419 = vpop.trf.xlu0
        %v420 = vpop.trf.xlu0
        %v421 = vpop.trf.xlu0
        %v422 = vpop.trf.xlu0
        %v423 = vpop.trf.xlu0
        %v424 = vpop.trf.xlu0
        %v425 = vpop.trf.xlu0
        %v426 = vpop.trf.xlu0
        %v428 = vcombine.high %v411, %v411
        %v430 = vunpack.c.l.s4 1966171168
        %v431 = vunpack.c.0.s8 %v430
        %v432 = vlaneseq
        %v433 = vshrl.u32 %v432, 7
        %v434 = vsub.s32 %v431, %v433
        %v435 = vrot.slane %v411, %v434
        %v437 = vunpack.c.l.s4 1966171168
        %v438 = vunpack.c.0.s8 %v437
        %v439 = vlaneseq
        %v440 = vshrl.u32 %v439, 7
        %v441 = vsub.s32 %v438, %v440
        %v442 = vrot.slane %v428, %v441
        %v443 = vcombine.high %v435, %v435
        %v444 = vcombine.high %v442, %v442
        %v446 = vunpack.c.l.s4 1966171168
        %v447 = vunpack.c.0.s8 %v446
        %v448 = vlaneseq
        %v449 = vshrl.u32 %v448, 7
        %v450 = vsub.s32 %v447, %v449
        %v451 = vrot.slane %v435, %v450
        %v453 = vunpack.c.l.s4 1966171168
        %v454 = vunpack.c.0.s8 %v453
        %v455 = vlaneseq
        %v456 = vshrl.u32 %v455, 7
        %v457 = vsub.s32 %v454, %v456
        %v458 = vrot.slane %v442, %v457
        %v460 = vunpack.c.l.s4 1966171168
        %v461 = vunpack.c.0.s8 %v460
        %v462 = vlaneseq
        %v463 = vshrl.u32 %v462, 7
        %v464 = vsub.s32 %v461, %v463
        %v465 = vrot.slane %v443, %v464
        %v467 = vunpack.c.l.s4 1966171168
        %v468 = vunpack.c.0.s8 %v467
        %v469 = vlaneseq
        %v470 = vshrl.u32 %v469, 7
        %v471 = vsub.s32 %v468, %v470
        %v472 = vrot.slane %v444, %v471
        %v473 = vcombine.high %v451, %v451
        %v474 = vcombine.high %v458, %v458
        %v475 = vcombine.high %v465, %v465
        %v476 = vcombine.high %v472, %v472
        %485 = vst.msk [vmem:[%s190 + $0x1] sm:$0x1] %vm386, %v451
        %486 = vst.msk [vmem:[%s190 + $0x9] sm:$0x1] %vm386, %v465
        %487 = vst.msk [vmem:[%s190 + $0x11] sm:$0x1] %vm386, %v473
        %488 = vst.msk [vmem:[%s190 + $0x19] sm:$0x1] %vm386, %v475
        %489 = vst.msk [vmem:[%s190 + $0x21] sm:$0x1] %vm386, %v458
        %490 = vst.msk [vmem:[%s190 + $0x29] sm:$0x1] %vm386, %v472
        %491 = vst.msk [vmem:[%s190 + $0x31] sm:$0x1] %vm386, %v474
        %492 = vst.msk [vmem:[%s190 + $0x39] sm:$0x1] %vm386, %v476
        %493 = vxpose.xlu0.b32.start [1/16] %v284, 128
        %494 = vxpose.xlu0.b32.cont [2/16] %v285, 128
        %495 = vxpose.xlu0.b32.cont [3/16] 0.0, 128
        %496 = vxpose.xlu0.b32.cont [4/16] 0.0, 128
        %497 = vxpose.xlu0.b32.cont [5/16] 0.0, 128
        %498 = vxpose.xlu0.b32.cont [6/16] 0.0, 128
        %499 = vxpose.xlu0.b32.cont [7/16] 0.0, 128
        %500 = vxpose.xlu0.b32.cont [8/16] 0.0, 128
        %501 = vxpose.xlu0.b32.cont [9/16] 0.0, 128
        %502 = vxpose.xlu0.b32.cont [10/16] 0.0, 128
        %503 = vxpose.xlu0.b32.cont [11/16] 0.0, 128
        %504 = vxpose.xlu0.b32.cont [12/16] 0.0, 128
        %505 = vxpose.xlu0.b32.cont [13/16] 0.0, 128
        %506 = vxpose.xlu0.b32.cont [14/16] 0.0, 128
        %507 = vxpose.xlu0.b32.cont [15/16] 0.0, 128
        %508 = vxpose.xlu0.b32.end [16/16] 0.0, 128
        %v509 = vpop.trf.xlu0
        %v510 = vpop.trf.xlu0
        %v511 = vpop.trf.xlu0
        %v512 = vpop.trf.xlu0
        %v513 = vpop.trf.xlu0
        %v514 = vpop.trf.xlu0
        %v515 = vpop.trf.xlu0
        %v516 = vpop.trf.xlu0
        %v517 = vpop.trf.xlu0
        %v518 = vpop.trf.xlu0
        %v519 = vpop.trf.xlu0
        %v520 = vpop.trf.xlu0
        %v521 = vpop.trf.xlu0
        %v522 = vpop.trf.xlu0
        %v523 = vpop.trf.xlu0
        %v524 = vpop.trf.xlu0
        %v526 = vcombine.high %v509, %v509
        %v528 = vunpack.c.l.s4 1966171168
        %v529 = vunpack.c.0.s8 %v528
        %v530 = vlaneseq
        %v531 = vshrl.u32 %v530, 7
        %v532 = vsub.s32 %v529, %v531
        %v533 = vrot.slane %v509, %v532
        %v535 = vunpack.c.l.s4 1966171168
        %v536 = vunpack.c.0.s8 %v535
        %v537 = vlaneseq
        %v538 = vshrl.u32 %v537, 7
        %v539 = vsub.s32 %v536, %v538
        %v540 = vrot.slane %v526, %v539
        %v541 = vcombine.high %v533, %v533
        %v542 = vcombine.high %v540, %v540
        %v544 = vunpack.c.l.s4 1966171168
        %v545 = vunpack.c.0.s8 %v544
        %v546 = vlaneseq
        %v547 = vshrl.u32 %v546, 7
        %v548 = vsub.s32 %v545, %v547
        %v549 = vrot.slane %v533, %v548
        %v551 = vunpack.c.l.s4 1966171168
        %v552 = vunpack.c.0.s8 %v551
        %v553 = vlaneseq
        %v554 = vshrl.u32 %v553, 7
        %v555 = vsub.s32 %v552, %v554
        %v556 = vrot.slane %v540, %v555
        %v558 = vunpack.c.l.s4 1966171168
        %v559 = vunpack.c.0.s8 %v558
        %v560 = vlaneseq
        %v561 = vshrl.u32 %v560, 7
        %v562 = vsub.s32 %v559, %v561
        %v563 = vrot.slane %v541, %v562
        %v565 = vunpack.c.l.s4 1966171168
        %v566 = vunpack.c.0.s8 %v565
        %v567 = vlaneseq
        %v568 = vshrl.u32 %v567, 7
        %v569 = vsub.s32 %v566, %v568
        %v570 = vrot.slane %v542, %v569
        %v571 = vcombine.high %v549, %v549
        %v572 = vcombine.high %v556, %v556
        %v573 = vcombine.high %v563, %v563
        %v574 = vcombine.high %v570, %v570
        %583 = vst.msk [vmem:[%s190 + $0x2] sm:$0x1] %vm386, %v549
        %584 = vst.msk [vmem:[%s190 + $0xa] sm:$0x1] %vm386, %v563
        %585 = vst.msk [vmem:[%s190 + $0x12] sm:$0x1] %vm386, %v571
        %586 = vst.msk [vmem:[%s190 + $0x1a] sm:$0x1] %vm386, %v573
        %587 = vst.msk [vmem:[%s190 + $0x22] sm:$0x1] %vm386, %v556
        %588 = vst.msk [vmem:[%s190 + $0x2a] sm:$0x1] %vm386, %v570
        %589 = vst.msk [vmem:[%s190 + $0x32] sm:$0x1] %vm386, %v572
        %590 = vst.msk [vmem:[%s190 + $0x3a] sm:$0x1] %vm386, %v574
        %591 = vxpose.xlu0.b32.start [1/16] %v286, 128
        %592 = vxpose.xlu0.b32.cont [2/16] %v287, 128
        %593 = vxpose.xlu0.b32.cont [3/16] 0.0, 128
        %594 = vxpose.xlu0.b32.cont [4/16] 0.0, 128
        %595 = vxpose.xlu0.b32.cont [5/16] 0.0, 128
        %596 = vxpose.xlu0.b32.cont [6/16] 0.0, 128
        %597 = vxpose.xlu0.b32.cont [7/16] 0.0, 128
        %598 = vxpose.xlu0.b32.cont [8/16] 0.0, 128
        %599 = vxpose.xlu0.b32.cont [9/16] 0.0, 128
        %600 = vxpose.xlu0.b32.cont [10/16] 0.0, 128
        %601 = vxpose.xlu0.b32.cont [11/16] 0.0, 128
        %602 = vxpose.xlu0.b32.cont [12/16] 0.0, 128
        %603 = vxpose.xlu0.b32.cont [13/16] 0.0, 128
        %604 = vxpose.xlu0.b32.cont [14/16] 0.0, 128
        %605 = vxpose.xlu0.b32.cont [15/16] 0.0, 128
        %606 = vxpose.xlu0.b32.end [16/16] 0.0, 128
        %v607 = vpop.trf.xlu0
        %v608 = vpop.trf.xlu0
        %v609 = vpop.trf.xlu0
        %v610 = vpop.trf.xlu0
        %v611 = vpop.trf.xlu0
        %v612 = vpop.trf.xlu0
        %v613 = vpop.trf.xlu0
        %v614 = vpop.trf.xlu0
        %v615 = vpop.trf.xlu0
        %v616 = vpop.trf.xlu0
        %v617 = vpop.trf.xlu0
        %v618 = vpop.trf.xlu0
        %v619 = vpop.trf.xlu0
        %v620 = vpop.trf.xlu0
        %v621 = vpop.trf.xlu0
        %v622 = vpop.trf.xlu0
        %v624 = vcombine.high %v607, %v607
        %v626 = vunpack.c.l.s4 1966171168
        %v627 = vunpack.c.0.s8 %v626
        %v628 = vlaneseq
        %v629 = vshrl.u32 %v628, 7
        %v630 = vsub.s32 %v627, %v629
        %v631 = vrot.slane %v607, %v630
        %v633 = vunpack.c.l.s4 1966171168
        %v634 = vunpack.c.0.s8 %v633
        %v635 = vlaneseq
        %v636 = vshrl.u32 %v635, 7
        %v637 = vsub.s32 %v634, %v636
        %v638 = vrot.slane %v624, %v637
        %v639 = vcombine.high %v631, %v631
        %v640 = vcombine.high %v638, %v638
        %v642 = vunpack.c.l.s4 1966171168
        %v643 = vunpack.c.0.s8 %v642
        %v644 = vlaneseq
        %v645 = vshrl.u32 %v644, 7
        %v646 = vsub.s32 %v643, %v645
        %v647 = vrot.slane %v631, %v646
        %v649 = vunpack.c.l.s4 1966171168
        %v650 = vunpack.c.0.s8 %v649
        %v651 = vlaneseq
        %v652 = vshrl.u32 %v651, 7
        %v653 = vsub.s32 %v650, %v652
        %v654 = vrot.slane %v638, %v653
        %v656 = vunpack.c.l.s4 1966171168
        %v657 = vunpack.c.0.s8 %v656
        %v658 = vlaneseq
        %v659 = vshrl.u32 %v658, 7
        %v660 = vsub.s32 %v657, %v659
        %v661 = vrot.slane %v639, %v660
        %v663 = vunpack.c.l.s4 1966171168
        %v664 = vunpack.c.0.s8 %v663
        %v665 = vlaneseq
        %v666 = vshrl.u32 %v665, 7
        %v667 = vsub.s32 %v664, %v666
        %v668 = vrot.slane %v640, %v667
        %v669 = vcombine.high %v647, %v647
        %v670 = vcombine.high %v654, %v654
        %v671 = vcombine.high %v661, %v661
        %v672 = vcombine.high %v668, %v668
        %681 = vst.msk [vmem:[%s190 + $0x3] sm:$0x1] %vm386, %v647
        %682 = vst.msk [vmem:[%s190 + $0xb] sm:$0x1] %vm386, %v661
        %683 = vst.msk [vmem:[%s190 + $0x13] sm:$0x1] %vm386, %v669
        %684 = vst.msk [vmem:[%s190 + $0x1b] sm:$0x1] %vm386, %v671
        %685 = vst.msk [vmem:[%s190 + $0x23] sm:$0x1] %vm386, %v654
        %686 = vst.msk [vmem:[%s190 + $0x2b] sm:$0x1] %vm386, %v668
        %687 = vst.msk [vmem:[%s190 + $0x33] sm:$0x1] %vm386, %v670
        %688 = vst.msk [vmem:[%s190 + $0x3b] sm:$0x1] %vm386, %v672
        %689 = vxpose.xlu0.b32.start [1/16] %v288, 128
        %690 = vxpose.xlu0.b32.cont [2/16] %v289, 128
        %691 = vxpose.xlu0.b32.cont [3/16] 0.0, 128
        %692 = vxpose.xlu0.b32.cont [4/16] 0.0, 128
        %693 = vxpose.xlu0.b32.cont [5/16] 0.0, 128
        %694 = vxpose.xlu0.b32.cont [6/16] 0.0, 128
        %695 = vxpose.xlu0.b32.cont [7/16] 0.0, 128
        %696 = vxpose.xlu0.b32.cont [8/16] 0.0, 128
        %697 = vxpose.xlu0.b32.cont [9/16] 0.0, 128
        %698 = vxpose.xlu0.b32.cont [10/16] 0.0, 128
        %699 = vxpose.xlu0.b32.cont [11/16] 0.0, 128
        %700 = vxpose.xlu0.b32.cont [12/16] 0.0, 128
        %701 = vxpose.xlu0.b32.cont [13/16] 0.0, 128
        %702 = vxpose.xlu0.b32.cont [14/16] 0.0, 128
        %703 = vxpose.xlu0.b32.cont [15/16] 0.0, 128
        %704 = vxpose.xlu0.b32.end [16/16] 0.0, 128
        %v705 = vpop.trf.xlu0
        %v706 = vpop.trf.xlu0
        %v707 = vpop.trf.xlu0
        %v708 = vpop.trf.xlu0
        %v709 = vpop.trf.xlu0
        %v710 = vpop.trf.xlu0
        %v711 = vpop.trf.xlu0
        %v712 = vpop.trf.xlu0
        %v713 = vpop.trf.xlu0
        %v714 = vpop.trf.xlu0
        %v715 = vpop.trf.xlu0
        %v716 = vpop.trf.xlu0
        %v717 = vpop.trf.xlu0
        %v718 = vpop.trf.xlu0
        %v719 = vpop.trf.xlu0
        %v720 = vpop.trf.xlu0
        %v722 = vcombine.high %v705, %v705
        %v724 = vunpack.c.l.s4 1966171168
        %v725 = vunpack.c.0.s8 %v724
        %v726 = vlaneseq
        %v727 = vshrl.u32 %v726, 7
        %v728 = vsub.s32 %v725, %v727
        %v729 = vrot.slane %v705, %v728
        %v731 = vunpack.c.l.s4 1966171168
        %v732 = vunpack.c.0.s8 %v731
        %v733 = vlaneseq
        %v734 = vshrl.u32 %v733, 7
        %v735 = vsub.s32 %v732, %v734
        %v736 = vrot.slane %v722, %v735
        %v737 = vcombine.high %v729, %v729
        %v738 = vcombine.high %v736, %v736
        %v740 = vunpack.c.l.s4 1966171168
        %v741 = vunpack.c.0.s8 %v740
        %v742 = vlaneseq
        %v743 = vshrl.u32 %v742, 7
        %v744 = vsub.s32 %v741, %v743
        %v745 = vrot.slane %v729, %v744
        %v747 = vunpack.c.l.s4 1966171168
        %v748 = vunpack.c.0.s8 %v747
        %v749 = vlaneseq
        %v750 = vshrl.u32 %v749, 7
        %v751 = vsub.s32 %v748, %v750
        %v752 = vrot.slane %v736, %v751
        %v754 = vunpack.c.l.s4 1966171168
        %v755 = vunpack.c.0.s8 %v754
        %v756 = vlaneseq
        %v757 = vshrl.u32 %v756, 7
        %v758 = vsub.s32 %v755, %v757
        %v759 = vrot.slane %v737, %v758
        %v761 = vunpack.c.l.s4 1966171168
        %v762 = vunpack.c.0.s8 %v761
        %v763 = vlaneseq
        %v764 = vshrl.u32 %v763, 7
        %v765 = vsub.s32 %v762, %v764
        %v766 = vrot.slane %v738, %v765
        %v767 = vcombine.high %v745, %v745
        %v768 = vcombine.high %v752, %v752
        %v769 = vcombine.high %v759, %v759
        %v770 = vcombine.high %v766, %v766
        %779 = vst.msk [vmem:[%s190 + $0x4] sm:$0x1] %vm386, %v745
        %780 = vst.msk [vmem:[%s190 + $0xc] sm:$0x1] %vm386, %v759
        %781 = vst.msk [vmem:[%s190 + $0x14] sm:$0x1] %vm386, %v767
        %782 = vst.msk [vmem:[%s190 + $0x1c] sm:$0x1] %vm386, %v769
        %783 = vst.msk [vmem:[%s190 + $0x24] sm:$0x1] %vm386, %v752
        %784 = vst.msk [vmem:[%s190 + $0x2c] sm:$0x1] %vm386, %v766
        %785 = vst.msk [vmem:[%s190 + $0x34] sm:$0x1] %vm386, %v768
        %786 = vst.msk [vmem:[%s190 + $0x3c] sm:$0x1] %vm386, %v770
        %787 = vxpose.xlu0.b32.start [1/16] %v290, 128
        %788 = vxpose.xlu0.b32.cont [2/16] %v291, 128
        %789 = vxpose.xlu0.b32.cont [3/16] 0.0, 128
        %790 = vxpose.xlu0.b32.cont [4/16] 0.0, 128
        %791 = vxpose.xlu0.b32.cont [5/16] 0.0, 128
        %792 = vxpose.xlu0.b32.cont [6/16] 0.0, 128
        %793 = vxpose.xlu0.b32.cont [7/16] 0.0, 128
        %794 = vxpose.xlu0.b32.cont [8/16] 0.0, 128
        %795 = vxpose.xlu0.b32.cont [9/16] 0.0, 128
        %796 = vxpose.xlu0.b32.cont [10/16] 0.0, 128
        %797 = vxpose.xlu0.b32.cont [11/16] 0.0, 128
        %798 = vxpose.xlu0.b32.cont [12/16] 0.0, 128
        %799 = vxpose.xlu0.b32.cont [13/16] 0.0, 128
        %800 = vxpose.xlu0.b32.cont [14/16] 0.0, 128
        %801 = vxpose.xlu0.b32.cont [15/16] 0.0, 128
        %802 = vxpose.xlu0.b32.end [16/16] 0.0, 128
        %v803 = vpop.trf.xlu0
        %v804 = vpop.trf.xlu0
        %v805 = vpop.trf.xlu0
        %v806 = vpop.trf.xlu0
        %v807 = vpop.trf.xlu0
        %v808 = vpop.trf.xlu0
        %v809 = vpop.trf.xlu0
        %v810 = vpop.trf.xlu0
        %v811 = vpop.trf.xlu0
        %v812 = vpop.trf.xlu0
        %v813 = vpop.trf.xlu0
        %v814 = vpop.trf.xlu0
        %v815 = vpop.trf.xlu0
        %v816 = vpop.trf.xlu0
        %v817 = vpop.trf.xlu0
        %v818 = vpop.trf.xlu0
        %v820 = vcombine.high %v803, %v803
        %v822 = vunpack.c.l.s4 1966171168
        %v823 = vunpack.c.0.s8 %v822
        %v824 = vlaneseq
        %v825 = vshrl.u32 %v824, 7
        %v826 = vsub.s32 %v823, %v825
        %v827 = vrot.slane %v803, %v826
        %v829 = vunpack.c.l.s4 1966171168
        %v830 = vunpack.c.0.s8 %v829
        %v831 = vlaneseq
        %v832 = vshrl.u32 %v831, 7
        %v833 = vsub.s32 %v830, %v832
        %v834 = vrot.slane %v820, %v833
        %v835 = vcombine.high %v827, %v827
        %v836 = vcombine.high %v834, %v834
        %v838 = vunpack.c.l.s4 1966171168
        %v839 = vunpack.c.0.s8 %v838
        %v840 = vlaneseq
        %v841 = vshrl.u32 %v840, 7
        %v842 = vsub.s32 %v839, %v841
        %v843 = vrot.slane %v827, %v842
        %v845 = vunpack.c.l.s4 1966171168
        %v846 = vunpack.c.0.s8 %v845
        %v847 = vlaneseq
        %v848 = vshrl.u32 %v847, 7
        %v849 = vsub.s32 %v846, %v848
        %v850 = vrot.slane %v834, %v849
        %v852 = vunpack.c.l.s4 1966171168
        %v853 = vunpack.c.0.s8 %v852
        %v854 = vlaneseq
        %v855 = vshrl.u32 %v854, 7
        %v856 = vsub.s32 %v853, %v855
        %v857 = vrot.slane %v835, %v856
        %v859 = vunpack.c.l.s4 1966171168
        %v860 = vunpack.c.0.s8 %v859
        %v861 = vlaneseq
        %v862 = vshrl.u32 %v861, 7
        %v863 = vsub.s32 %v860, %v862
        %v864 = vrot.slane %v836, %v863
        %v865 = vcombine.high %v843, %v843
        %v866 = vcombine.high %v850, %v850
        %v867 = vcombine.high %v857, %v857
        %v868 = vcombine.high %v864, %v864
        %877 = vst.msk [vmem:[%s190 + $0x5] sm:$0x1] %vm386, %v843
        %878 = vst.msk [vmem:[%s190 + $0xd] sm:$0x1] %vm386, %v857
        %879 = vst.msk [vmem:[%s190 + $0x15] sm:$0x1] %vm386, %v865
        %880 = vst.msk [vmem:[%s190 + $0x1d] sm:$0x1] %vm386, %v867
        %881 = vst.msk [vmem:[%s190 + $0x25] sm:$0x1] %vm386, %v850
        %882 = vst.msk [vmem:[%s190 + $0x2d] sm:$0x1] %vm386, %v864
        %883 = vst.msk [vmem:[%s190 + $0x35] sm:$0x1] %vm386, %v866
        %884 = vst.msk [vmem:[%s190 + $0x3d] sm:$0x1] %vm386, %v868
        %885 = vxpose.xlu0.b32.start [1/16] %v292, 128
        %886 = vxpose.xlu0.b32.cont [2/16] %v293, 128
        %887 = vxpose.xlu0.b32.cont [3/16] 0.0, 128
        %888 = vxpose.xlu0.b32.cont [4/16] 0.0, 128
        %889 = vxpose.xlu0.b32.cont [5/16] 0.0, 128
        %890 = vxpose.xlu0.b32.cont [6/16] 0.0, 128
        %891 = vxpose.xlu0.b32.cont [7/16] 0.0, 128
        %892 = vxpose.xlu0.b32.cont [8/16] 0.0, 128
        %893 = vxpose.xlu0.b32.cont [9/16] 0.0, 128
        %894 = vxpose.xlu0.b32.cont [10/16] 0.0, 128
        %895 = vxpose.xlu0.b32.cont [11/16] 0.0, 128
        %896 = vxpose.xlu0.b32.cont [12/16] 0.0, 128
        %897 = vxpose.xlu0.b32.cont [13/16] 0.0, 128
        %898 = vxpose.xlu0.b32.cont [14/16] 0.0, 128
        %899 = vxpose.xlu0.b32.cont [15/16] 0.0, 128
        %900 = vxpose.xlu0.b32.end [16/16] 0.0, 128
        %v901 = vpop.trf.xlu0
        %v902 = vpop.trf.xlu0
        %v903 = vpop.trf.xlu0
        %v904 = vpop.trf.xlu0
        %v905 = vpop.trf.xlu0
        %v906 = vpop.trf.xlu0
        %v907 = vpop.trf.xlu0
        %v908 = vpop.trf.xlu0
        %v909 = vpop.trf.xlu0
        %v910 = vpop.trf.xlu0
        %v911 = vpop.trf.xlu0
        %v912 = vpop.trf.xlu0
        %v913 = vpop.trf.xlu0
        %v914 = vpop.trf.xlu0
        %v915 = vpop.trf.xlu0
        %v916 = vpop.trf.xlu0
        %v918 = vcombine.high %v901, %v901
        %v920 = vunpack.c.l.s4 1966171168
        %v921 = vunpack.c.0.s8 %v920
        %v922 = vlaneseq
        %v923 = vshrl.u32 %v922, 7
        %v924 = vsub.s32 %v921, %v923
        %v925 = vrot.slane %v901, %v924
        %v927 = vunpack.c.l.s4 1966171168
        %v928 = vunpack.c.0.s8 %v927
        %v929 = vlaneseq
        %v930 = vshrl.u32 %v929, 7
        %v931 = vsub.s32 %v928, %v930
        %v932 = vrot.slane %v918, %v931
        %v933 = vcombine.high %v925, %v925
        %v934 = vcombine.high %v932, %v932
        %v936 = vunpack.c.l.s4 1966171168
        %v937 = vunpack.c.0.s8 %v936
        %v938 = vlaneseq
        %v939 = vshrl.u32 %v938, 7
        %v940 = vsub.s32 %v937, %v939
        %v941 = vrot.slane %v925, %v940
        %v943 = vunpack.c.l.s4 1966171168
        %v944 = vunpack.c.0.s8 %v943
        %v945 = vlaneseq
        %v946 = vshrl.u32 %v945, 7
        %v947 = vsub.s32 %v944, %v946
        %v948 = vrot.slane %v932, %v947
        %v950 = vunpack.c.l.s4 1966171168
        %v951 = vunpack.c.0.s8 %v950
        %v952 = vlaneseq
        %v953 = vshrl.u32 %v952, 7
        %v954 = vsub.s32 %v951, %v953
        %v955 = vrot.slane %v933, %v954
        %v957 = vunpack.c.l.s4 1966171168
        %v958 = vunpack.c.0.s8 %v957
        %v959 = vlaneseq
        %v960 = vshrl.u32 %v959, 7
        %v961 = vsub.s32 %v958, %v960
        %v962 = vrot.slane %v934, %v961
        %v963 = vcombine.high %v941, %v941
        %v964 = vcombine.high %v948, %v948
        %v965 = vcombine.high %v955, %v955
        %v966 = vcombine.high %v962, %v962
        %975 = vst.msk [vmem:[%s190 + $0x6] sm:$0x1] %vm386, %v941
        %976 = vst.msk [vmem:[%s190 + $0xe] sm:$0x1] %vm386, %v955
        %977 = vst.msk [vmem:[%s190 + $0x16] sm:$0x1] %vm386, %v963
        %978 = vst.msk [vmem:[%s190 + $0x1e] sm:$0x1] %vm386, %v965
        %979 = vst.msk [vmem:[%s190 + $0x26] sm:$0x1] %vm386, %v948
        %980 = vst.msk [vmem:[%s190 + $0x2e] sm:$0x1] %vm386, %v962
        %981 = vst.msk [vmem:[%s190 + $0x36] sm:$0x1] %vm386, %v964
        %982 = vst.msk [vmem:[%s190 + $0x3e] sm:$0x1] %vm386, %v966
        %983 = vxpose.xlu0.b32.start [1/16] %v294, 128
        %984 = vxpose.xlu0.b32.cont [2/16] %v295, 128
        %985 = vxpose.xlu0.b32.cont [3/16] 0.0, 128
        %986 = vxpose.xlu0.b32.cont [4/16] 0.0, 128
        %987 = vxpose.xlu0.b32.cont [5/16] 0.0, 128
        %988 = vxpose.xlu0.b32.cont [6/16] 0.0, 128
        %989 = vxpose.xlu0.b32.cont [7/16] 0.0, 128
        %990 = vxpose.xlu0.b32.cont [8/16] 0.0, 128
        %991 = vxpose.xlu0.b32.cont [9/16] 0.0, 128
        %992 = vxpose.xlu0.b32.cont [10/16] 0.0, 128
        %993 = vxpose.xlu0.b32.cont [11/16] 0.0, 128
        %994 = vxpose.xlu0.b32.cont [12/16] 0.0, 128
        %995 = vxpose.xlu0.b32.cont [13/16] 0.0, 128
        %996 = vxpose.xlu0.b32.cont [14/16] 0.0, 128
        %997 = vxpose.xlu0.b32.cont [15/16] 0.0, 128
        %998 = vxpose.xlu0.b32.end [16/16] 0.0, 128
        %v999 = vpop.trf.xlu0
        %v1000 = vpop.trf.xlu0
        %v1001 = vpop.trf.xlu0
        %v1002 = vpop.trf.xlu0
        %v1003 = vpop.trf.xlu0
        %v1004 = vpop.trf.xlu0
        %v1005 = vpop.trf.xlu0
        %v1006 = vpop.trf.xlu0
        %v1007 = vpop.trf.xlu0
        %v1008 = vpop.trf.xlu0
        %v1009 = vpop.trf.xlu0
        %v1010 = vpop.trf.xlu0
        %v1011 = vpop.trf.xlu0
        %v1012 = vpop.trf.xlu0
        %v1013 = vpop.trf.xlu0
        %v1014 = vpop.trf.xlu0
        %v1016 = vcombine.high %v999, %v999
        %v1018 = vunpack.c.l.s4 1966171168
        %v1019 = vunpack.c.0.s8 %v1018
        %v1020 = vlaneseq
        %v1021 = vshrl.u32 %v1020, 7
        %v1022 = vsub.s32 %v1019, %v1021
        %v1023 = vrot.slane %v999, %v1022
        %v1025 = vunpack.c.l.s4 1966171168
        %v1026 = vunpack.c.0.s8 %v1025
        %v1027 = vlaneseq
        %v1028 = vshrl.u32 %v1027, 7
        %v1029 = vsub.s32 %v1026, %v1028
        %v1030 = vrot.slane %v1016, %v1029
        %v1031 = vcombine.high %v1023, %v1023
        %v1032 = vcombine.high %v1030, %v1030
        %v1034 = vunpack.c.l.s4 1966171168
        %v1035 = vunpack.c.0.s8 %v1034
        %v1036 = vlaneseq
        %v1037 = vshrl.u32 %v1036, 7
        %v1038 = vsub.s32 %v1035, %v1037
        %v1039 = vrot.slane %v1023, %v1038
        %v1041 = vunpack.c.l.s4 1966171168
        %v1042 = vunpack.c.0.s8 %v1041
        %v1043 = vlaneseq
        %v1044 = vshrl.u32 %v1043, 7
        %v1045 = vsub.s32 %v1042, %v1044
        %v1046 = vrot.slane %v1030, %v1045
        %v1048 = vunpack.c.l.s4 1966171168
        %v1049 = vunpack.c.0.s8 %v1048
        %v1050 = vlaneseq
        %v1051 = vshrl.u32 %v1050, 7
        %v1052 = vsub.s32 %v1049, %v1051
        %v1053 = vrot.slane %v1031, %v1052
        %v1055 = vunpack.c.l.s4 1966171168
        %v1056 = vunpack.c.0.s8 %v1055
        %v1057 = vlaneseq
        %v1058 = vshrl.u32 %v1057, 7
        %v1059 = vsub.s32 %v1056, %v1058
        %v1060 = vrot.slane %v1032, %v1059
        %v1061 = vcombine.high %v1039, %v1039
        %v1062 = vcombine.high %v1046, %v1046
        %v1063 = vcombine.high %v1053, %v1053
        %v1064 = vcombine.high %v1060, %v1060
        %1073 = vst.msk [vmem:[%s190 + $0x7] sm:$0x1] %vm386, %v1039
        %1074 = vst.msk [vmem:[%s190 + $0xf] sm:$0x1] %vm386, %v1053
        %1075 = vst.msk [vmem:[%s190 + $0x17] sm:$0x1] %vm386, %v1061
        %1076 = vst.msk [vmem:[%s190 + $0x1f] sm:$0x1] %vm386, %v1063
        %1077 = vst.msk [vmem:[%s190 + $0x27] sm:$0x1] %vm386, %v1046
        %1078 = vst.msk [vmem:[%s190 + $0x2f] sm:$0x1] %vm386, %v1060
        %1079 = vst.msk [vmem:[%s190 + $0x37] sm:$0x1] %vm386, %v1062
        %1080 = vst.msk [vmem:[%s190 + $0x3f] sm:$0x1] %vm386, %v1064
        %s1081 = sand.u32 %s109, 1
        %s1082 = scalar_lea.sflag [#allocation3], %s1081
        %s1083 = sand.u32 %s109, 1
        %s1084 = smul.addr %s1083, 64
        %s1085 = scalar_lea.vmem [#allocation2], %s1084
        // Predicated region
        $region33: #{conv_bn_relu_forward.3} parent=31 // pred_check
          %p1086 = pneg %p119
        $region34: #{conv_bn_relu_forward.3} parent=31 // pred_check_branch
          %1088 = sbr.rel (%p1086) target = $region36
        $region35: #{conv_bn_relu_forward.3} parent=31 // pred_region
          %s1090 = ssub.s32 1024, 1024
          %1091 = vsyncadd %s1082, %s1090
          %s1092 = smul.addr %s21, 16
          %s1093 = sadd.s32 %s22, %s1092
          %s1094 = smul.addr %s1093, 128
          %s1095 = scalar_lea.hbm %s3, %s1094
          %s1096 = sshll.u32 %s1085, 4
          %s1097 = int_to_ptr.vmem [resolvable:$true] %s1096
          %1102 = dma.vmem_to_hbm [thread:$0]  %s1097, 1024, %s1095, %s1082, 128, 256, 8
        $region36: #{conv_bn_relu_forward.3} parent=31 // pred_fallthru
          _
      $region32: #{conv_bn_relu_forward.3} parent=5 // pred_fallthru
        _
      %p1103 = scmp.le.s32.totalorder 2, %s12
      // Predicated region
      $region37: #{conv_bn_relu_forward.3} parent=5 // pred_check
        %p1104 = pneg %p1103
      $region38: #{conv_bn_relu_forward.3} parent=5 // pred_check_branch
        %1106 = sbr.rel (%p1104) target = $region40
      $region39: #{conv_bn_relu_forward.3} parent=5 // pred_region
        %s1107 = ssub.s32 %s12, 2
        // Predicated region
        $region41: #{conv_bn_relu_forward.3} parent=39 // pred_check
          %p1108 = pneg %p125
        $region42: #{conv_bn_relu_forward.3} parent=39 // pred_check_branch
          %1110 = sbr.rel (%p1108) target = $region44
        $region43: #{conv_bn_relu_forward.3} parent=39 // pred_region
          %s1111 = sand.u32 %s110, 1
          %s1112 = scalar_lea.sflag [#allocation3], %s1111
          %s1113 = sand.u32 %s110, 1
          %s1114 = smul.addr %s1113, 64
          %s1115 = scalar_lea.vmem [#allocation2], %s1114
          %1116 = dma.done %s1112, 1024
        $region44: #{conv_bn_relu_forward.3} parent=39 // pred_fallthru
          _
      $region40: #{conv_bn_relu_forward.3} parent=5 // pred_fallthru
        _
    $region6: #{conv_bn_relu_forward.3} parent=1 // loop_footer
      %s16 = sadd.s32 1, %s12
    $region7: #{conv_bn_relu_forward.3} parent=1 // loop_footer_branch
      %11 = sbr.rel target = $region3
    $region8: #{conv_bn_relu_forward.3} parent=1 // loop_exit
      _
    %1117 = vsyncpa [#allocation3], 1
    %s1118 = scalar_lea.sflag [#allocation3], 1
    %1119 = vsyncpa %s1118, 1

// kernel: conv_bn_relu_forward.2
$region0: #{conv_bn_relu_forward.2}
  #allocation0 [shape = 'u32[]', space=smem, size = 0x4, offset = 0x4, fixed_abs, tag = 'smem constant byte address 0x4 - core index']
  #allocation1 [shape = 'u32[144,128]{1,0:T(1,128)}', space=vmem, size = 0x12000, scoped, tag = 'internal scratch']
  %s0 = inlined_call_operand.vmem [shape: bf16[2,18,18,4], index: 0, kind: input, shape index: {}]
  %s1 = inlined_call_operand.vmem [shape: bf16[9,4,8], index: 1, kind: input, shape index: {}]
  %s2 = inlined_call_operand.vmem [shape: bf16[2,16,16,8], index: 2, kind: output, shape index: {0}]
  %s3 = inlined_call_operand.vmem [shape: f32[2,2,2,8], index: 3, kind: output, shape index: {1}]
  %4 = xla_tuple %s2, %s3
  %s5 = sld [smem:[#allocation0]]
  $region49: #{conv_bn_relu_forward.2} parent=0
    _
  %s7 = ssub.s32 1, %s5
  %s8 = scalar_select 0, %s7, %s5
  loop: start=0, step=1, limit=6
  $region2: #{conv_bn_relu_forward.2} parent=0 // loop_pre_header
    _
  $region3: #{conv_bn_relu_forward.2} parent=0 // loop_header
    %s10 = sphi 0, %s14
    %p11 = scmp.ge.s32.totalorder %s10, 6
    %s17 = sphi 0, %s29
    %s18 = sphi 0, %s25
    %s19 = sphi 0, %s17
    %s20 = sphi 0, %s18
    %s21 = sphi 0, %s19
    %s22 = sphi 0, %s20
    %s32 = sphi 0, %s34
    %s35 = sphi 0, %s32
    %s36 = sphi 0, %s35
    %s52 = sphi 0, %s36
    %s56 = sphi 0, %s56
    %s58 = sphi 0, %s56
    %s59 = sphi 0, %s58
    %s73 = sphi 0, %s59
    %s81 = sphi 0, %s83
    %s84 = sphi 0, %s81
    %s85 = sphi 0, %s84
    %s101 = sphi 0, %s85
    %s109 = sphi 0, %s111
    %s112 = sphi 0, %s109
    %s113 = sphi 0, %s112
    %s129 = sphi 0, %s113
  $region4: #{conv_bn_relu_forward.2} parent=0 // loop_header_branch
    %13 = sbr.rel (%p11) target = $region8
  $region5: #{conv_bn_relu_forward.2} parent=0 // loop_body
    %s15 = ssub.s32 %s10, 1
    %s16 = ssub.s32 %s10, 2
    %s23 = sadd.s32 1, %s18
    %p24 = scmp.ge.s32.totalorder %s23, 2
    %s25 = scalar_select %p24, 0, %s23
    %s26 = sadd.s32 1, %s17
    %s27 = scalar_select %p24, %s26, %s17
    %p28 = scmp.ge.s32.totalorder %s27, 2
    %s29 = scalar_select %p28, 0, %s27
    %s30 = ssub.s32 %s17, %s29
    %p31 = scmp.eq.s32.totalorder %s30, 0
    %s33 = sadd.s32 %s32, 1
    %s34 = scalar_select %p31, %s32, %s33
    %p37 = pneg %p31
    %p38 = scmp.eq.s32.totalorder %s10, 3
    %p39 = por %p37, %p38
    %p40 = scmp.ne.s32.totalorder %s32, %s35
    %p41 = scmp.eq.s32.totalorder %s10, 0
    %p42 = por %p40, %p41
    %p43 = scmp.ne.s32.totalorder %s32, %s35
    %p44 = scmp.eq.s32.totalorder %s15, 3
    %p45 = por %p43, %p44
    %p46 = scmp.ne.s32.totalorder %s35, %s36
    %p47 = scmp.eq.s32.totalorder %s15, 0
    %p48 = por %p46, %p47
    %p49 = scmp.ne.s32.totalorder %s35, %s36
    %p50 = scmp.eq.s32.totalorder %s16, 3
    %p51 = por %p49, %p50
    %p53 = scmp.ne.s32.totalorder %s36, %s52
    %p54 = scmp.eq.s32.totalorder %s16, 0
    %p55 = por %p53, %p54
    %s57 = sadd.s32 %s56, 1
    %p60 = scmp.eq.s32.totalorder %s10, 3
    %p61 = scmp.ne.s32.totalorder %s56, %s58
    %p62 = scmp.eq.s32.totalorder %s10, 0
    %p63 = por %p61, %p62
    %p64 = scmp.ne.s32.totalorder %s56, %s58
    %p65 = scmp.eq.s32.totalorder %s15, 3
    %p66 = por %p64, %p65
    %p67 = scmp.ne.s32.totalorder %s58, %s59
    %p68 = scmp.eq.s32.totalorder %s15, 0
    %p69 = por %p67, %p68
    %p70 = scmp.ne.s32.totalorder %s58, %s59
    %p71 = scmp.eq.s32.totalorder %s16, 3
    %p72 = por %p70, %p71
    %p74 = scmp.ne.s32.totalorder %s59, %s73
    %p75 = scmp.eq.s32.totalorder %s16, 0
    %p76 = por %p74, %p75
    %s77 = ssub.s32 %s17, %s29
    %s78 = ssub.s32 %s18, %s25
    %s79 = sor.u32 %s77, %s78
    %p80 = scmp.eq.s32.totalorder %s79, 0
    %s82 = sadd.s32 %s81, 1
    %s83 = scalar_select %p80, %s81, %s82
    %p86 = pneg %p80
    %p87 = scmp.eq.s32.totalorder %s10, 3
    %p88 = por %p86, %p87
    %p89 = scmp.ne.s32.totalorder %s81, %s84
    %p90 = scmp.eq.s32.totalorder %s10, 0
    %p91 = por %p89, %p90
    %p92 = scmp.ne.s32.totalorder %s81, %s84
    %p93 = scmp.eq.s32.totalorder %s15, 3
    %p94 = por %p92, %p93
    %p95 = scmp.ne.s32.totalorder %s84, %s85
    %p96 = scmp.eq.s32.totalorder %s15, 0
    %p97 = por %p95, %p96
    %p98 = scmp.ne.s32.totalorder %s84, %s85
    %p99 = scmp.eq.s32.totalorder %s16, 3
    %p100 = por %p98, %p99
    %p102 = scmp.ne.s32.totalorder %s85, %s101
    %p103 = scmp.eq.s32.totalorder %s16, 0
    %p104 = por %p102, %p103
    %s105 = ssub.s32 %s17, %s29
    %s106 = ssub.s32 %s18, %s25
    %s107 = sor.u32 %s105, %s106
    %p108 = scmp.eq.s32.totalorder %s107, 0
    %s110 = sadd.s32 %s109, 1
    %s111 = scalar_select %p108, %s109, %s110
    %p114 = pneg %p108
    %p115 = scmp.eq.s32.totalorder %s10, 3
    %p116 = por %p114, %p115
    %p117 = scmp.ne.s32.totalorder %s109, %s112
    %p118 = scmp.eq.s32.totalorder %s10, 0
    %p119 = por %p117, %p118
    %p120 = scmp.ne.s32.totalorder %s109, %s112
    %p121 = scmp.eq.s32.totalorder %s15, 3
    %p122 = por %p120, %p121
    %p123 = scmp.ne.s32.totalorder %s112, %s113
    %p124 = scmp.eq.s32.totalorder %s15, 0
    %p125 = por %p123, %p124
    %p126 = scmp.ne.s32.totalorder %s112, %s113
    %p127 = scmp.eq.s32.totalorder %s16, 3
    %p128 = por %p126, %p127
    %p130 = scmp.ne.s32.totalorder %s113, %s129
    %p131 = scmp.eq.s32.totalorder %s16, 0
    %p132 = por %p130, %p131
    %p133 = scmp.le.s32.totalorder 1, %s10
    %p134 = scmp.lt.s32.totalorder %s10, 5
    %p135 = pnand %p133, %p134
    %p136 = pneg %p135
    // Predicated region
    $region9: #{conv_bn_relu_forward.2} parent=5 // pred_check
      _
    $region10: #{conv_bn_relu_forward.2} parent=5 // pred_check_branch
      %138 = sbr.rel (%p135) target = $region12
    $region11: #{conv_bn_relu_forward.2} parent=5 // pred_region
      %s139 = ssub.s32 %s10, 1
      // Predicated region
      $region13: #{conv_bn_relu_forward.2} parent=11 // pred_check
        %p140 = pneg %p69
      $region14: #{conv_bn_relu_forward.2} parent=11 // pred_check_branch
        %142 = sbr.rel (%p140) target = $region16
      $region15: #{conv_bn_relu_forward.2} parent=11 // pred_region
        _
      $region16: #{conv_bn_relu_forward.2} parent=11 // pred_fallthru
        _
    $region12: #{conv_bn_relu_forward.2} parent=5 // pred_fallthru
      _
    %p143 = scmp.lt.s32.totalorder %s10, 4
    // Predicated region
    $region17: #{conv_bn_relu_forward.2} parent=5 // pred_check
      %p144 = pneg %p143
    $region18: #{conv_bn_relu_forward.2} parent=5 // pred_check_branch
      %146 = sbr.rel (%p144) target = $region20
    $region19: #{conv_bn_relu_forward.2} parent=5 // pred_region
      // Predicated region
      $region21: #{conv_bn_relu_forward.2} parent=19 // pred_check
        %p147 = pneg %p42
      $region22: #{conv_bn_relu_forward.2} parent=19 // pred_check_branch
        %149 = sbr.rel (%p147) target = $region24
      $region23: #{conv_bn_relu_forward.2} parent=19 // pred_region
        %p150 = scmp.lt.s32.totalorder %s17, 1
        %s151 = scalar_select %p150, %s17, 1
        %s152 = smul.addr %s151, 54
        %s153 = smul.addr %s152, 4
        %s154 = scalar_lea.vmem %s0, %s153
      $region24: #{conv_bn_relu_forward.2} parent=19 // pred_fallthru
        _
    $region20: #{conv_bn_relu_forward.2} parent=5 // pred_fallthru
      _
    %p155 = scmp.le.s32.totalorder 1, %s10
    %p156 = scmp.lt.s32.totalorder %s10, 5
    %p157 = pnand %p155, %p156
    %p158 = pneg %p157
    // Predicated region
    $region25: #{conv_bn_relu_forward.2} parent=5 // pred_check
      _
    $region26: #{conv_bn_relu_forward.2} parent=5 // pred_check_branch
      %160 = sbr.rel (%p157) target = $region28
    $region27: #{conv_bn_relu_forward.2} parent=5 // pred_region
      %s161 = ssub.s32 %s10, 1
      %p162 = scmp.lt.s32.totalorder %s19, 1
      %s163 = scalar_select %p162, %s19, 1
      %s164 = smul.addr %s163, 54
      %s165 = smul.addr %s164, 4
      %s166 = scalar_lea.vmem %s0, %s165
      %p167 = pneg %p48
      %p168 = pneg %p45
      %p169 = pneg %p69
      %p170 = pneg %p66
      %p171 = pneg %p97
      %p172 = pneg %p94
      %s173 = smul.u32 8, %s20
      %p174 = scmp.lt.s32.totalorder %s19, 1
      %s175 = scalar_select %p174, %s19, 1
      %p176 = scmp.lt.s32.totalorder %s173, 15
      %s177 = scalar_select %p176, %s173, 15
      %s178 = smul.addr %s177, 2
      %s179 = smul.addr %s175, 32
      %s180 = sadd.s32 %s178, %s179
      %s181 = smul.addr %s180, 4
      %s182 = scalar_lea.vmem %s2, %s181
      %p183 = pneg %p125
      %p184 = pneg %p122
      %p185 = scmp.lt.s32.totalorder %s19, 1
      %s186 = scalar_select %p185, %s19, 1
      %p187 = scmp.lt.s32.totalorder %s20, 1
      %s188 = scalar_select %p187, %s20, 1
      %s189 = smul.addr %s186, 2
      %s190 = sadd.s32 %s188, %s189
      %s191 = smul.addr %s190, 2
      %s192 = scalar_lea.vmem %s3, %s191
      %p193 = scmp.lt.s32.totalorder %s19, 1
      %s194 = scalar_select %p193, %s19, 1
      %s195 = smul.addr %s194, 54
      %s196 = smul.addr %s195, 4
      %s197 = scalar_lea.vmem %s0, %s196
      %s198 = smul.u32 8, %s20
      %p199 = scmp.lt.s32.totalorder %s19, 1
      %s200 = scalar_select %p199, %s19, 1
      %p201 = scmp.lt.s32.totalorder %s198, 15
      %s202 = scalar_select %p201, %s198, 15
      %s203 = smul.addr %s202, 2
      %s204 = smul.addr %s200, 32
      %s205 = sadd.s32 %s203, %s204
      %s206 = smul.addr %s205, 4
      %s207 = scalar_lea.vmem %s2, %s206
      %s208 = smul.u32 8, %s20
      %p209 = scmp.lt.s32.totalorder %s19, 1
      %s210 = scalar_select %p209, %s19, 1
      %p211 = scmp.lt.s32.totalorder %s20, 1
      %s212 = scalar_select %p211, %s20, 1
      %s213 = smul.addr %s210, 2
      %s214 = sadd.s32 %s212, %s213
      %s215 = smul.addr %s214, 2
      %s216 = scalar_lea.vmem %s3, %s215
      %s218 = smul.u32 %s20, 8
      %s219 = smul.u32 %s218, 3
      %s220 = smul.addr %s219, 4
      %s221 = scalar_lea.vmem %s197, %s220
      %v222 = vld [vmem:[%s221] sm:$0xf]
      %v223 = vld [vmem:[%s221 + $0x4] sm:$0xf]
      %v224 = vld [vmem:[%s221 + $0xc] sm:$0xf]
      %v225 = vld [vmem:[%s221 + $0x10] sm:$0xf]
      %v226 = vld [vmem:[%s221 + $0x18] sm:$0xf]
      %v227 = vld [vmem:[%s221 + $0x1c] sm:$0xf]
      %v228 = vld [vmem:[%s221 + $0x24] sm:$0xf]
      %v229 = vld [vmem:[%s221 + $0x28] sm:$0xf]
      %v230 = vld [vmem:[%s221 + $0x30] sm:$0xf]
      %v231 = vld [vmem:[%s221 + $0x34] sm:$0xf]
      %v232 = vld [vmem:[%s221 + $0x3c] sm:$0xf]
      %v233 = vld [vmem:[%s221 + $0x40] sm:$0xf]
      %v234 = vld [vmem:[%s221 + $0x48] sm:$0xf]
      %v235 = vld [vmem:[%s221 + $0x4c] sm:$0xf]
      %v236 = vld [vmem:[%s221 + $0x54] sm:$0xf]
      %v237 = vld [vmem:[%s221 + $0x58] sm:$0xf]
      %v238 = vld [vmem:[%s1] sm:$0x3]
      %v239 = vld [vmem:[%s221 + $0x8] sm:$0x1]
      %v240 = vld [vmem:[%s221 + $0x14] sm:$0x1]
      %v241 = vld [vmem:[%s221 + $0x20] sm:$0x1]
      %v242 = vld [vmem:[%s221 + $0x2c] sm:$0x1]
      %v243 = vld [vmem:[%s221 + $0x38] sm:$0x1]
      %v244 = vld [vmem:[%s221 + $0x44] sm:$0x1]
      %v245 = vld [vmem:[%s221 + $0x50] sm:$0x1]
      %v246 = vld [vmem:[%s221 + $0x5c] sm:$0x1]
      %vm247 = vsmask.f32 3328
      %vm248 = vsmask.f32 7440
      %vm249 = vmor %vm247, %vm248
      %v251 = vshrl.u32 %v222, 16
      %v253 = vrot.slane %v251, 4
      %v254 = vshll.u32 %v222, 16
      %v256 = vrot.slane %v254, 5
      %v257 = vor.u32 %v253, %v256
      %v258 = vrot.slane %v257, 4
      %v260 = vshll.u32 %v223, 16
      %v262 = vrot.slane %v260, 5
      %v263 = vsel %vm249, %v258, %v262
      %v264 = vshrl.u32 %v223, 16
      %v266 = vrot.slane %v264, 4
      %v267 = vor.u32 %v266, %v262
      %v268 = vrot.slane %v267, 4
      %v270 = vshll.u32 %v239, 16
      %v272 = vrot.slane %v270, 5
      %v273 = vsel %vm249, %v268, %v272
      %v275 = vshrl.u32 %v224, 16
      %v277 = vrot.slane %v275, 4
      %v278 = vshll.u32 %v224, 16
      %v280 = vrot.slane %v278, 5
      %v281 = vor.u32 %v277, %v280
      %v282 = vrot.slane %v281, 4
      %v284 = vshll.u32 %v225, 16
      %v286 = vrot.slane %v284, 5
      %v287 = vsel %vm249, %v282, %v286
      %v288 = vshrl.u32 %v225, 16
      %v290 = vrot.slane %v288, 4
      %v291 = vor.u32 %v290, %v286
      %v292 = vrot.slane %v291, 4
      %v294 = vshll.u32 %v240, 16
      %v296 = vrot.slane %v294, 5
      %v297 = vsel %vm249, %v292, %v296
      %v299 = vshrl.u32 %v226, 16
      %v301 = vrot.slane %v299, 4
      %v302 = vshll.u32 %v226, 16
      %v304 = vrot.slane %v302, 5
      %v305 = vor.u32 %v301, %v304
      %v306 = vrot.slane %v305, 4
      %v308 = vshll.u32 %v227, 16
      %v310 = vrot.slane %v308, 5
      %v311 = vsel %vm249, %v306, %v310
      %v312 = vshrl.u32 %v227, 16
      %v314 = vrot.slane %v312, 4
      %v315 = vor.u32 %v314, %v310
      %v316 = vrot.slane %v315, 4
      %v318 = vshll.u32 %v241, 16
      %v320 = vrot.slane %v318, 5
      %v321 = vsel %vm249, %v316, %v320
      %v323 = vshrl.u32 %v228, 16
      %v325 = vrot.slane %v323, 4
      %v326 = vshll.u32 %v228, 16
      %v328 = vrot.slane %v326, 5
      %v329 = vor.u32 %v325, %v328
      %v330 = vrot.slane %v329, 4
      %v332 = vshll.u32 %v229, 16
      %v334 = vrot.slane %v332, 5
      %v335 = vsel %vm249, %v330, %v334
      %v336 = vshrl.u32 %v229, 16
      %v338 = vrot.slane %v336, 4
      %v339 = vor.u32 %v338, %v334
      %v340 = vrot.slane %v339, 4
      %v342 = vshll.u32 %v242, 16
      %v344 = vrot.slane %v342, 5
      %v345 = vsel %vm249, %v340, %v344
      %v347 = vshrl.u32 %v230, 16
      %v349 = vrot.slane %v347, 4
      %v350 = vshll.u32 %v230, 16
      %v352 = vrot.slane %v350, 5
      %v353 = vor.u32 %v349, %v352
      %v354 = vrot.slane %v353, 4
      %v356 = vshll.u32 %v231, 16
      %v358 = vrot.slane %v356, 5
      %v359 = vsel %vm249, %v354, %v358
      %v360 = vshrl.u32 %v231, 16
      %v362 = vrot.slane %v360, 4
      %v363 = vor.u32 %v362, %v358
      %v364 = vrot.slane %v363, 4
      %v366 = vshll.u32 %v243, 16
      %v368 = vrot.slane %v366, 5
      %v369 = vsel %vm249, %v364, %v368
      %v371 = vshrl.u32 %v232, 16
      %v373 = vrot.slane %v371, 4
      %v374 = vshll.u32 %v232, 16
      %v376 = vrot.slane %v374, 5
      %v377 = vor.u32 %v373, %v376
      %v378 = vrot.slane %v377, 4
      %v380 = vshll.u32 %v233, 16
      %v382 = vrot.slane %v380, 5
      %v383 = vsel %vm249, %v378, %v382
      %v384 = vshrl.u32 %v233, 16
      %v386 = vrot.slane %v384, 4
      %v387 = vor.u32 %v386, %v382
      %v388 = vrot.slane %v387, 4
      %v390 = vshll.u32 %v244, 16
      %v392 = vrot.slane %v390, 5
      %v393 = vsel %vm249, %v388, %v392
      %v395 = vshrl.u32 %v234, 16
      %v397 = vrot.slane %v395, 4
      %v398 = vshll.u32 %v234, 16
      %v400 = vrot.slane %v398, 5
      %v401 = vor.u32 %v397, %v400
      %v402 = vrot.slane %v401, 4
      %v404 = vshll.u32 %v235, 16
      %v406 = vrot.slane %v404, 5
      %v407 = vsel %vm249, %v402, %v406
      %v408 = vshrl.u32 %v235, 16
      %v410 = vrot.slane %v408, 4
      %v411 = vor.u32 %v410, %v406
      %v412 = vrot.slane %v411, 4
      %v414 = vshll.u32 %v245, 16
      %v416 = vrot.slane %v414, 5
      %v417 = vsel %vm249, %v412, %v416
      %v419 = vshrl.u32 %v236, 16
      %v421 = vrot.slane %v419, 4
      %v422 = vshll.u32 %v236, 16
      %v424 = vrot.slane %v422, 5
      %v425 = vor.u32 %v421, %v424
      %v426 = vrot.slane %v425, 4
      %v428 = vshll.u32 %v237, 16
      %v430 = vrot.slane %v428, 5
      %v431 = vsel %vm249, %v426, %v430
      %v432 = vshrl.u32 %v237, 16
      %v434 = vrot.slane %v432, 4
      %v435 = vor.u32 %v434, %v430
      %v436 = vrot.slane %v435, 4
      %v438 = vshll.u32 %v246, 16
      %v440 = vrot.slane %v438, 5
      %v441 = vsel %vm249, %v436, %v440
      %s442 = scalar_lea.vmem %s1, 2
      %v443 = vld [vmem:[%s442] sm:$0x3]
      %v444 = vunpack.c.l.b16 %v263
      %v445 = vunpack.c.l.b16 %v273
      %v446 = vunpack.c.l.b16 %v287
      %v447 = vunpack.c.l.b16 %v297
      %v448 = vunpack.c.l.b16 %v311
      %v449 = vunpack.c.l.b16 %v321
      %v450 = vunpack.c.l.b16 %v335
      %v451 = vunpack.c.l.b16 %v345
      %v452 = vunpack.c.l.b16 %v359
      %v453 = vunpack.c.l.b16 %v369
      %v454 = vunpack.c.l.b16 %v383
      %v455 = vunpack.c.l.b16 %v393
      %v456 = vunpack.c.l.b16 %v407
      %v457 = vunpack.c.l.b16 %v417
      %v458 = vunpack.c.l.b16 %v431
      %v459 = vunpack.c.l.b16 %v441
      %v460 = vpack.c.b16 %v445, %v444
      %v461 = vpack.c.b16 %v447, %v446
      %v462 = vpack.c.b16 %v449, %v448
      %v463 = vpack.c.b16 %v451, %v450
      %v464 = vpack.c.b16 %v453, %v452
      %v465 = vpack.c.b16 %v455, %v454
      %v466 = vpack.c.b16 %v457, %v456
      %v467 = vpack.c.b16 %v459, %v458
      %vm468 = vcmask 31744
      %v470 = vsel %vm468, %v460, 0
      %v473 = vsel %vm468, %v461, 0
      %v476 = vsel %vm468, %v462, 0
      %v479 = vsel %vm468, %v463, 0
      %v482 = vsel %vm468, %v464, 0
      %v485 = vsel %vm468, %v465, 0
      %v488 = vsel %vm468, %v466, 0
      %v491 = vsel %vm468, %v467, 0
      %vm493 = vcmask 1041408
      %v495 = vsel %vm493, %v443, 0
      %497 = vmatprep.subr.bf16.mxu0 0
      %498 = vmatpush1.bf16.msra.mxu0 %v495
      %499 = vmatprep.subr.bf16.mxu0 0
      %500 = vmatpush1.bf16.msra.mxu0 0
      %501 = vmatprep.subr.bf16.mxu0 0
      %502 = vmatpush1.bf16.msra.mxu0 0
      %503 = vmatprep.subr.bf16.mxu0 0
      %504 = vmatpush1.bf16.msra.mxu0 0
      %505 = vmatprep.subr.bf16.mxu0 0
      %506 = vmatpush1.bf16.msra.mxu0 0
      %507 = vmatprep.subr.bf16.mxu0 0
      %508 = vmatpush1.bf16.msra.mxu0 0
      %509 = vmatprep.subr.bf16.mxu0 0
      %510 = vmatpush1.bf16.msra.mxu0 0
      %511 = vmatprep.subr.bf16.mxu0 0
      %512 = vmatpush1.bf16.msra.mxu0 0
      %513 = vmatprep.subr.bf16.mxu0 0
      %514 = vmatpush1.bf16.msra.mxu0 0
      %515 = vmatprep.subr.bf16.mxu0 0
      %516 = vmatpush1.bf16.msra.mxu0 0
      %517 = vmatprep.subr.bf16.mxu0 0
      %518 = vmatpush1.bf16.msra.mxu0 0
      %519 = vmatprep.subr.bf16.mxu0 0
      %520 = vmatpush1.bf16.msra.mxu0 0
      %521 = vmatprep.subr.bf16.mxu0 0
      %522 = vmatpush1.bf16.msra.mxu0 0
      %523 = vmatprep.subr.bf16.mxu0 0
      %524 = vmatpush1.bf16.msra.mxu0 0
      %525 = vmatprep.subr.bf16.mxu0 0
      %526 = vmatpush1.bf16.msra.mxu0 0
      %527 = vmatprep.subr.bf16.mxu0 0
      %528 = vmatpush1.bf16.msra.mxu0 0
      %529 = vmatprep.mubr.bf16.mxu0 0
      %530 = vmatmul.mubr.bf16.gmra.mrb[0].mxu0 %v470
      %v531 = vpop.f32.mrb[0].mxu0
      %v532 = vadd.f32 0.0, %v531
      %v533 = vpop.f32.mrb[0].mxu0
      %v534 = vpop.f32.mrb[0].mxu0
      %v535 = vadd.f32 0.0, %v534
      %v536 = vpop.f32.mrb[0].mxu0
      %537 = vmatprep.mubr.bf16.mxu0 0
      %538 = vmatmul.mubr.bf16.gmra.mrb[0].mxu0 %v473
      %v539 = vpop.f32.mrb[0].mxu0
      %v540 = vadd.f32 0.0, %v539
      %v541 = vpop.f32.mrb[0].mxu0
      %v542 = vpop.f32.mrb[0].mxu0
      %v543 = vadd.f32 0.0, %v542
      %v544 = vpop.f32.mrb[0].mxu0
      %545 = vmatprep.mubr.bf16.mxu0 0
      %546 = vmatmul.mubr.bf16.gmra.mrb[0].mxu0 %v476
      %v547 = vpop.f32.mrb[0].mxu0
      %v548 = vadd.f32 0.0, %v547
      %v549 = vpop.f32.mrb[0].mxu0
      %v550 = vpop.f32.mrb[0].mxu0
      %v551 = vadd.f32 0.0, %v550
      %v552 = vpop.f32.mrb[0].mxu0
      %553 = vmatprep.mubr.bf16.mxu0 0
      %554 = vmatmul.mubr.bf16.gmra.mrb[0].mxu0 %v479
      %v555 = vpop.f32.mrb[0].mxu0
      %v556 = vadd.f32 0.0, %v555
      %v557 = vpop.f32.mrb[0].mxu0
      %v558 = vpop.f32.mrb[0].mxu0
      %v559 = vadd.f32 0.0, %v558
      %v560 = vpop.f32.mrb[0].mxu0
      %561 = vmatprep.mubr.bf16.mxu0 0
      %562 = vmatmul.mubr.bf16.gmra.mrb[0].mxu0 %v482
      %v563 = vpop.f32.mrb[0].mxu0
      %v564 = vadd.f32 0.0, %v563
      %v565 = vpop.f32.mrb[0].mxu0
      %v566 = vpop.f32.mrb[0].mxu0
      %v567 = vadd.f32 0.0, %v566
      %v568 = vpop.f32.mrb[0].mxu0
      %569 = vmatprep.mubr.bf16.mxu0 0
      %570 = vmatmul.mubr.bf16.gmra.mrb[0].mxu0 %v485
      %v571 = vpop.f32.mrb[0].mxu0
      %v572 = vadd.f32 0.0, %v571
      %v573 = vpop.f32.mrb[0].mxu0
      %v574 = vpop.f32.mrb[0].mxu0
      %v575 = vadd.f32 0.0, %v574
      %v576 = vpop.f32.mrb[0].mxu0
      %577 = vmatprep.mubr.bf16.mxu0 0
      %578 = vmatmul.mubr.bf16.gmra.mrb[0].mxu0 %v488
      %v579 = vpop.f32.mrb[0].mxu0
      %v580 = vadd.f32 0.0, %v579
      %v581 = vpop.f32.mrb[0].mxu0
      %v582 = vpop.f32.mrb[0].mxu0
      %v583 = vadd.f32 0.0, %v582
      %v584 = vpop.f32.mrb[0].mxu0
      %585 = vmatprep.mubr.bf16.mxu0 0
      %586 = vmatmul.mubr.bf16.gmra.mrb[0].mxu0 %v491
      %v587 = vpop.f32.mrb[0].mxu0
      %v588 = vadd.f32 0.0, %v587
      %v589 = vpop.f32.mrb[0].mxu0
      %v590 = vpop.f32.mrb[0].mxu0
      %v591 = vadd.f32 0.0, %v590
      %v592 = vpop.f32.mrb[0].mxu0
      %593 = vdwg.mxu0
      %v610 = vunpack.c.l.b16 %v222
      %v611 = vunpack.c.l.b16 %v223
      %v612 = vunpack.c.l.b16 %v224
      %v613 = vunpack.c.l.b16 %v225
      %v614 = vunpack.c.l.b16 %v226
      %v615 = vunpack.c.l.b16 %v227
      %v616 = vunpack.c.l.b16 %v228
      %v617 = vunpack.c.l.b16 %v229
      %v618 = vunpack.c.l.b16 %v230
      %v619 = vunpack.c.l.b16 %v231
      %v620 = vunpack.c.l.b16 %v232
      %v621 = vunpack.c.l.b16 %v233
      %v622 = vunpack.c.l.b16 %v234
      %v623 = vunpack.c.l.b16 %v235
      %v624 = vunpack.c.l.b16 %v236
      %v625 = vunpack.c.l.b16 %v237
      %v626 = vpack.c.b16 %v611, %v610
      %v627 = vpack.c.b16 %v613, %v612
      %v628 = vpack.c.b16 %v615, %v614
      %v629 = vpack.c.b16 %v617, %v616
      %v630 = vpack.c.b16 %v619, %v618
      %v631 = vpack.c.b16 %v621, %v620
      %v632 = vpack.c.b16 %v623, %v622
      %v633 = vpack.c.b16 %v625, %v624
      %v635 = vsel %vm468, %v626, 0
      %v638 = vsel %vm468, %v627, 0
      %v641 = vsel %vm468, %v628, 0
      %v644 = vsel %vm468, %v629, 0
      %v647 = vsel %vm468, %v630, 0
      %v650 = vsel %vm468, %v631, 0
      %v653 = vsel %vm468, %v632, 0
      %v656 = vsel %vm468, %v633, 0
      %v659 = vsel %vm493, %v238, 0
      %661 = vmatprep.subr.bf16.mxu0 0
      %662 = vmatpush1.bf16.msra.mxu0 %v659
      %663 = vmatprep.subr.bf16.mxu0 0
      %664 = vmatpush1.bf16.msra.mxu0 0
      %665 = vmatprep.subr.bf16.mxu0 0
      %666 = vmatpush1.bf16.msra.mxu0 0
      %667 = vmatprep.subr.bf16.mxu0 0
      %668 = vmatpush1.bf16.msra.mxu0 0
      %669 = vmatprep.subr.bf16.mxu0 0
      %670 = vmatpush1.bf16.msra.mxu0 0
      %671 = vmatprep.subr.bf16.mxu0 0
      %672 = vmatpush1.bf16.msra.mxu0 0
      %673 = vmatprep.subr.bf16.mxu0 0
      %674 = vmatpush1.bf16.msra.mxu0 0
      %675 = vmatprep.subr.bf16.mxu0 0
      %676 = vmatpush1.bf16.msra.mxu0 0
      %677 = vmatprep.subr.bf16.mxu0 0
      %678 = vmatpush1.bf16.msra.mxu0 0
      %679 = vmatprep.subr.bf16.mxu0 0
      %680 = vmatpush1.bf16.msra.mxu0 0
      %681 = vmatprep.subr.bf16.mxu0 0
      %682 = vmatpush1.bf16.msra.mxu0 0
      %683 = vmatprep.subr.bf16.mxu0 0
      %684 = vmatpush1.bf16.msra.mxu0 0
      %685 = vmatprep.subr.bf16.mxu0 0
      %686 = vmatpush1.bf16.msra.mxu0 0
      %687 = vmatprep.subr.bf16.mxu0 0
      %688 = vmatpush1.bf16.msra.mxu0 0
      %689 = vmatprep.subr.bf16.mxu0 0
      %690 = vmatpush1.bf16.msra.mxu0 0
      %691 = vmatprep.subr.bf16.mxu0 0
      %692 = vmatpush1.bf16.msra.mxu0 0
      %693 = vmatprep.mubr.bf16.mxu0 0
      %694 = vmatmul.mubr.bf16.gmra.mrb[0].mxu0 %v635
      %v695 = vpop.f32.mrb[0].mxu0
      %v696 = vadd.f32 %v532, %v695
      %v697 = vpop.f32.mrb[0].mxu0
      %v698 = vpop.f32.mrb[0].mxu0
      %v699 = vadd.f32 %v535, %v698
      %v700 = vpop.f32.mrb[0].mxu0
      %701 = vmatprep.mubr.bf16.mxu0 0
      %702 = vmatmul.mubr.bf16.gmra.mrb[0].mxu0 %v638
      %v703 = vpop.f32.mrb[0].mxu0
      %v704 = vadd.f32 %v540, %v703
      %v705 = vpop.f32.mrb[0].mxu0
      %v706 = vpop.f32.mrb[0].mxu0
      %v707 = vadd.f32 %v543, %v706
      %v708 = vpop.f32.mrb[0].mxu0
      %709 = vmatprep.mubr.bf16.mxu0 0
      %710 = vmatmul.mubr.bf16.gmra.mrb[0].mxu0 %v641
      %v711 = vpop.f32.mrb[0].mxu0
      %v712 = vadd.f32 %v548, %v711
      %v713 = vpop.f32.mrb[0].mxu0
      %v714 = vpop.f32.mrb[0].mxu0
      %v715 = vadd.f32 %v551, %v714
      %v716 = vpop.f32.mrb[0].mxu0
      %717 = vmatprep.mubr.bf16.mxu0 0
      %718 = vmatmul.mubr.bf16.gmra.mrb[0].mxu0 %v644
      %v719 = vpop.f32.mrb[0].mxu0
      %v720 = vadd.f32 %v556, %v719
      %v721 = vpop.f32.mrb[0].mxu0
      %v722 = vpop.f32.mrb[0].mxu0
      %v723 = vadd.f32 %v559, %v722
      %v724 = vpop.f32.mrb[0].mxu0
      %725 = vmatprep.mubr.bf16.mxu0 0
      %726 = vmatmul.mubr.bf16.gmra.mrb[0].mxu0 %v647
      %v727 = vpop.f32.mrb[0].mxu0
      %v728 = vadd.f32 %v564, %v727
      %v729 = vpop.f32.mrb[0].mxu0
      %v730 = vpop.f32.mrb[0].mxu0
      %v731 = vadd.f32 %v567, %v730
      %v732 = vpop.f32.mrb[0].mxu0
      %733 = vmatprep.mubr.bf16.mxu0 0
      %734 = vmatmul.mubr.bf16.gmra.mrb[0].mxu0 %v650
      %v735 = vpop.f32.mrb[0].mxu0
      %v736 = vadd.f32 %v572, %v735
      %v737 = vpop.f32.mrb[0].mxu0
      %v738 = vpop.f32.mrb[0].mxu0
      %v739 = vadd.f32 %v575, %v738
      %v740 = vpop.f32.mrb[0].mxu0
      %741 = vmatprep.mubr.bf16.mxu0 0
      %742 = vmatmul.mubr.bf16.gmra.mrb[0].mxu0 %v653
      %v743 = vpop.f32.mrb[0].mxu0
      %v744 = vadd.f32 %v580, %v743
      %v745 = vpop.f32.mrb[0].mxu0
      %v746 = vpop.f32.mrb[0].mxu0
      %v747 = vadd.f32 %v583, %v746
      %v748 = vpop.f32.mrb[0].mxu0
      %749 = vmatprep.mubr.bf16.mxu0 0
      %750 = vmatmul.mubr.bf16.gmra.mrb[0].mxu0 %v656
      %v751 = vpop.f32.mrb[0].mxu0
      %v752 = vadd.f32 %v588, %v751
      %v753 = vpop.f32.mrb[0].mxu0
      %v754 = vpop.f32.mrb[0].mxu0
      %v755 = vadd.f32 %v591, %v754
      %v756 = vpop.f32.mrb[0].mxu0
      %757 = vdwg.mxu0
      %v758 = vld [vmem:[%s221] sm:$0xe]
      %v759 = vld [vmem:[%s221 + $0xc] sm:$0xe]
      %v760 = vld [vmem:[%s221 + $0x18] sm:$0xe]
      %v761 = vld [vmem:[%s221 + $0x24] sm:$0xe]
      %v762 = vld [vmem:[%s221 + $0x30] sm:$0xe]
      %v763 = vld [vmem:[%s221 + $0x3c] sm:$0xe]
      %v764 = vld [vmem:[%s221 + $0x48] sm:$0xe]
      %v765 = vld [vmem:[%s221 + $0x54] sm:$0xe]
      %vm782 = vcmask 1042432
      %vm783 = vcmask 1046532
      %vm784 = vmor %vm782, %vm783
      %v785 = vrot.slane %v758, 5
      %v786 = vrot.slane %v785, 4
      %v787 = vrot.slane %v223, 5
      %v788 = vsel %vm784, %v786, %v787
      %v789 = vrot.slane %v787, 4
      %v790 = vrot.slane %v239, 5
      %v791 = vsel %vm784, %v789, %v790
      %v792 = vrot.slane %v759, 5
      %v793 = vrot.slane %v792, 4
      %v794 = vrot.slane %v225, 5
      %v795 = vsel %vm784, %v793, %v794
      %v796 = vrot.slane %v794, 4
      %v797 = vrot.slane %v240, 5
      %v798 = vsel %vm784, %v796, %v797
      %v799 = vrot.slane %v760, 5
      %v800 = vrot.slane %v799, 4
      %v801 = vrot.slane %v227, 5
      %v802 = vsel %vm784, %v800, %v801
      %v803 = vrot.slane %v801, 4
      %v804 = vrot.slane %v241, 5
      %v805 = vsel %vm784, %v803, %v804
      %v806 = vrot.slane %v761, 5
      %v807 = vrot.slane %v806, 4
      %v808 = vrot.slane %v229, 5
      %v809 = vsel %vm784, %v807, %v808
      %v810 = vrot.slane %v808, 4
      %v811 = vrot.slane %v242, 5
      %v812 = vsel %vm784, %v810, %v811
      %v813 = vrot.slane %v762, 5
      %v814 = vrot.slane %v813, 4
      %v815 = vrot.slane %v231, 5
      %v816 = vsel %vm784, %v814, %v815
      %v817 = vrot.slane %v815, 4
      %v818 = vrot.slane %v243, 5
      %v819 = vsel %vm784, %v817, %v818
      %v820 = vrot.slane %v763, 5
      %v821 = vrot.slane %v820, 4
      %v822 = vrot.slane %v233, 5
      %v823 = vsel %vm784, %v821, %v822
      %v824 = vrot.slane %v822, 4
      %v825 = vrot.slane %v244, 5
      %v826 = vsel %vm784, %v824, %v825
      %v827 = vrot.slane %v764, 5
      %v828 = vrot.slane %v827, 4
      %v829 = vrot.slane %v235, 5
      %v830 = vsel %vm784, %v828, %v829
      %v831 = vrot.slane %v829, 4
      %v832 = vrot.slane %v245, 5
      %v833 = vsel %vm784, %v831, %v832
      %v834 = vrot.slane %v765, 5
      %v835 = vrot.slane %v834, 4
      %v836 = vrot.slane %v237, 5
      %v837 = vsel %vm784, %v835, %v836
      %v838 = vrot.slane %v836, 4
      %v839 = vrot.slane %v246, 5
      %v840 = vsel %vm784, %v838, %v839
      %s841 = scalar_lea.vmem %s1, 4
      %v842 = vld [vmem:[%s841] sm:$0x3]
      %v843 = vunpack.c.l.b16 %v788
      %v844 = vunpack.c.l.b16 %v791
      %v845 = vunpack.c.l.b16 %v795
      %v846 = vunpack.c.l.b16 %v798
      %v847 = vunpack.c.l.b16 %v802
      %v848 = vunpack.c.l.b16 %v805
      %v849 = vunpack.c.l.b16 %v809
      %v850 = vunpack.c.l.b16 %v812
      %v851 = vunpack.c.l.b16 %v816
      %v852 = vunpack.c.l.b16 %v819
      %v853 = vunpack.c.l.b16 %v823
      %v854 = vunpack.c.l.b16 %v826
      %v855 = vunpack.c.l.b16 %v830
      %v856 = vunpack.c.l.b16 %v833
      %v857 = vunpack.c.l.b16 %v837
      %v858 = vunpack.c.l.b16 %v840
      %v859 = vpack.c.b16 %v844, %v843
      %v860 = vpack.c.b16 %v846, %v845
      %v861 = vpack.c.b16 %v848, %v847
      %v862 = vpack.c.b16 %v850, %v849
      %v863 = vpack.c.b16 %v852, %v851
      %v864 = vpack.c.b16 %v854, %v853
      %v865 = vpack.c.b16 %v856, %v855
      %v866 = vpack.c.b16 %v858, %v857
      %v868 = vsel %vm468, %v859, 0
      %v871 = vsel %vm468, %v860, 0
      %v874 = vsel %vm468, %v861, 0
      %v877 = vsel %vm468, %v862, 0
      %v880 = vsel %vm468, %v863, 0
      %v883 = vsel %vm468, %v864, 0
      %v886 = vsel %vm468, %v865, 0
      %v889 = vsel %vm468, %v866, 0
      %v892 = vsel %vm493, %v842, 0
      %894 = vmatprep.subr.bf16.mxu0 0
      %895 = vmatpush1.bf16.msra.mxu0 %v892
      %896 = vmatprep.subr.bf16.mxu0 0
      %897 = vmatpush1.bf16.msra.mxu0 0
      %898 = vmatprep.subr.bf16.mxu0 0
      %899 = vmatpush1.bf16.msra.mxu0 0
      %900 = vmatprep.subr.bf16.mxu0 0
      %901 = vmatpush1.bf16.msra.mxu0 0
      %902 = vmatprep.subr.bf16.mxu0 0
      %903 = vmatpush1.bf16.msra.mxu0 0
      %904 = vmatprep.subr.bf16.mxu0 0
      %905 = vmatpush1.bf16.msra.mxu0 0
      %906 = vmatprep.subr.bf16.mxu0 0
      %907 = vmatpush1.bf16.msra.mxu0 0
      %908 = vmatprep.subr.bf16.mxu0 0
      %909 = vmatpush1.bf16.msra.mxu0 0
      %910 = vmatprep.subr.bf16.mxu0 0
      %911 = vmatpush1.bf16.msra.mxu0 0
      %912 = vmatprep.subr.bf16.mxu0 0
      %913 = vmatpush1.bf16.msra.mxu0 0
      %914 = vmatprep.subr.bf16.mxu0 0
      %915 = vmatpush1.bf16.msra.mxu0 0
      %916 = vmatprep.subr.bf16.mxu0 0
      %917 = vmatpush1.bf16.msra.mxu0 0
      %918 = vmatprep.subr.bf16.mxu0 0
      %919 = vmatpush1.bf16.msra.mxu0 0
      %920 = vmatprep.subr.bf16.mxu0 0
      %921 = vmatpush1.bf16.msra.mxu0 0
      %922 = vmatprep.subr.bf16.mxu0 0
      %923 = vmatpush1.bf16.msra.mxu0 0
      %924 = vmatprep.subr.bf16.mxu0 0
      %925 = vmatpush1.bf16.msra.mxu0 0
      %926 = vmatprep.mubr.bf16.mxu0 0
      %927 = vmatmul.mubr.bf16.gmra.mrb[0].mxu0 %v868
      %v928 = vpop.f32.mrb[0].mxu0
      %v929 = vadd.f32 0.0, %v928
      %v930 = vpop.f32.mrb[0].mxu0
      %v931 = vpop.f32.mrb[0].mxu0
      %v932 = vadd.f32 0.0, %v931
      %v933 = vpop.f32.mrb[0].mxu0
      %934 = vmatprep.mubr.bf16.mxu0 0
      %935 = vmatmul.mubr.bf16.gmra.mrb[0].mxu0 %v871
      %v936 = vpop.f32.mrb[0].mxu0
      %v937 = vadd.f32 0.0, %v936
      %v938 = vpop.f32.mrb[0].mxu0
      %v939 = vpop.f32.mrb[0].mxu0
      %v940 = vadd.f32 0.0, %v939
      %v941 = vpop.f32.mrb[0].mxu0
      %942 = vmatprep.mubr.bf16.mxu0 0
      %943 = vmatmul.mubr.bf16.gmra.mrb[0].mxu0 %v874
      %v944 = vpop.f32.mrb[0].mxu0
      %v945 = vadd.f32 0.0, %v944
      %v946 = vpop.f32.mrb[0].mxu0
      %v947 = vpop.f32.mrb[0].mxu0
      %v948 = vadd.f32 0.0, %v947
      %v949 = vpop.f32.mrb[0].mxu0
      %950 = vmatprep.mubr.bf16.mxu0 0
      %951 = vmatmul.mubr.bf16.gmra.mrb[0].mxu0 %v877
      %v952 = vpop.f32.mrb[0].mxu0
      %v953 = vadd.f32 0.0, %v952
      %v954 = vpop.f32.mrb[0].mxu0
      %v955 = vpop.f32.mrb[0].mxu0
      %v956 = vadd.f32 0.0, %v955
      %v957 = vpop.f32.mrb[0].mxu0
      %958 = vmatprep.mubr.bf16.mxu0 0
      %959 = vmatmul.mubr.bf16.gmra.mrb[0].mxu0 %v880
      %v960 = vpop.f32.mrb[0].mxu0
      %v961 = vadd.f32 0.0, %v960
      %v962 = vpop.f32.mrb[0].mxu0
      %v963 = vpop.f32.mrb[0].mxu0
      %v964 = vadd.f32 0.0, %v963
      %v965 = vpop.f32.mrb[0].mxu0
      %966 = vmatprep.mubr.bf16.mxu0 0
      %967 = vmatmul.mubr.bf16.gmra.mrb[0].mxu0 %v883
      %v968 = vpop.f32.mrb[0].mxu0
      %v969 = vadd.f32 0.0, %v968
      %v970 = vpop.f32.mrb[0].mxu0
      %v971 = vpop.f32.mrb[0].mxu0
      %v972 = vadd.f32 0.0, %v971
      %v973 = vpop.f32.mrb[0].mxu0
      %974 = vmatprep.mubr.bf16.mxu0 0
      %975 = vmatmul.mubr.bf16.gmra.mrb[0].mxu0 %v886
      %v976 = vpop.f32.mrb[0].mxu0
      %v977 = vadd.f32 0.0, %v976
      %v978 = vpop.f32.mrb[0].mxu0
      %v979 = vpop.f32.mrb[0].mxu0
      %v980 = vadd.f32 0.0, %v979
      %v981 = vpop.f32.mrb[0].mxu0
      %982 = vmatprep.mubr.bf16.mxu0 0
      %983 = vmatmul.mubr.bf16.gmra.mrb[0].mxu0 %v889
      %v984 = vpop.f32.mrb[0].mxu0
      %v985 = vadd.f32 0.0, %v984
      %v986 = vpop.f32.mrb[0].mxu0
      %v987 = vpop.f32.mrb[0].mxu0
      %v988 = vadd.f32 0.0, %v987
      %v989 = vpop.f32.mrb[0].mxu0
      %990 = vdwg.mxu0
      %v991 = vadd.f32 %v696, %v929
      %v992 = vadd.f32 %v699, %v932
      %v993 = vadd.f32 %v704, %v937
      %v994 = vadd.f32 %v707, %v940
      %v995 = vadd.f32 %v712, %v945
      %v996 = vadd.f32 %v715, %v948
      %v997 = vadd.f32 %v720, %v953
      %v998 = vadd.f32 %v723, %v956
      %v999 = vadd.f32 %v728, %v961
      %v1000 = vadd.f32 %v731, %v964
      %v1001 = vadd.f32 %v736, %v969
      %v1002 = vadd.f32 %v739, %v972
      %v1003 = vadd.f32 %v744, %v977
      %v1004 = vadd.f32 %v747, %v980
      %v1005 = vadd.f32 %v752, %v985
      %v1006 = vadd.f32 %v755, %v988
      %s1007 = sadd.s32 %s218, 1
      %s1008 = smul.u32 %s1007, 3
      %s1009 = smul.addr %s1008, 4
      %s1010 = scalar_lea.vmem %s197, %s1009
      %v1011 = vld [vmem:[%s1010] sm:$0xf]
      %v1012 = vld [vmem:[%s1010 + $0x4] sm:$0xf]
      %v1013 = vld [vmem:[%s1010 + $0xc] sm:$0xf]
      %v1014 = vld [vmem:[%s1010 + $0x10] sm:$0xf]
      %v1015 = vld [vmem:[%s1010 + $0x18] sm:$0xf]
      %v1016 = vld [vmem:[%s1010 + $0x1c] sm:$0xf]
      %v1017 = vld [vmem:[%s1010 + $0x24] sm:$0xf]
      %v1018 = vld [vmem:[%s1010 + $0x28] sm:$0xf]
      %v1019 = vld [vmem:[%s1010 + $0x30] sm:$0xf]
      %v1020 = vld [vmem:[%s1010 + $0x34] sm:$0xf]
      %v1021 = vld [vmem:[%s1010 + $0x3c] sm:$0xf]
      %v1022 = vld [vmem:[%s1010 + $0x40] sm:$0xf]
      %v1023 = vld [vmem:[%s1010 + $0x48] sm:$0xf]
      %v1024 = vld [vmem:[%s1010 + $0x4c] sm:$0xf]
      %v1025 = vld [vmem:[%s1010 + $0x54] sm:$0xf]
      %v1026 = vld [vmem:[%s1010 + $0x58] sm:$0xf]
      %s1027 = scalar_lea.vmem %s1, 6
      %v1028 = vld [vmem:[%s1027] sm:$0x3]
      %v1045 = vunpack.c.l.b16 %v1011
      %v1046 = vunpack.c.l.b16 %v1012
      %v1047 = vunpack.c.l.b16 %v1013
      %v1048 = vunpack.c.l.b16 %v1014
      %v1049 = vunpack.c.l.b16 %v1015
      %v1050 = vunpack.c.l.b16 %v1016
      %v1051 = vunpack.c.l.b16 %v1017
      %v1052 = vunpack.c.l.b16 %v1018
      %v1053 = vunpack.c.l.b16 %v1019
      %v1054 = vunpack.c.l.b16 %v1020
      %v1055 = vunpack.c.l.b16 %v1021
      %v1056 = vunpack.c.l.b16 %v1022
      %v1057 = vunpack.c.l.b16 %v1023
      %v1058 = vunpack.c.l.b16 %v1024
      %v1059 = vunpack.c.l.b16 %v1025
      %v1060 = vunpack.c.l.b16 %v1026
      %v1061 = vpack.c.b16 %v1046, %v1045
      %v1062 = vpack.c.b16 %v1048, %v1047
      %v1063 = vpack.c.b16 %v1050, %v1049
      %v1064 = vpack.c.b16 %v1052, %v1051
      %v1065 = vpack.c.b16 %v1054, %v1053
      %v1066 = vpack.c.b16 %v1056, %v1055
      %v1067 = vpack.c.b16 %v1058, %v1057
      %v1068 = vpack.c.b16 %v1060, %v1059
      %v1070 = vsel %vm468, %v1061, 0
      %v1073 = vsel %vm468, %v1062, 0
      %v1076 = vsel %vm468, %v1063, 0
      %v1079 = vsel %vm468, %v1064, 0
      %v1082 = vsel %vm468, %v1065, 0
      %v1085 = vsel %vm468, %v1066, 0
      %v1088 = vsel %vm468, %v1067, 0
      %v1091 = vsel %vm468, %v1068, 0
      %v1094 = vsel %vm493, %v1028, 0
      %1096 = vmatprep.subr.bf16.mxu0 0
      %1097 = vmatpush1.bf16.msra.mxu0 %v1094
      %1098 = vmatprep.subr.bf16.mxu0 0
      %1099 = vmatpush1.bf16.msra.mxu0 0
      %1100 = vmatprep.subr.bf16.mxu0 0
      %1101 = vmatpush1.bf16.msra.mxu0 0
      %1102 = vmatprep.subr.bf16.mxu0 0
      %1103 = vmatpush1.bf16.msra.mxu0 0
      %1104 = vmatprep.subr.bf16.mxu0 0
      %1105 = vmatpush1.bf16.msra.mxu0 0
      %1106 = vmatprep.subr.bf16.mxu0 0
      %1107 = vmatpush1.bf16.msra.mxu0 0
      %1108 = vmatprep.subr.bf16.mxu0 0
      %1109 = vmatpush1.bf16.msra.mxu0 0
      %1110 = vmatprep.subr.bf16.mxu0 0
      %1111 = vmatpush1.bf16.msra.mxu0 0
      %1112 = vmatprep.subr.bf16.mxu0 0
      %1113 = vmatpush1.bf16.msra.mxu0 0
      %1114 = vmatprep.subr.bf16.mxu0 0
      %1115 = vmatpush1.bf16.msra.mxu0 0
      %1116 = vmatprep.subr.bf16.mxu0 0
      %1117 = vmatpush1.bf16.msra.mxu0 0
      %1118 = vmatprep.subr.bf16.mxu0 0
      %1119 = vmatpush1.bf16.msra.mxu0 0
      %1120 = vmatprep.subr.bf16.mxu0 0
      %1121 = vmatpush1.bf16.msra.mxu0 0
      %1122 = vmatprep.subr.bf16.mxu0 0
      %1123 = vmatpush1.bf16.msra.mxu0 0
      %1124 = vmatprep.subr.bf16.mxu0 0
      %1125 = vmatpush1.bf16.msra.mxu0 0
      %1126 = vmatprep.subr.bf16.mxu0 0
      %1127 = vmatpush1.bf16.msra.mxu0 0
      %1128 = vmatprep.mubr.bf16.mxu0 0
      %1129 = vmatmul.mubr.bf16.gmra.mrb[0].mxu0 %v1070
      %v1130 = vpop.f32.mrb[0].mxu0
      %v1131 = vadd.f32 0.0, %v1130
      %v1132 = vpop.f32.mrb[0].mxu0
      %v1133 = vpop.f32.mrb[0].mxu0
      %v1134 = vadd.f32 0.0, %v1133
      %v1135 = vpop.f32.mrb[0].mxu0
      %1136 = vmatprep.mubr.bf16.mxu0 0
      %1137 = vmatmul.mubr.bf16.gmra.mrb[0].mxu0 %v1073
      %v1138 = vpop.f32.mrb[0].mxu0
      %v1139 = vadd.f32 0.0, %v1138
      %v1140 = vpop.f32.mrb[0].mxu0
      %v1141 = vpop.f32.mrb[0].mxu0
      %v1142 = vadd.f32 0.0, %v1141
      %v1143 = vpop.f32.mrb[0].mxu0
      %1144 = vmatprep.mubr.bf16.mxu0 0
      %1145 = vmatmul.mubr.bf16.gmra.mrb[0].mxu0 %v1076
      %v1146 = vpop.f32.mrb[0].mxu0
      %v1147 = vadd.f32 0.0, %v1146
      %v1148 = vpop.f32.mrb[0].mxu0
      %v1149 = vpop.f32.mrb[0].mxu0
      %v1150 = vadd.f32 0.0, %v1149
      %v1151 = vpop.f32.mrb[0].mxu0
      %1152 = vmatprep.mubr.bf16.mxu0 0
      %1153 = vmatmul.mubr.bf16.gmra.mrb[0].mxu0 %v1079
      %v1154 = vpop.f32.mrb[0].mxu0
      %v1155 = vadd.f32 0.0, %v1154
      %v1156 = vpop.f32.mrb[0].mxu0
      %v1157 = vpop.f32.mrb[0].mxu0
      %v1158 = vadd.f32 0.0, %v1157
      %v1159 = vpop.f32.mrb[0].mxu0
      %1160 = vmatprep.mubr.bf16.mxu0 0
      %1161 = vmatmul.mubr.bf16.gmra.mrb[0].mxu0 %v1082
      %v1162 = vpop.f32.mrb[0].mxu0
      %v1163 = vadd.f32 0.0, %v1162
      %v1164 = vpop.f32.mrb[0].mxu0
      %v1165 = vpop.f32.mrb[0].mxu0
      %v1166 = vadd.f32 0.0, %v1165
      %v1167 = vpop.f32.mrb[0].mxu0
      %1168 = vmatprep.mubr.bf16.mxu0 0
      %1169 = vmatmul.mubr.bf16.gmra.mrb[0].mxu0 %v1085
      %v1170 = vpop.f32.mrb[0].mxu0
      %v1171 = vadd.f32 0.0, %v1170
      %v1172 = vpop.f32.mrb[0].mxu0
      %v1173 = vpop.f32.mrb[0].mxu0
      %v1174 = vadd.f32 0.0, %v1173
      %v1175 = vpop.f32.mrb[0].mxu0
      %1176 = vmatprep.mubr.bf16.mxu0 0
      %1177 = vmatmul.mubr.bf16.gmra.mrb[0].mxu0 %v1088
      %v1178 = vpop.f32.mrb[0].mxu0
      %v1179 = vadd.f32 0.0, %v1178
      %v1180 = vpop.f32.mrb[0].mxu0
      %v1181 = vpop.f32.mrb[0].mxu0
      %v1182 = vadd.f32 0.0, %v1181
      %v1183 = vpop.f32.mrb[0].mxu0
      %1184 = vmatprep.mubr.bf16.mxu0 0
      %1185 = vmatmul.mubr.bf16.gmra.mrb[0].mxu0 %v1091
      %v1186 = vpop.f32.mrb[0].mxu0
      %v1187 = vadd.f32 0.0, %v1186
      %v1188 = vpop.f32.mrb[0].mxu0
      %v1189 = vpop.f32.mrb[0].mxu0
      %v1190 = vadd.f32 0.0, %v1189
      %v1191 = vpop.f32.mrb[0].mxu0
      %1192 = vdwg.mxu0
      %v1193 = vadd.f32 %v991, %v1131
      %v1194 = vadd.f32 %v992, %v1134
      %v1195 = vadd.f32 %v993, %v1139
      %v1196 = vadd.f32 %v994, %v1142
      %v1197 = vadd.f32 %v995, %v1147
      %v1198 = vadd.f32 %v996, %v1150
      %v1199 = vadd.f32 %v997, %v1155
      %v1200 = vadd.f32 %v998, %v1158
      %v1201 = vadd.f32 %v999, %v1163
      %v1202 = vadd.f32 %v1000, %v1166
      %v1203 = vadd.f32 %v1001, %v1171
      %v1204 = vadd.f32 %v1002, %v1174
      %v1205 = vadd.f32 %v1003, %v1179
      %v1206 = vadd.f32 %v1004, %v1182
      %v1207 = vadd.f32 %v1005, %v1187
      %v1208 = vadd.f32 %v1006, %v1190
      %v1209 = vld [vmem:[%s1010] sm:$0xf]
      %v1210 = vld [vmem:[%s1010 + $0x4] sm:$0xf]
      %v1211 = vld [vmem:[%s1010 + $0x8] sm:$0x1]
      %v1212 = vld [vmem:[%s1010 + $0xc] sm:$0xf]
      %v1213 = vld [vmem:[%s1010 + $0x10] sm:$0xf]
      %v1214 = vld [vmem:[%s1010 + $0x14] sm:$0x1]
      %v1215 = vld [vmem:[%s1010 + $0x18] sm:$0xf]
      %v1216 = vld [vmem:[%s1010 + $0x1c] sm:$0xf]
      %v1217 = vld [vmem:[%s1010 + $0x20] sm:$0x1]
      %v1218 = vld [vmem:[%s1010 + $0x24] sm:$0xf]
      %v1219 = vld [vmem:[%s1010 + $0x28] sm:$0xf]
      %v1220 = vld [vmem:[%s1010 + $0x2c] sm:$0x1]
      %v1221 = vld [vmem:[%s1010 + $0x30] sm:$0xf]
      %v1222 = vld [vmem:[%s1010 + $0x34] sm:$0xf]
      %v1223 = vld [vmem:[%s1010 + $0x38] sm:$0x1]
      %v1224 = vld [vmem:[%s1010 + $0x3c] sm:$0xf]
      %v1225 = vld [vmem:[%s1010 + $0x40] sm:$0xf]
      %v1226 = vld [vmem:[%s1010 + $0x44] sm:$0x1]
      %v1227 = vld [vmem:[%s1010 + $0x48] sm:$0xf]
      %v1228 = vld [vmem:[%s1010 + $0x4c] sm:$0xf]
      %v1229 = vld [vmem:[%s1010 + $0x50] sm:$0x1]
      %v1230 = vld [vmem:[%s1010 + $0x54] sm:$0xf]
      %v1231 = vld [vmem:[%s1010 + $0x58] sm:$0xf]
      %v1232 = vld [vmem:[%s1010 + $0x5c] sm:$0x1]
      %v1234 = vshrl.u32 %v1209, 16
      %v1236 = vrot.slane %v1234, 4
      %v1237 = vshll.u32 %v1209, 16
      %v1239 = vrot.slane %v1237, 5
      %v1240 = vor.u32 %v1236, %v1239
      %v1241 = vrot.slane %v1240, 4
      %v1243 = vshll.u32 %v1210, 16
      %v1245 = vrot.slane %v1243, 5
      %v1246 = vsel %vm249, %v1241, %v1245
      %v1247 = vshrl.u32 %v1210, 16
      %v1249 = vrot.slane %v1247, 4
      %v1250 = vor.u32 %v1249, %v1245
      %v1251 = vrot.slane %v1250, 4
      %v1253 = vshll.u32 %v1211, 16
      %v1255 = vrot.slane %v1253, 5
      %v1256 = vsel %vm249, %v1251, %v1255
      %v1258 = vshrl.u32 %v1212, 16
      %v1260 = vrot.slane %v1258, 4
      %v1261 = vshll.u32 %v1212, 16
      %v1263 = vrot.slane %v1261, 5
      %v1264 = vor.u32 %v1260, %v1263
      %v1265 = vrot.slane %v1264, 4
      %v1267 = vshll.u32 %v1213, 16
      %v1269 = vrot.slane %v1267, 5
      %v1270 = vsel %vm249, %v1265, %v1269
      %v1271 = vshrl.u32 %v1213, 16
      %v1273 = vrot.slane %v1271, 4
      %v1274 = vor.u32 %v1273, %v1269
      %v1275 = vrot.slane %v1274, 4
      %v1277 = vshll.u32 %v1214, 16
      %v1279 = vrot.slane %v1277, 5
      %v1280 = vsel %vm249, %v1275, %v1279
      %v1282 = vshrl.u32 %v1215, 16
      %v1284 = vrot.slane %v1282, 4
      %v1285 = vshll.u32 %v1215, 16
      %v1287 = vrot.slane %v1285, 5
      %v1288 = vor.u32 %v1284, %v1287
      %v1289 = vrot.slane %v1288, 4
      %v1291 = vshll.u32 %v1216, 16
      %v1293 = vrot.slane %v1291, 5
      %v1294 = vsel %vm249, %v1289, %v1293
      %v1295 = vshrl.u32 %v1216, 16
      %v1297 = vrot.slane %v1295, 4
      %v1298 = vor.u32 %v1297, %v1293
      %v1299 = vrot.slane %v1298, 4
      %v1301 = vshll.u32 %v1217, 16
      %v1303 = vrot.slane %v1301, 5
      %v1304 = vsel %vm249, %v1299, %v1303
      %v1306 = vshrl.u32 %v1218, 16
      %v1308 = vrot.slane %v1306, 4
      %v1309 = vshll.u32 %v1218, 16
      %v1311 = vrot.slane %v1309, 5
      %v1312 = vor.u32 %v1308, %v1311
      %v1313 = vrot.slane %v1312, 4
      %v1315 = vshll.u32 %v1219, 16
      %v1317 = vrot.slane %v1315, 5
      %v1318 = vsel %vm249, %v1313, %v1317
      %v1319 = vshrl.u32 %v1219, 16
      %v1321 = vrot.slane %v1319, 4
      %v1322 = vor.u32 %v1321, %v1317
      %v1323 = vrot.slane %v1322, 4
      %v1325 = vshll.u32 %v1220, 16
      %v1327 = vrot.slane %v1325, 5
      %v1328 = vsel %vm249, %v1323, %v1327
      %v1330 = vshrl.u32 %v1221, 16
      %v1332 = vrot.slane %v1330, 4
      %v1333 = vshll.u32 %v1221, 16
      %v1335 = vrot.slane %v1333, 5
      %v1336 = vor.u32 %v1332, %v1335
      %v1337 = vrot.slane %v1336, 4
      %v1339 = vshll.u32 %v1222, 16
      %v1341 = vrot.slane %v1339, 5
      %v1342 = vsel %vm249, %v1337, %v1341
      %v1343 = vshrl.u32 %v1222, 16
      %v1345 = vrot.slane %v1343, 4
      %v1346 = vor.u32 %v1345, %v1341
      %v1347 = vrot.slane %v1346, 4
      %v1349 = vshll.u32 %v1223, 16
      %v1351 = vrot.slane %v1349, 5
      %v1352 = vsel %vm249, %v1347, %v1351
      %v1354 = vshrl.u32 %v1224, 16
      %v1356 = vrot.slane %v1354, 4
      %v1357 = vshll.u32 %v1224, 16
      %v1359 = vrot.slane %v1357, 5
      %v1360 = vor.u32 %v1356, %v1359
      %v1361 = vrot.slane %v1360, 4
      %v1363 = vshll.u32 %v1225, 16
      %v1365 = vrot.slane %v1363, 5
      %v1366 = vsel %vm249, %v1361, %v1365
      %v1367 = vshrl.u32 %v1225, 16
      %v1369 = vrot.slane %v1367, 4
      %v1370 = vor.u32 %v1369, %v1365
      %v1371 = vrot.slane %v1370, 4
      %v1373 = vshll.u32 %v1226, 16
      %v1375 = vrot.slane %v1373, 5
      %v1376 = vsel %vm249, %v1371, %v1375
      %v1378 = vshrl.u32 %v1227, 16
      %v1380 = vrot.slane %v1378, 4
      %v1381 = vshll.u32 %v1227, 16
      %v1383 = vrot.slane %v1381, 5
      %v1384 = vor.u32 %v1380, %v1383
      %v1385 = vrot.slane %v1384, 4
      %v1387 = vshll.u32 %v1228, 16
      %v1389 = vrot.slane %v1387, 5
      %v1390 = vsel %vm249, %v1385, %v1389
      %v1391 = vshrl.u32 %v1228, 16
      %v1393 = vrot.slane %v1391, 4
      %v1394 = vor.u32 %v1393, %v1389
      %v1395 = vrot.slane %v1394, 4
      %v1397 = vshll.u32 %v1229, 16
      %v1399 = vrot.slane %v1397, 5
      %v1400 = vsel %vm249, %v1395, %v1399
      %v1402 = vshrl.u32 %v1230, 16
      %v1404 = vrot.slane %v1402, 4
      %v1405 = vshll.u32 %v1230, 16
      %v1407 = vrot.slane %v1405, 5
      %v1408 = vor.u32 %v1404, %v1407
      %v1409 = vrot.slane %v1408, 4
      %v1411 = vshll.u32 %v1231, 16
      %v1413 = vrot.slane %v1411, 5
      %v1414 = vsel %vm249, %v1409, %v1413
      %v1415 = vshrl.u32 %v1231, 16
      %v1417 = vrot.slane %v1415, 4
      %v1418 = vor.u32 %v1417, %v1413
      %v1419 = vrot.slane %v1418, 4
      %v1421 = vshll.u32 %v1232, 16
      %v1423 = vrot.slane %v1421, 5
      %v1424 = vsel %vm249, %v1419, %v1423
      %s1425 = scalar_lea.vmem %s1, 8
      %v1426 = vld [vmem:[%s1425] sm:$0x3]
      %v1427 = vunpack.c.l.b16 %v1246
      %v1428 = vunpack.c.l.b16 %v1256
      %v1429 = vunpack.c.l.b16 %v1270
      %v1430 = vunpack.c.l.b16 %v1280
      %v1431 = vunpack.c.l.b16 %v1294
      %v1432 = vunpack.c.l.b16 %v1304
      %v1433 = vunpack.c.l.b16 %v1318
      %v1434 = vunpack.c.l.b16 %v1328
      %v1435 = vunpack.c.l.b16 %v1342
      %v1436 = vunpack.c.l.b16 %v1352
      %v1437 = vunpack.c.l.b16 %v1366
      %v1438 = vunpack.c.l.b16 %v1376
      %v1439 = vunpack.c.l.b16 %v1390
      %v1440 = vunpack.c.l.b16 %v1400
      %v1441 = vunpack.c.l.b16 %v1414
      %v1442 = vunpack.c.l.b16 %v1424
      %v1443 = vpack.c.b16 %v1428, %v1427
      %v1444 = vpack.c.b16 %v1430, %v1429
      %v1445 = vpack.c.b16 %v1432, %v1431
      %v1446 = vpack.c.b16 %v1434, %v1433
      %v1447 = vpack.c.b16 %v1436, %v1435
      %v1448 = vpack.c.b16 %v1438, %v1437
      %v1449 = vpack.c.b16 %v1440, %v1439
      %v1450 = vpack.c.b16 %v1442, %v1441
      %v1452 = vsel %vm468, %v1443, 0
      %v1455 = vsel %vm468, %v1444, 0
      %v1458 = vsel %vm468, %v1445, 0
      %v1461 = vsel %vm468, %v1446, 0
      %v1464 = vsel %vm468, %v1447, 0
      %v1467 = vsel %vm468, %v1448, 0
      %v1470 = vsel %vm468, %v1449, 0
      %v1473 = vsel %vm468, %v1450, 0
      %v1476 = vsel %vm493, %v1426, 0
      %1478 = vmatprep.subr.bf16.mxu0 0
      %1479 = vmatpush1.bf16.msra.mxu0 %v1476
      %1480 = vmatprep.subr.bf16.mxu0 0
      %1481 = vmatpush1.bf16.msra.mxu0 0
      %1482 = vmatprep.subr.bf16.mxu0 0
      %1483 = vmatpush1.bf16.msra.mxu0 0
      %1484 = vmatprep.subr.bf16.mxu0 0
      %1485 = vmatpush1.bf16.msra.mxu0 0
      %1486 = vmatprep.subr.bf16.mxu0 0
      %1487 = vmatpush1.bf16.msra.mxu0 0
      %1488 = vmatprep.subr.bf16.mxu0 0
      %1489 = vmatpush1.bf16.msra.mxu0 0
      %1490 = vmatprep.subr.bf16.mxu0 0
      %1491 = vmatpush1.bf16.msra.mxu0 0
      %1492 = vmatprep.subr.bf16.mxu0 0
      %1493 = vmatpush1.bf16.msra.mxu0 0
      %1494 = vmatprep.subr.bf16.mxu0 0
      %1495 = vmatpush1.bf16.msra.mxu0 0
      %1496 = vmatprep.subr.bf16.mxu0 0
      %1497 = vmatpush1.bf16.msra.mxu0 0
      %1498 = vmatprep.subr.bf16.mxu0 0
      %1499 = vmatpush1.bf16.msra.mxu0 0
      %1500 = vmatprep.subr.bf16.mxu0 0
      %1501 = vmatpush1.bf16.msra.mxu0 0
      %1502 = vmatprep.subr.bf16.mxu0 0
      %1503 = vmatpush1.bf16.msra.mxu0 0
      %1504 = vmatprep.subr.bf16.mxu0 0
      %1505 = vmatpush1.bf16.msra.mxu0 0
      %1506 = vmatprep.subr.bf16.mxu0 0
      %1507 = vmatpush1.bf16.msra.mxu0 0
      %1508 = vmatprep.subr.bf16.mxu0 0
      %1509 = vmatpush1.bf16.msra.mxu0 0
      %1510 = vmatprep.mubr.bf16.mxu0 0
      %1511 = vmatmul.mubr.bf16.gmra.mrb[0].mxu0 %v1452
      %v1512 = vpop.f32.mrb[0].mxu0
      %v1513 = vadd.f32 0.0, %v1512
      %v1514 = vpop.f32.mrb[0].mxu0
      %v1515 = vpop.f32.mrb[0].mxu0
      %v1516 = vadd.f32 0.0, %v1515
      %v1517 = vpop.f32.mrb[0].mxu0
      %1518 = vmatprep.mubr.bf16.mxu0 0
      %1519 = vmatmul.mubr.bf16.gmra.mrb[0].mxu0 %v1455
      %v1520 = vpop.f32.mrb[0].mxu0
      %v1521 = vadd.f32 0.0, %v1520
      %v1522 = vpop.f32.mrb[0].mxu0
      %v1523 = vpop.f32.mrb[0].mxu0
      %v1524 = vadd.f32 0.0, %v1523
      %v1525 = vpop.f32.mrb[0].mxu0
      %1526 = vmatprep.mubr.bf16.mxu0 0
      %1527 = vmatmul.mubr.bf16.gmra.mrb[0].mxu0 %v1458
      %v1528 = vpop.f32.mrb[0].mxu0
      %v1529 = vadd.f32 0.0, %v1528
      %v1530 = vpop.f32.mrb[0].mxu0
      %v1531 = vpop.f32.mrb[0].mxu0
      %v1532 = vadd.f32 0.0, %v1531
      %v1533 = vpop.f32.mrb[0].mxu0
      %1534 = vmatprep.mubr.bf16.mxu0 0
      %1535 = vmatmul.mubr.bf16.gmra.mrb[0].mxu0 %v1461
      %v1536 = vpop.f32.mrb[0].mxu0
      %v1537 = vadd.f32 0.0, %v1536
      %v1538 = vpop.f32.mrb[0].mxu0
      %v1539 = vpop.f32.mrb[0].mxu0
      %v1540 = vadd.f32 0.0, %v1539
      %v1541 = vpop.f32.mrb[0].mxu0
      %1542 = vmatprep.mubr.bf16.mxu0 0
      %1543 = vmatmul.mubr.bf16.gmra.mrb[0].mxu0 %v1464
      %v1544 = vpop.f32.mrb[0].mxu0
      %v1545 = vadd.f32 0.0, %v1544
      %v1546 = vpop.f32.mrb[0].mxu0
      %v1547 = vpop.f32.mrb[0].mxu0
      %v1548 = vadd.f32 0.0, %v1547
      %v1549 = vpop.f32.mrb[0].mxu0
      %1550 = vmatprep.mubr.bf16.mxu0 0
      %1551 = vmatmul.mubr.bf16.gmra.mrb[0].mxu0 %v1467
      %v1552 = vpop.f32.mrb[0].mxu0
      %v1553 = vadd.f32 0.0, %v1552
      %v1554 = vpop.f32.mrb[0].mxu0
      %v1555 = vpop.f32.mrb[0].mxu0
      %v1556 = vadd.f32 0.0, %v1555
      %v1557 = vpop.f32.mrb[0].mxu0
      %1558 = vmatprep.mubr.bf16.mxu0 0
      %1559 = vmatmul.mubr.bf16.gmra.mrb[0].mxu0 %v1470
      %v1560 = vpop.f32.mrb[0].mxu0
      %v1561 = vadd.f32 0.0, %v1560
      %v1562 = vpop.f32.mrb[0].mxu0
      %v1563 = vpop.f32.mrb[0].mxu0
      %v1564 = vadd.f32 0.0, %v1563
      %v1565 = vpop.f32.mrb[0].mxu0
      %1566 = vmatprep.mubr.bf16.mxu0 0
      %1567 = vmatmul.mubr.bf16.gmra.mrb[0].mxu0 %v1473
      %v1568 = vpop.f32.mrb[0].mxu0
      %v1569 = vadd.f32 0.0, %v1568
      %v1570 = vpop.f32.mrb[0].mxu0
      %v1571 = vpop.f32.mrb[0].mxu0
      %v1572 = vadd.f32 0.0, %v1571
      %v1573 = vpop.f32.mrb[0].mxu0
      %1574 = vdwg.mxu0
      %v1575 = vadd.f32 %v1193, %v1513
      %v1576 = vadd.f32 %v1194, %v1516
      %v1577 = vadd.f32 %v1195, %v1521
      %v1578 = vadd.f32 %v1196, %v1524
      %v1579 = vadd.f32 %v1197, %v1529
      %v1580 = vadd.f32 %v1198, %v1532
      %v1581 = vadd.f32 %v1199, %v1537
      %v1582 = vadd.f32 %v1200, %v1540
      %v1583 = vadd.f32 %v1201, %v1545
      %v1584 = vadd.f32 %v1202, %v1548
      %v1585 = vadd.f32 %v1203, %v1553
      %v1586 = vadd.f32 %v1204, %v1556
      %v1587 = vadd.f32 %v1205, %v1561
      %v1588 = vadd.f32 %v1206, %v1564
      %v1589 = vadd.f32 %v1207, %v1569
      %v1590 = vadd.f32 %v1208, %v1572
      %v1591 = vld [vmem:[%s1010] sm:$0xe]
      %v1592 = vld [vmem:[%s1010 + $0xc] sm:$0xe]
      %v1593 = vld [vmem:[%s1010 + $0x18] sm:$0xe]
      %v1594 = vld [vmem:[%s1010 + $0x24] sm:$0xe]
      %v1595 = vld [vmem:[%s1010 + $0x30] sm:$0xe]
      %v1596 = vld [vmem:[%s1010 + $0x3c] sm:$0xe]
      %v1597 = vld [vmem:[%s1010 + $0x48] sm:$0xe]
      %v1598 = vld [vmem:[%s1010 + $0x54] sm:$0xe]
      %v1623 = vrot.slane %v1591, 5
      %v1624 = vrot.slane %v1623, 4
      %v1625 = vrot.slane %v1210, 5
      %v1626 = vsel %vm784, %v1624, %v1625
      %v1627 = vrot.slane %v1625, 4
      %v1628 = vrot.slane %v1211, 5
      %v1629 = vsel %vm784, %v1627, %v1628
      %v1630 = vrot.slane %v1592, 5
      %v1631 = vrot.slane %v1630, 4
      %v1632 = vrot.slane %v1213, 5
      %v1633 = vsel %vm784, %v1631, %v1632
      %v1634 = vrot.slane %v1632, 4
      %v1635 = vrot.slane %v1214, 5
      %v1636 = vsel %vm784, %v1634, %v1635
      %v1637 = vrot.slane %v1593, 5
      %v1638 = vrot.slane %v1637, 4
      %v1639 = vrot.slane %v1216, 5
      %v1640 = vsel %vm784, %v1638, %v1639
      %v1641 = vrot.slane %v1639, 4
      %v1642 = vrot.slane %v1217, 5
      %v1643 = vsel %vm784, %v1641, %v1642
      %v1644 = vrot.slane %v1594, 5
      %v1645 = vrot.slane %v1644, 4
      %v1646 = vrot.slane %v1219, 5
      %v1647 = vsel %vm784, %v1645, %v1646
      %v1648 = vrot.slane %v1646, 4
      %v1649 = vrot.slane %v1220, 5
      %v1650 = vsel %vm784, %v1648, %v1649
      %v1651 = vrot.slane %v1595, 5
      %v1652 = vrot.slane %v1651, 4
      %v1653 = vrot.slane %v1222, 5
      %v1654 = vsel %vm784, %v1652, %v1653
      %v1655 = vrot.slane %v1653, 4
      %v1656 = vrot.slane %v1223, 5
      %v1657 = vsel %vm784, %v1655, %v1656
      %v1658 = vrot.slane %v1596, 5
      %v1659 = vrot.slane %v1658, 4
      %v1660 = vrot.slane %v1225, 5
      %v1661 = vsel %vm784, %v1659, %v1660
      %v1662 = vrot.slane %v1660, 4
      %v1663 = vrot.slane %v1226, 5
      %v1664 = vsel %vm784, %v1662, %v1663
      %v1665 = vrot.slane %v1597, 5
      %v1666 = vrot.slane %v1665, 4
      %v1667 = vrot.slane %v1228, 5
      %v1668 = vsel %vm784, %v1666, %v1667
      %v1669 = vrot.slane %v1667, 4
      %v1670 = vrot.slane %v1229, 5
      %v1671 = vsel %vm784, %v1669, %v1670
      %v1672 = vrot.slane %v1598, 5
      %v1673 = vrot.slane %v1672, 4
      %v1674 = vrot.slane %v1231, 5
      %v1675 = vsel %vm784, %v1673, %v1674
      %v1676 = vrot.slane %v1674, 4
      %v1677 = vrot.slane %v1232, 5
      %v1678 = vsel %vm784, %v1676, %v1677
      %s1679 = scalar_lea.vmem %s1, 10
      %v1680 = vld [vmem:[%s1679] sm:$0x3]
      %v1681 = vunpack.c.l.b16 %v1626
      %v1682 = vunpack.c.l.b16 %v1629
      %v1683 = vunpack.c.l.b16 %v1633
      %v1684 = vunpack.c.l.b16 %v1636
      %v1685 = vunpack.c.l.b16 %v1640
      %v1686 = vunpack.c.l.b16 %v1643
      %v1687 = vunpack.c.l.b16 %v1647
      %v1688 = vunpack.c.l.b16 %v1650
      %v1689 = vunpack.c.l.b16 %v1654
      %v1690 = vunpack.c.l.b16 %v1657
      %v1691 = vunpack.c.l.b16 %v1661
      %v1692 = vunpack.c.l.b16 %v1664
      %v1693 = vunpack.c.l.b16 %v1668
      %v1694 = vunpack.c.l.b16 %v1671
      %v1695 = vunpack.c.l.b16 %v1675
      %v1696 = vunpack.c.l.b16 %v1678
      %v1697 = vpack.c.b16 %v1682, %v1681
      %v1698 = vpack.c.b16 %v1684, %v1683
      %v1699 = vpack.c.b16 %v1686, %v1685
      %v1700 = vpack.c.b16 %v1688, %v1687
      %v1701 = vpack.c.b16 %v1690, %v1689
      %v1702 = vpack.c.b16 %v1692, %v1691
      %v1703 = vpack.c.b16 %v1694, %v1693
      %v1704 = vpack.c.b16 %v1696, %v1695
      %v1706 = vsel %vm468, %v1697, 0
      %v1709 = vsel %vm468, %v1698, 0
      %v1712 = vsel %vm468, %v1699, 0
      %v1715 = vsel %vm468, %v1700, 0
      %v1718 = vsel %vm468, %v1701, 0
      %v1721 = vsel %vm468, %v1702, 0
      %v1724 = vsel %vm468, %v1703, 0
      %v1727 = vsel %vm468, %v1704, 0
      %v1730 = vsel %vm493, %v1680, 0
      %1732 = vmatprep.subr.bf16.mxu0 0
      %1733 = vmatpush1.bf16.msra.mxu0 %v1730
      %1734 = vmatprep.subr.bf16.mxu0 0
      %1735 = vmatpush1.bf16.msra.mxu0 0
      %1736 = vmatprep.subr.bf16.mxu0 0
      %1737 = vmatpush1.bf16.msra.mxu0 0
      %1738 = vmatprep.subr.bf16.mxu0 0
      %1739 = vmatpush1.bf16.msra.mxu0 0
      %1740 = vmatprep.subr.bf16.mxu0 0
      %1741 = vmatpush1.bf16.msra.mxu0 0
      %1742 = vmatprep.subr.bf16.mxu0 0
      %1743 = vmatpush1.bf16.msra.mxu0 0
      %1744 = vmatprep.subr.bf16.mxu0 0
      %1745 = vmatpush1.bf16.msra.mxu0 0
      %1746 = vmatprep.subr.bf16.mxu0 0
      %1747 = vmatpush1.bf16.msra.mxu0 0
      %1748 = vmatprep.subr.bf16.mxu0 0
      %1749 = vmatpush1.bf16.msra.mxu0 0
      %1750 = vmatprep.subr.bf16.mxu0 0
      %1751 = vmatpush1.bf16.msra.mxu0 0
      %1752 = vmatprep.subr.bf16.mxu0 0
      %1753 = vmatpush1.bf16.msra.mxu0 0
      %1754 = vmatprep.subr.bf16.mxu0 0
      %1755 = vmatpush1.bf16.msra.mxu0 0
      %1756 = vmatprep.subr.bf16.mxu0 0
      %1757 = vmatpush1.bf16.msra.mxu0 0
      %1758 = vmatprep.subr.bf16.mxu0 0
      %1759 = vmatpush1.bf16.msra.mxu0 0
      %1760 = vmatprep.subr.bf16.mxu0 0
      %1761 = vmatpush1.bf16.msra.mxu0 0
      %1762 = vmatprep.subr.bf16.mxu0 0
      %1763 = vmatpush1.bf16.msra.mxu0 0
      %1764 = vmatprep.mubr.bf16.mxu0 0
      %1765 = vmatmul.mubr.bf16.gmra.mrb[0].mxu0 %v1706
      %v1766 = vpop.f32.mrb[0].mxu0
      %v1767 = vadd.f32 0.0, %v1766
      %v1768 = vpop.f32.mrb[0].mxu0
      %v1769 = vpop.f32.mrb[0].mxu0
      %v1770 = vadd.f32 0.0, %v1769
      %v1771 = vpop.f32.mrb[0].mxu0
      %1772 = vmatprep.mubr.bf16.mxu0 0
      %1773 = vmatmul.mubr.bf16.gmra.mrb[0].mxu0 %v1709
      %v1774 = vpop.f32.mrb[0].mxu0
      %v1775 = vadd.f32 0.0, %v1774
      %v1776 = vpop.f32.mrb[0].mxu0
      %v1777 = vpop.f32.mrb[0].mxu0
      %v1778 = vadd.f32 0.0, %v1777
      %v1779 = vpop.f32.mrb[0].mxu0
      %1780 = vmatprep.mubr.bf16.mxu0 0
      %1781 = vmatmul.mubr.bf16.gmra.mrb[0].mxu0 %v1712
      %v1782 = vpop.f32.mrb[0].mxu0
      %v1783 = vadd.f32 0.0, %v1782
      %v1784 = vpop.f32.mrb[0].mxu0
      %v1785 = vpop.f32.mrb[0].mxu0
      %v1786 = vadd.f32 0.0, %v1785
      %v1787 = vpop.f32.mrb[0].mxu0
      %1788 = vmatprep.mubr.bf16.mxu0 0
      %1789 = vmatmul.mubr.bf16.gmra.mrb[0].mxu0 %v1715
      %v1790 = vpop.f32.mrb[0].mxu0
      %v1791 = vadd.f32 0.0, %v1790
      %v1792 = vpop.f32.mrb[0].mxu0
      %v1793 = vpop.f32.mrb[0].mxu0
      %v1794 = vadd.f32 0.0, %v1793
      %v1795 = vpop.f32.mrb[0].mxu0
      %1796 = vmatprep.mubr.bf16.mxu0 0
      %1797 = vmatmul.mubr.bf16.gmra.mrb[0].mxu0 %v1718
      %v1798 = vpop.f32.mrb[0].mxu0
      %v1799 = vadd.f32 0.0, %v1798
      %v1800 = vpop.f32.mrb[0].mxu0
      %v1801 = vpop.f32.mrb[0].mxu0
      %v1802 = vadd.f32 0.0, %v1801
      %v1803 = vpop.f32.mrb[0].mxu0
      %1804 = vmatprep.mubr.bf16.mxu0 0
      %1805 = vmatmul.mubr.bf16.gmra.mrb[0].mxu0 %v1721
      %v1806 = vpop.f32.mrb[0].mxu0
      %v1807 = vadd.f32 0.0, %v1806
      %v1808 = vpop.f32.mrb[0].mxu0
      %v1809 = vpop.f32.mrb[0].mxu0
      %v1810 = vadd.f32 0.0, %v1809
      %v1811 = vpop.f32.mrb[0].mxu0
      %1812 = vmatprep.mubr.bf16.mxu0 0
      %1813 = vmatmul.mubr.bf16.gmra.mrb[0].mxu0 %v1724
      %v1814 = vpop.f32.mrb[0].mxu0
      %v1815 = vadd.f32 0.0, %v1814
      %v1816 = vpop.f32.mrb[0].mxu0
      %v1817 = vpop.f32.mrb[0].mxu0
      %v1818 = vadd.f32 0.0, %v1817
      %v1819 = vpop.f32.mrb[0].mxu0
      %1820 = vmatprep.mubr.bf16.mxu0 0
      %1821 = vmatmul.mubr.bf16.gmra.mrb[0].mxu0 %v1727
      %v1822 = vpop.f32.mrb[0].mxu0
      %v1823 = vadd.f32 0.0, %v1822
      %v1824 = vpop.f32.mrb[0].mxu0
      %v1825 = vpop.f32.mrb[0].mxu0
      %v1826 = vadd.f32 0.0, %v1825
      %v1827 = vpop.f32.mrb[0].mxu0
      %1828 = vdwg.mxu0
      %v1829 = vadd.f32 %v1575, %v1767
      %v1830 = vadd.f32 %v1576, %v1770
      %v1831 = vadd.f32 %v1577, %v1775
      %v1832 = vadd.f32 %v1578, %v1778
      %v1833 = vadd.f32 %v1579, %v1783
      %v1834 = vadd.f32 %v1580, %v1786
      %v1835 = vadd.f32 %v1581, %v1791
      %v1836 = vadd.f32 %v1582, %v1794
      %v1837 = vadd.f32 %v1583, %v1799
      %v1838 = vadd.f32 %v1584, %v1802
      %v1839 = vadd.f32 %v1585, %v1807
      %v1840 = vadd.f32 %v1586, %v1810
      %v1841 = vadd.f32 %v1587, %v1815
      %v1842 = vadd.f32 %v1588, %v1818
      %v1843 = vadd.f32 %v1589, %v1823
      %v1844 = vadd.f32 %v1590, %v1826
      %s1845 = sadd.s32 %s218, 2
      %s1846 = smul.u32 %s1845, 3
      %s1847 = smul.addr %s1846, 4
      %s1848 = scalar_lea.vmem %s197, %s1847
      %v1849 = vld [vmem:[%s1848] sm:$0xf]
      %v1850 = vld [vmem:[%s1848 + $0x4] sm:$0xf]
      %v1851 = vld [vmem:[%s1848 + $0xc] sm:$0xf]
      %v1852 = vld [vmem:[%s1848 + $0x10] sm:$0xf]
      %v1853 = vld [vmem:[%s1848 + $0x18] sm:$0xf]
      %v1854 = vld [vmem:[%s1848 + $0x1c] sm:$0xf]
      %v1855 = vld [vmem:[%s1848 + $0x24] sm:$0xf]
      %v1856 = vld [vmem:[%s1848 + $0x28] sm:$0xf]
      %v1857 = vld [vmem:[%s1848 + $0x30] sm:$0xf]
      %v1858 = vld [vmem:[%s1848 + $0x34] sm:$0xf]
      %v1859 = vld [vmem:[%s1848 + $0x3c] sm:$0xf]
      %v1860 = vld [vmem:[%s1848 + $0x40] sm:$0xf]
      %v1861 = vld [vmem:[%s1848 + $0x48] sm:$0xf]
      %v1862 = vld [vmem:[%s1848 + $0x4c] sm:$0xf]
      %v1863 = vld [vmem:[%s1848 + $0x54] sm:$0xf]
      %v1864 = vld [vmem:[%s1848 + $0x58] sm:$0xf]
      %s1865 = scalar_lea.vmem %s1, 12
      %v1866 = vld [vmem:[%s1865] sm:$0x3]
      %v1883 = vunpack.c.l.b16 %v1849
      %v1884 = vunpack.c.l.b16 %v1850
      %v1885 = vunpack.c.l.b16 %v1851
      %v1886 = vunpack.c.l.b16 %v1852
      %v1887 = vunpack.c.l.b16 %v1853
      %v1888 = vunpack.c.l.b16 %v1854
      %v1889 = vunpack.c.l.b16 %v1855
      %v1890 = vunpack.c.l.b16 %v1856
      %v1891 = vunpack.c.l.b16 %v1857
      %v1892 = vunpack.c.l.b16 %v1858
      %v1893 = vunpack.c.l.b16 %v1859
      %v1894 = vunpack.c.l.b16 %v1860
      %v1895 = vunpack.c.l.b16 %v1861
      %v1896 = vunpack.c.l.b16 %v1862
      %v1897 = vunpack.c.l.b16 %v1863
      %v1898 = vunpack.c.l.b16 %v1864
      %v1899 = vpack.c.b16 %v1884, %v1883
      %v1900 = vpack.c.b16 %v1886, %v1885
      %v1901 = vpack.c.b16 %v1888, %v1887
      %v1902 = vpack.c.b16 %v1890, %v1889
      %v1903 = vpack.c.b16 %v1892, %v1891
      %v1904 = vpack.c.b16 %v1894, %v1893
      %v1905 = vpack.c.b16 %v1896, %v1895
      %v1906 = vpack.c.b16 %v1898, %v1897
      %v1908 = vsel %vm468, %v1899, 0
      %v1911 = vsel %vm468, %v1900, 0
      %v1914 = vsel %vm468, %v1901, 0
      %v1917 = vsel %vm468, %v1902, 0
      %v1920 = vsel %vm468, %v1903, 0
      %v1923 = vsel %vm468, %v1904, 0
      %v1926 = vsel %vm468, %v1905, 0
      %v1929 = vsel %vm468, %v1906, 0
      %v1932 = vsel %vm493, %v1866, 0
      %1934 = vmatprep.subr.bf16.mxu0 0
      %1935 = vmatpush1.bf16.msra.mxu0 %v1932
      %1936 = vmatprep.subr.bf16.mxu0 0
      %1937 = vmatpush1.bf16.msra.mxu0 0
      %1938 = vmatprep.subr.bf16.mxu0 0
      %1939 = vmatpush1.bf16.msra.mxu0 0
      %1940 = vmatprep.subr.bf16.mxu0 0
      %1941 = vmatpush1.bf16.msra.mxu0 0
      %1942 = vmatprep.subr.bf16.mxu0 0
      %1943 = vmatpush1.bf16.msra.mxu0 0
      %1944 = vmatprep.subr.bf16.mxu0 0
      %1945 = vmatpush1.bf16.msra.mxu0 0
      %1946 = vmatprep.subr.bf16.mxu0 0
      %1947 = vmatpush1.bf16.msra.mxu0 0
      %1948 = vmatprep.subr.bf16.mxu0 0
      %1949 = vmatpush1.bf16.msra.mxu0 0
      %1950 = vmatprep.subr.bf16.mxu0 0
      %1951 = vmatpush1.bf16.msra.mxu0 0
      %1952 = vmatprep.subr.bf16.mxu0 0
      %1953 = vmatpush1.bf16.msra.mxu0 0
      %1954 = vmatprep.subr.bf16.mxu0 0
      %1955 = vmatpush1.bf16.msra.mxu0 0
      %1956 = vmatprep.subr.bf16.mxu0 0
      %1957 = vmatpush1.bf16.msra.mxu0 0
      %1958 = vmatprep.subr.bf16.mxu0 0
      %1959 = vmatpush1.bf16.msra.mxu0 0
      %1960 = vmatprep.subr.bf16.mxu0 0
      %1961 = vmatpush1.bf16.msra.mxu0 0
      %1962 = vmatprep.subr.bf16.mxu0 0
      %1963 = vmatpush1.bf16.msra.mxu0 0
      %1964 = vmatprep.subr.bf16.mxu0 0
      %1965 = vmatpush1.bf16.msra.mxu0 0
      %1966 = vmatprep.mubr.bf16.mxu0 0
      %1967 = vmatmul.mubr.bf16.gmra.mrb[0].mxu0 %v1908
      %v1968 = vpop.f32.mrb[0].mxu0
      %v1969 = vadd.f32 0.0, %v1968
      %v1970 = vpop.f32.mrb[0].mxu0
      %v1971 = vpop.f32.mrb[0].mxu0
      %v1972 = vadd.f32 0.0, %v1971
      %v1973 = vpop.f32.mrb[0].mxu0
      %1974 = vmatprep.mubr.bf16.mxu0 0
      %1975 = vmatmul.mubr.bf16.gmra.mrb[0].mxu0 %v1911
      %v1976 = vpop.f32.mrb[0].mxu0
      %v1977 = vadd.f32 0.0, %v1976
      %v1978 = vpop.f32.mrb[0].mxu0
      %v1979 = vpop.f32.mrb[0].mxu0
      %v1980 = vadd.f32 0.0, %v1979
      %v1981 = vpop.f32.mrb[0].mxu0
      %1982 = vmatprep.mubr.bf16.mxu0 0
      %1983 = vmatmul.mubr.bf16.gmra.mrb[0].mxu0 %v1914
      %v1984 = vpop.f32.mrb[0].mxu0
      %v1985 = vadd.f32 0.0, %v1984
      %v1986 = vpop.f32.mrb[0].mxu0
      %v1987 = vpop.f32.mrb[0].mxu0
      %v1988 = vadd.f32 0.0, %v1987
      %v1989 = vpop.f32.mrb[0].mxu0
      %1990 = vmatprep.mubr.bf16.mxu0 0
      %1991 = vmatmul.mubr.bf16.gmra.mrb[0].mxu0 %v1917
      %v1992 = vpop.f32.mrb[0].mxu0
      %v1993 = vadd.f32 0.0, %v1992
      %v1994 = vpop.f32.mrb[0].mxu0
      %v1995 = vpop.f32.mrb[0].mxu0
      %v1996 = vadd.f32 0.0, %v1995
      %v1997 = vpop.f32.mrb[0].mxu0
      %1998 = vmatprep.mubr.bf16.mxu0 0
      %1999 = vmatmul.mubr.bf16.gmra.mrb[0].mxu0 %v1920
      %v2000 = vpop.f32.mrb[0].mxu0
      %v2001 = vadd.f32 0.0, %v2000
      %v2002 = vpop.f32.mrb[0].mxu0
      %v2003 = vpop.f32.mrb[0].mxu0
      %v2004 = vadd.f32 0.0, %v2003
      %v2005 = vpop.f32.mrb[0].mxu0
      %2006 = vmatprep.mubr.bf16.mxu0 0
      %2007 = vmatmul.mubr.bf16.gmra.mrb[0].mxu0 %v1923
      %v2008 = vpop.f32.mrb[0].mxu0
      %v2009 = vadd.f32 0.0, %v2008
      %v2010 = vpop.f32.mrb[0].mxu0
      %v2011 = vpop.f32.mrb[0].mxu0
      %v2012 = vadd.f32 0.0, %v2011
      %v2013 = vpop.f32.mrb[0].mxu0
      %2014 = vmatprep.mubr.bf16.mxu0 0
      %2015 = vmatmul.mubr.bf16.gmra.mrb[0].mxu0 %v1926
      %v2016 = vpop.f32.mrb[0].mxu0
      %v2017 = vadd.f32 0.0, %v2016
      %v2018 = vpop.f32.mrb[0].mxu0
      %v2019 = vpop.f32.mrb[0].mxu0
      %v2020 = vadd.f32 0.0, %v2019
      %v2021 = vpop.f32.mrb[0].mxu0
      %2022 = vmatprep.mubr.bf16.mxu0 0
      %2023 = vmatmul.mubr.bf16.gmra.mrb[0].mxu0 %v1929
      %v2024 = vpop.f32.mrb[0].mxu0
      %v2025 = vadd.f32 0.0, %v2024
      %v2026 = vpop.f32.mrb[0].mxu0
      %v2027 = vpop.f32.mrb[0].mxu0
      %v2028 = vadd.f32 0.0, %v2027
      %v2029 = vpop.f32.mrb[0].mxu0
      %2030 = vdwg.mxu0
      %v2031 = vadd.f32 %v1829, %v1969
      %v2032 = vadd.f32 %v1830, %v1972
      %v2033 = vadd.f32 %v1831, %v1977
      %v2034 = vadd.f32 %v1832, %v1980
      %v2035 = vadd.f32 %v1833, %v1985
      %v2036 = vadd.f32 %v1834, %v1988
      %v2037 = vadd.f32 %v1835, %v1993
      %v2038 = vadd.f32 %v1836, %v1996
      %v2039 = vadd.f32 %v1837, %v2001
      %v2040 = vadd.f32 %v1838, %v2004
      %v2041 = vadd.f32 %v1839, %v2009
      %v2042 = vadd.f32 %v1840, %v2012
      %v2043 = vadd.f32 %v1841, %v2017
      %v2044 = vadd.f32 %v1842, %v2020
      %v2045 = vadd.f32 %v1843, %v2025
      %v2046 = vadd.f32 %v1844, %v2028
      %v2047 = vld [vmem:[%s1848] sm:$0xf]
      %v2048 = vld [vmem:[%s1848 + $0x4] sm:$0xf]
      %v2049 = vld [vmem:[%s1848 + $0x8] sm:$0x1]
      %v2050 = vld [vmem:[%s1848 + $0xc] sm:$0xf]
      %v2051 = vld [vmem:[%s1848 + $0x10] sm:$0xf]
      %v2052 = vld [vmem:[%s1848 + $0x14] sm:$0x1]
      %v2053 = vld [vmem:[%s1848 + $0x18] sm:$0xf]
      %v2054 = vld [vmem:[%s1848 + $0x1c] sm:$0xf]
      %v2055 = vld [vmem:[%s1848 + $0x20] sm:$0x1]
      %v2056 = vld [vmem:[%s1848 + $0x24] sm:$0xf]
      %v2057 = vld [vmem:[%s1848 + $0x28] sm:$0xf]
      %v2058 = vld [vmem:[%s1848 + $0x2c] sm:$0x1]
      %v2059 = vld [vmem:[%s1848 + $0x30] sm:$0xf]
      %v2060 = vld [vmem:[%s1848 + $0x34] sm:$0xf]
      %v2061 = vld [vmem:[%s1848 + $0x38] sm:$0x1]
      %v2062 = vld [vmem:[%s1848 + $0x3c] sm:$0xf]
      %v2063 = vld [vmem:[%s1848 + $0x40] sm:$0xf]
      %v2064 = vld [vmem:[%s1848 + $0x44] sm:$0x1]
      %v2065 = vld [vmem:[%s1848 + $0x48] sm:$0xf]
      %v2066 = vld [vmem:[%s1848 + $0x4c] sm:$0xf]
      %v2067 = vld [vmem:[%s1848 + $0x50] sm:$0x1]
      %v2068 = vld [vmem:[%s1848 + $0x54] sm:$0xf]
      %v2069 = vld [vmem:[%s1848 + $0x58] sm:$0xf]
      %v2070 = vld [vmem:[%s1848 + $0x5c] sm:$0x1]
      %v2072 = vshrl.u32 %v2047, 16
      %v2074 = vrot.slane %v2072, 4
      %v2075 = vshll.u32 %v2047, 16
      %v2077 = vrot.slane %v2075, 5
      %v2078 = vor.u32 %v2074, %v2077
      %v2079 = vrot.slane %v2078, 4
      %v2081 = vshll.u32 %v2048, 16
      %v2083 = vrot.slane %v2081, 5
      %v2084 = vsel %vm249, %v2079, %v2083
      %v2085 = vshrl.u32 %v2048, 16
      %v2087 = vrot.slane %v2085, 4
      %v2088 = vor.u32 %v2087, %v2083
      %v2089 = vrot.slane %v2088, 4
      %v2091 = vshll.u32 %v2049, 16
      %v2093 = vrot.slane %v2091, 5
      %v2094 = vsel %vm249, %v2089, %v2093
      %v2096 = vshrl.u32 %v2050, 16
      %v2098 = vrot.slane %v2096, 4
      %v2099 = vshll.u32 %v2050, 16
      %v2101 = vrot.slane %v2099, 5
      %v2102 = vor.u32 %v2098, %v2101
      %v2103 = vrot.slane %v2102, 4
      %v2105 = vshll.u32 %v2051, 16
      %v2107 = vrot.slane %v2105, 5
      %v2108 = vsel %vm249, %v2103, %v2107
      %v2109 = vshrl.u32 %v2051, 16
      %v2111 = vrot.slane %v2109, 4
      %v2112 = vor.u32 %v2111, %v2107
      %v2113 = vrot.slane %v2112, 4
      %v2115 = vshll.u32 %v2052, 16
      %v2117 = vrot.slane %v2115, 5
      %v2118 = vsel %vm249, %v2113, %v2117
      %v2120 = vshrl.u32 %v2053, 16
      %v2122 = vrot.slane %v2120, 4
      %v2123 = vshll.u32 %v2053, 16
      %v2125 = vrot.slane %v2123, 5
      %v2126 = vor.u32 %v2122, %v2125
      %v2127 = vrot.slane %v2126, 4
      %v2129 = vshll.u32 %v2054, 16
      %v2131 = vrot.slane %v2129, 5
      %v2132 = vsel %vm249, %v2127, %v2131
      %v2133 = vshrl.u32 %v2054, 16
      %v2135 = vrot.slane %v2133, 4
      %v2136 = vor.u32 %v2135, %v2131
      %v2137 = vrot.slane %v2136, 4
      %v2139 = vshll.u32 %v2055, 16
      %v2141 = vrot.slane %v2139, 5
      %v2142 = vsel %vm249, %v2137, %v2141
      %v2144 = vshrl.u32 %v2056, 16
      %v2146 = vrot.slane %v2144, 4
      %v2147 = vshll.u32 %v2056, 16
      %v2149 = vrot.slane %v2147, 5
      %v2150 = vor.u32 %v2146, %v2149
      %v2151 = vrot.slane %v2150, 4
      %v2153 = vshll.u32 %v2057, 16
      %v2155 = vrot.slane %v2153, 5
      %v2156 = vsel %vm249, %v2151, %v2155
      %v2157 = vshrl.u32 %v2057, 16
      %v2159 = vrot.slane %v2157, 4
      %v2160 = vor.u32 %v2159, %v2155
      %v2161 = vrot.slane %v2160, 4
      %v2163 = vshll.u32 %v2058, 16
      %v2165 = vrot.slane %v2163, 5
      %v2166 = vsel %vm249, %v2161, %v2165
      %v2168 = vshrl.u32 %v2059, 16
      %v2170 = vrot.slane %v2168, 4
      %v2171 = vshll.u32 %v2059, 16
      %v2173 = vrot.slane %v2171, 5
      %v2174 = vor.u32 %v2170, %v2173
      %v2175 = vrot.slane %v2174, 4
      %v2177 = vshll.u32 %v2060, 16
      %v2179 = vrot.slane %v2177, 5
      %v2180 = vsel %vm249, %v2175, %v2179
      %v2181 = vshrl.u32 %v2060, 16
      %v2183 = vrot.slane %v2181, 4
      %v2184 = vor.u32 %v2183, %v2179
      %v2185 = vrot.slane %v2184, 4
      %v2187 = vshll.u32 %v2061, 16
      %v2189 = vrot.slane %v2187, 5
      %v2190 = vsel %vm249, %v2185, %v2189
      %v2192 = vshrl.u32 %v2062, 16
      %v2194 = vrot.slane %v2192, 4
      %v2195 = vshll.u32 %v2062, 16
      %v2197 = vrot.slane %v2195, 5
      %v2198 = vor.u32 %v2194, %v2197
      %v2199 = vrot.slane %v2198, 4
      %v2201 = vshll.u32 %v2063, 16
      %v2203 = vrot.slane %v2201, 5
      %v2204 = vsel %vm249, %v2199, %v2203
      %v2205 = vshrl.u32 %v2063, 16
      %v2207 = vrot.slane %v2205, 4
      %v2208 = vor.u32 %v2207, %v2203
      %v2209 = vrot.slane %v2208, 4
      %v2211 = vshll.u32 %v2064, 16
      %v2213 = vrot.slane %v2211, 5
      %v2214 = vsel %vm249, %v2209, %v2213
      %v2216 = vshrl.u32 %v2065, 16
      %v2218 = vrot.slane %v2216, 4
      %v2219 = vshll.u32 %v2065, 16
      %v2221 = vrot.slane %v2219, 5
      %v2222 = vor.u32 %v2218, %v2221
      %v2223 = vrot.slane %v2222, 4
      %v2225 = vshll.u32 %v2066, 16
      %v2227 = vrot.slane %v2225, 5
      %v2228 = vsel %vm249, %v2223, %v2227
      %v2229 = vshrl.u32 %v2066, 16
      %v2231 = vrot.slane %v2229, 4
      %v2232 = vor.u32 %v2231, %v2227
      %v2233 = vrot.slane %v2232, 4
      %v2235 = vshll.u32 %v2067, 16
      %v2237 = vrot.slane %v2235, 5
      %v2238 = vsel %vm249, %v2233, %v2237
      %v2240 = vshrl.u32 %v2068, 16
      %v2242 = vrot.slane %v2240, 4
      %v2243 = vshll.u32 %v2068, 16
      %v2245 = vrot.slane %v2243, 5
      %v2246 = vor.u32 %v2242, %v2245
      %v2247 = vrot.slane %v2246, 4
      %v2249 = vshll.u32 %v2069, 16
      %v2251 = vrot.slane %v2249, 5
      %v2252 = vsel %vm249, %v2247, %v2251
      %v2253 = vshrl.u32 %v2069, 16
      %v2255 = vrot.slane %v2253, 4
      %v2256 = vor.u32 %v2255, %v2251
      %v2257 = vrot.slane %v2256, 4
      %v2259 = vshll.u32 %v2070, 16
      %v2261 = vrot.slane %v2259, 5
      %v2262 = vsel %vm249, %v2257, %v2261
      %s2263 = scalar_lea.vmem %s1, 14
      %v2264 = vld [vmem:[%s2263] sm:$0x3]
      %v2265 = vunpack.c.l.b16 %v2084
      %v2266 = vunpack.c.l.b16 %v2094
      %v2267 = vunpack.c.l.b16 %v2108
      %v2268 = vunpack.c.l.b16 %v2118
      %v2269 = vunpack.c.l.b16 %v2132
      %v2270 = vunpack.c.l.b16 %v2142
      %v2271 = vunpack.c.l.b16 %v2156
      %v2272 = vunpack.c.l.b16 %v2166
      %v2273 = vunpack.c.l.b16 %v2180
      %v2274 = vunpack.c.l.b16 %v2190
      %v2275 = vunpack.c.l.b16 %v2204
      %v2276 = vunpack.c.l.b16 %v2214
      %v2277 = vunpack.c.l.b16 %v2228
      %v2278 = vunpack.c.l.b16 %v2238
      %v2279 = vunpack.c.l.b16 %v2252
      %v2280 = vunpack.c.l.b16 %v2262
      %v2281 = vpack.c.b16 %v2266, %v2265
      %v2282 = vpack.c.b16 %v2268, %v2267
      %v2283 = vpack.c.b16 %v2270, %v2269
      %v2284 = vpack.c.b16 %v2272, %v2271
      %v2285 = vpack.c.b16 %v2274, %v2273
      %v2286 = vpack.c.b16 %v2276, %v2275
      %v2287 = vpack.c.b16 %v2278, %v2277
      %v2288 = vpack.c.b16 %v2280, %v2279
      %v2290 = vsel %vm468, %v2281, 0
      %v2293 = vsel %vm468, %v2282, 0
      %v2296 = vsel %vm468, %v2283, 0
      %v2299 = vsel %vm468, %v2284, 0
      %v2302 = vsel %vm468, %v2285, 0
      %v2305 = vsel %vm468, %v2286, 0
      %v2308 = vsel %vm468, %v2287, 0
      %v2311 = vsel %vm468, %v2288, 0
      %v2314 = vsel %vm493, %v2264, 0
      %2316 = vmatprep.subr.bf16.mxu0 0
      %2317 = vmatpush1.bf16.msra.mxu0 %v2314
      %2318 = vmatprep.subr.bf16.mxu0 0
      %2319 = vmatpush1.bf16.msra.mxu0 0
      %2320 = vmatprep.subr.bf16.mxu0 0
      %2321 = vmatpush1.bf16.msra.mxu0 0
      %2322 = vmatprep.subr.bf16.mxu0 0
      %2323 = vmatpush1.bf16.msra.mxu0 0
      %2324 = vmatprep.subr.bf16.mxu0 0
      %2325 = vmatpush1.bf16.msra.mxu0 0
      %2326 = vmatprep.subr.bf16.mxu0 0
      %2327 = vmatpush1.bf16.msra.mxu0 0
      %2328 = vmatprep.subr.bf16.mxu0 0
      %2329 = vmatpush1.bf16.msra.mxu0 0
      %2330 = vmatprep.subr.bf16.mxu0 0
      %2331 = vmatpush1.bf16.msra.mxu0 0
      %2332 = vmatprep.subr.bf16.mxu0 0
      %2333 = vmatpush1.bf16.msra.mxu0 0
      %2334 = vmatprep.subr.bf16.mxu0 0
      %2335 = vmatpush1.bf16.msra.mxu0 0
      %2336 = vmatprep.subr.bf16.mxu0 0
      %2337 = vmatpush1.bf16.msra.mxu0 0
      %2338 = vmatprep.subr.bf16.mxu0 0
      %2339 = vmatpush1.bf16.msra.mxu0 0
      %2340 = vmatprep.subr.bf16.mxu0 0
      %2341 = vmatpush1.bf16.msra.mxu0 0
      %2342 = vmatprep.subr.bf16.mxu0 0
      %2343 = vmatpush1.bf16.msra.mxu0 0
      %2344 = vmatprep.subr.bf16.mxu0 0
      %2345 = vmatpush1.bf16.msra.mxu0 0
      %2346 = vmatprep.subr.bf16.mxu0 0
      %2347 = vmatpush1.bf16.msra.mxu0 0
      %2348 = vmatprep.mubr.bf16.mxu0 0
      %2349 = vmatmul.mubr.bf16.gmra.mrb[0].mxu0 %v2290
      %v2350 = vpop.f32.mrb[0].mxu0
      %v2351 = vadd.f32 0.0, %v2350
      %v2352 = vpop.f32.mrb[0].mxu0
      %v2353 = vpop.f32.mrb[0].mxu0
      %v2354 = vadd.f32 0.0, %v2353
      %v2355 = vpop.f32.mrb[0].mxu0
      %2356 = vmatprep.mubr.bf16.mxu0 0
      %2357 = vmatmul.mubr.bf16.gmra.mrb[0].mxu0 %v2293
      %v2358 = vpop.f32.mrb[0].mxu0
      %v2359 = vadd.f32 0.0, %v2358
      %v2360 = vpop.f32.mrb[0].mxu0
      %v2361 = vpop.f32.mrb[0].mxu0
      %v2362 = vadd.f32 0.0, %v2361
      %v2363 = vpop.f32.mrb[0].mxu0
      %2364 = vmatprep.mubr.bf16.mxu0 0
      %2365 = vmatmul.mubr.bf16.gmra.mrb[0].mxu0 %v2296
      %v2366 = vpop.f32.mrb[0].mxu0
      %v2367 = vadd.f32 0.0, %v2366
      %v2368 = vpop.f32.mrb[0].mxu0
      %v2369 = vpop.f32.mrb[0].mxu0
      %v2370 = vadd.f32 0.0, %v2369
      %v2371 = vpop.f32.mrb[0].mxu0
      %2372 = vmatprep.mubr.bf16.mxu0 0
      %2373 = vmatmul.mubr.bf16.gmra.mrb[0].mxu0 %v2299
      %v2374 = vpop.f32.mrb[0].mxu0
      %v2375 = vadd.f32 0.0, %v2374
      %v2376 = vpop.f32.mrb[0].mxu0
      %v2377 = vpop.f32.mrb[0].mxu0
      %v2378 = vadd.f32 0.0, %v2377
      %v2379 = vpop.f32.mrb[0].mxu0
      %2380 = vmatprep.mubr.bf16.mxu0 0
      %2381 = vmatmul.mubr.bf16.gmra.mrb[0].mxu0 %v2302
      %v2382 = vpop.f32.mrb[0].mxu0
      %v2383 = vadd.f32 0.0, %v2382
      %v2384 = vpop.f32.mrb[0].mxu0
      %v2385 = vpop.f32.mrb[0].mxu0
      %v2386 = vadd.f32 0.0, %v2385
      %v2387 = vpop.f32.mrb[0].mxu0
      %2388 = vmatprep.mubr.bf16.mxu0 0
      %2389 = vmatmul.mubr.bf16.gmra.mrb[0].mxu0 %v2305
      %v2390 = vpop.f32.mrb[0].mxu0
      %v2391 = vadd.f32 0.0, %v2390
      %v2392 = vpop.f32.mrb[0].mxu0
      %v2393 = vpop.f32.mrb[0].mxu0
      %v2394 = vadd.f32 0.0, %v2393
      %v2395 = vpop.f32.mrb[0].mxu0
      %2396 = vmatprep.mubr.bf16.mxu0 0
      %2397 = vmatmul.mubr.bf16.gmra.mrb[0].mxu0 %v2308
      %v2398 = vpop.f32.mrb[0].mxu0
      %v2399 = vadd.f32 0.0, %v2398
      %v2400 = vpop.f32.mrb[0].mxu0
      %v2401 = vpop.f32.mrb[0].mxu0
      %v2402 = vadd.f32 0.0, %v2401
      %v2403 = vpop.f32.mrb[0].mxu0
      %2404 = vmatprep.mubr.bf16.mxu0 0
      %2405 = vmatmul.mubr.bf16.gmra.mrb[0].mxu0 %v2311
      %v2406 = vpop.f32.mrb[0].mxu0
      %v2407 = vadd.f32 0.0, %v2406
      %v2408 = vpop.f32.mrb[0].mxu0
      %v2409 = vpop.f32.mrb[0].mxu0
      %v2410 = vadd.f32 0.0, %v2409
      %v2411 = vpop.f32.mrb[0].mxu0
      %2412 = vdwg.mxu0
      %v2413 = vadd.f32 %v2031, %v2351
      %v2414 = vadd.f32 %v2032, %v2354
      %v2415 = vadd.f32 %v2033, %v2359
      %v2416 = vadd.f32 %v2034, %v2362
      %v2417 = vadd.f32 %v2035, %v2367
      %v2418 = vadd.f32 %v2036, %v2370
      %v2419 = vadd.f32 %v2037, %v2375
      %v2420 = vadd.f32 %v2038, %v2378
      %v2421 = vadd.f32 %v2039, %v2383
      %v2422 = vadd.f32 %v2040, %v2386
      %v2423 = vadd.f32 %v2041, %v2391
      %v2424 = vadd.f32 %v2042, %v2394
      %v2425 = vadd.f32 %v2043, %v2399
      %v2426 = vadd.f32 %v2044, %v2402
      %v2427 = vadd.f32 %v2045, %v2407
      %v2428 = vadd.f32 %v2046, %v2410
      %v2429 = vld [vmem:[%s1848] sm:$0xe]
      %v2430 = vld [vmem:[%s1848 + $0xc] sm:$0xe]
      %v2431 = vld [vmem:[%s1848 + $0x18] sm:$0xe]
      %v2432 = vld [vmem:[%s1848 + $0x24] sm:$0xe]
      %v2433 = vld [vmem:[%s1848 + $0x30] sm:$0xe]
      %v2434 = vld [vmem:[%s1848 + $0x3c] sm:$0xe]
      %v2435 = vld [vmem:[%s1848 + $0x48] sm:$0xe]
      %v2436 = vld [vmem:[%s1848 + $0x54] sm:$0xe]
      %v2461 = vrot.slane %v2429, 5
      %v2462 = vrot.slane %v2461, 4
      %v2463 = vrot.slane %v2048, 5
      %v2464 = vsel %vm784, %v2462, %v2463
      %v2465 = vrot.slane %v2463, 4
      %v2466 = vrot.slane %v2049, 5
      %v2467 = vsel %vm784, %v2465, %v2466
      %v2468 = vrot.slane %v2430, 5
      %v2469 = vrot.slane %v2468, 4
      %v2470 = vrot.slane %v2051, 5
      %v2471 = vsel %vm784, %v2469, %v2470
      %v2472 = vrot.slane %v2470, 4
      %v2473 = vrot.slane %v2052, 5
      %v2474 = vsel %vm784, %v2472, %v2473
      %v2475 = vrot.slane %v2431, 5
      %v2476 = vrot.slane %v2475, 4
      %v2477 = vrot.slane %v2054, 5
      %v2478 = vsel %vm784, %v2476, %v2477
      %v2479 = vrot.slane %v2477, 4
      %v2480 = vrot.slane %v2055, 5
      %v2481 = vsel %vm784, %v2479, %v2480
      %v2482 = vrot.slane %v2432, 5
      %v2483 = vrot.slane %v2482, 4
      %v2484 = vrot.slane %v2057, 5
      %v2485 = vsel %vm784, %v2483, %v2484
      %v2486 = vrot.slane %v2484, 4
      %v2487 = vrot.slane %v2058, 5
      %v2488 = vsel %vm784, %v2486, %v2487
      %v2489 = vrot.slane %v2433, 5
      %v2490 = vrot.slane %v2489, 4
      %v2491 = vrot.slane %v2060, 5
      %v2492 = vsel %vm784, %v2490, %v2491
      %v2493 = vrot.slane %v2491, 4
      %v2494 = vrot.slane %v2061, 5
      %v2495 = vsel %vm784, %v2493, %v2494
      %v2496 = vrot.slane %v2434, 5
      %v2497 = vrot.slane %v2496, 4
      %v2498 = vrot.slane %v2063, 5
      %v2499 = vsel %vm784, %v2497, %v2498
      %v2500 = vrot.slane %v2498, 4
      %v2501 = vrot.slane %v2064, 5
      %v2502 = vsel %vm784, %v2500, %v2501
      %v2503 = vrot.slane %v2435, 5
      %v2504 = vrot.slane %v2503, 4
      %v2505 = vrot.slane %v2066, 5
      %v2506 = vsel %vm784, %v2504, %v2505
      %v2507 = vrot.slane %v2505, 4
      %v2508 = vrot.slane %v2067, 5
      %v2509 = vsel %vm784, %v2507, %v2508
      %v2510 = vrot.slane %v2436, 5
      %v2511 = vrot.slane %v2510, 4
      %v2512 = vrot.slane %v2069, 5
      %v2513 = vsel %vm784, %v2511, %v2512
      %v2514 = vrot.slane %v2512, 4
      %v2515 = vrot.slane %v2070, 5
      %v2516 = vsel %vm784, %v2514, %v2515
      %s2517 = scalar_lea.vmem %s1, 16
      %v2518 = vld [vmem:[%s2517] sm:$0x3]
      %v2519 = vunpack.c.l.b16 %v2464
      %v2520 = vunpack.c.l.b16 %v2467
      %v2521 = vunpack.c.l.b16 %v2471
      %v2522 = vunpack.c.l.b16 %v2474
      %v2523 = vunpack.c.l.b16 %v2478
      %v2524 = vunpack.c.l.b16 %v2481
      %v2525 = vunpack.c.l.b16 %v2485
      %v2526 = vunpack.c.l.b16 %v2488
      %v2527 = vunpack.c.l.b16 %v2492
      %v2528 = vunpack.c.l.b16 %v2495
      %v2529 = vunpack.c.l.b16 %v2499
      %v2530 = vunpack.c.l.b16 %v2502
      %v2531 = vunpack.c.l.b16 %v2506
      %v2532 = vunpack.c.l.b16 %v2509
      %v2533 = vunpack.c.l.b16 %v2513
      %v2534 = vunpack.c.l.b16 %v2516
      %v2535 = vpack.c.b16 %v2520, %v2519
      %v2536 = vpack.c.b16 %v2522, %v2521
      %v2537 = vpack.c.b16 %v2524, %v2523
      %v2538 = vpack.c.b16 %v2526, %v2525
      %v2539 = vpack.c.b16 %v2528, %v2527
      %v2540 = vpack.c.b16 %v2530, %v2529
      %v2541 = vpack.c.b16 %v2532, %v2531
      %v2542 = vpack.c.b16 %v2534, %v2533
      %v2544 = vsel %vm468, %v2535, 0
      %v2547 = vsel %vm468, %v2536, 0
      %v2550 = vsel %vm468, %v2537, 0
      %v2553 = vsel %vm468, %v2538, 0
      %v2556 = vsel %vm468, %v2539, 0
      %v2559 = vsel %vm468, %v2540, 0
      %v2562 = vsel %vm468, %v2541, 0
      %v2565 = vsel %vm468, %v2542, 0
      %v2568 = vsel %vm493, %v2518, 0
      %2570 = vmatprep.subr.bf16.mxu0 0
      %2571 = vmatpush1.bf16.msra.mxu0 %v2568
      %2572 = vmatprep.subr.bf16.mxu0 0
      %2573 = vmatpush1.bf16.msra.mxu0 0
      %2574 = vmatprep.subr.bf16.mxu0 0
      %2575 = vmatpush1.bf16.msra.mxu0 0
      %2576 = vmatprep.subr.bf16.mxu0 0
      %2577 = vmatpush1.bf16.msra.mxu0 0
      %2578 = vmatprep.subr.bf16.mxu0 0
      %2579 = vmatpush1.bf16.msra.mxu0 0
      %2580 = vmatprep.subr.bf16.mxu0 0
      %2581 = vmatpush1.bf16.msra.mxu0 0
      %2582 = vmatprep.subr.bf16.mxu0 0
      %2583 = vmatpush1.bf16.msra.mxu0 0
      %2584 = vmatprep.subr.bf16.mxu0 0
      %2585 = vmatpush1.bf16.msra.mxu0 0
      %2586 = vmatprep.subr.bf16.mxu0 0
      %2587 = vmatpush1.bf16.msra.mxu0 0
      %2588 = vmatprep.subr.bf16.mxu0 0
      %2589 = vmatpush1.bf16.msra.mxu0 0
      %2590 = vmatprep.subr.bf16.mxu0 0
      %2591 = vmatpush1.bf16.msra.mxu0 0
      %2592 = vmatprep.subr.bf16.mxu0 0
      %2593 = vmatpush1.bf16.msra.mxu0 0
      %2594 = vmatprep.subr.bf16.mxu0 0
      %2595 = vmatpush1.bf16.msra.mxu0 0
      %2596 = vmatprep.subr.bf16.mxu0 0
      %2597 = vmatpush1.bf16.msra.mxu0 0
      %2598 = vmatprep.subr.bf16.mxu0 0
      %2599 = vmatpush1.bf16.msra.mxu0 0
      %2600 = vmatprep.subr.bf16.mxu0 0
      %2601 = vmatpush1.bf16.msra.mxu0 0
      %2602 = vmatprep.mubr.bf16.mxu0 0
      %2603 = vmatmul.mubr.bf16.gmra.mrb[0].mxu0 %v2544
      %v2604 = vpop.f32.mrb[0].mxu0
      %v2605 = vadd.f32 0.0, %v2604
      %v2606 = vpop.f32.mrb[0].mxu0
      %v2607 = vpop.f32.mrb[0].mxu0
      %v2608 = vadd.f32 0.0, %v2607
      %v2609 = vpop.f32.mrb[0].mxu0
      %2610 = vmatprep.mubr.bf16.mxu0 0
      %2611 = vmatmul.mubr.bf16.gmra.mrb[0].mxu0 %v2547
      %v2612 = vpop.f32.mrb[0].mxu0
      %v2613 = vadd.f32 0.0, %v2612
      %v2614 = vpop.f32.mrb[0].mxu0
      %v2615 = vpop.f32.mrb[0].mxu0
      %v2616 = vadd.f32 0.0, %v2615
      %v2617 = vpop.f32.mrb[0].mxu0
      %2618 = vmatprep.mubr.bf16.mxu0 0
      %2619 = vmatmul.mubr.bf16.gmra.mrb[0].mxu0 %v2550
      %v2620 = vpop.f32.mrb[0].mxu0
      %v2621 = vadd.f32 0.0, %v2620
      %v2622 = vpop.f32.mrb[0].mxu0
      %v2623 = vpop.f32.mrb[0].mxu0
      %v2624 = vadd.f32 0.0, %v2623
      %v2625 = vpop.f32.mrb[0].mxu0
      %2626 = vmatprep.mubr.bf16.mxu0 0
      %2627 = vmatmul.mubr.bf16.gmra.mrb[0].mxu0 %v2553
      %v2628 = vpop.f32.mrb[0].mxu0
      %v2629 = vadd.f32 0.0, %v2628
      %v2630 = vpop.f32.mrb[0].mxu0
      %v2631 = vpop.f32.mrb[0].mxu0
      %v2632 = vadd.f32 0.0, %v2631
      %v2633 = vpop.f32.mrb[0].mxu0
      %2634 = vmatprep.mubr.bf16.mxu0 0
      %2635 = vmatmul.mubr.bf16.gmra.mrb[0].mxu0 %v2556
      %v2636 = vpop.f32.mrb[0].mxu0
      %v2637 = vadd.f32 0.0, %v2636
      %v2638 = vpop.f32.mrb[0].mxu0
      %v2639 = vpop.f32.mrb[0].mxu0
      %v2640 = vadd.f32 0.0, %v2639
      %v2641 = vpop.f32.mrb[0].mxu0
      %2642 = vmatprep.mubr.bf16.mxu0 0
      %2643 = vmatmul.mubr.bf16.gmra.mrb[0].mxu0 %v2559
      %v2644 = vpop.f32.mrb[0].mxu0
      %v2645 = vadd.f32 0.0, %v2644
      %v2646 = vpop.f32.mrb[0].mxu0
      %v2647 = vpop.f32.mrb[0].mxu0
      %v2648 = vadd.f32 0.0, %v2647
      %v2649 = vpop.f32.mrb[0].mxu0
      %2650 = vmatprep.mubr.bf16.mxu0 0
      %2651 = vmatmul.mubr.bf16.gmra.mrb[0].mxu0 %v2562
      %v2652 = vpop.f32.mrb[0].mxu0
      %v2653 = vadd.f32 0.0, %v2652
      %v2654 = vpop.f32.mrb[0].mxu0
      %v2655 = vpop.f32.mrb[0].mxu0
      %v2656 = vadd.f32 0.0, %v2655
      %v2657 = vpop.f32.mrb[0].mxu0
      %2658 = vmatprep.mubr.bf16.mxu0 0
      %2659 = vmatmul.mubr.bf16.gmra.mrb[0].mxu0 %v2565
      %v2660 = vpop.f32.mrb[0].mxu0
      %v2661 = vadd.f32 0.0, %v2660
      %v2662 = vpop.f32.mrb[0].mxu0
      %v2663 = vpop.f32.mrb[0].mxu0
      %v2664 = vadd.f32 0.0, %v2663
      %v2665 = vpop.f32.mrb[0].mxu0
      %2666 = vdwg.mxu0
      %v2667 = vadd.f32 %v2413, %v2605
      %v2668 = vadd.f32 %v2414, %v2608
      %v2669 = vadd.f32 %v2415, %v2613
      %v2670 = vadd.f32 %v2416, %v2616
      %v2671 = vadd.f32 %v2417, %v2621
      %v2672 = vadd.f32 %v2418, %v2624
      %v2673 = vadd.f32 %v2419, %v2629
      %v2674 = vadd.f32 %v2420, %v2632
      %v2675 = vadd.f32 %v2421, %v2637
      %v2676 = vadd.f32 %v2422, %v2640
      %v2677 = vadd.f32 %v2423, %v2645
      %v2678 = vadd.f32 %v2424, %v2648
      %v2679 = vadd.f32 %v2425, %v2653
      %v2680 = vadd.f32 %v2426, %v2656
      %v2681 = vadd.f32 %v2427, %v2661
      %v2682 = vadd.f32 %v2428, %v2664
      %v2683 = vpack.c.bf16 %v2668, %v2667
      %v2684 = vpack.c.bf16 %v2670, %v2669
      %v2685 = vpack.c.bf16 %v2672, %v2671
      %v2686 = vpack.c.bf16 %v2674, %v2673
      %v2687 = vpack.c.bf16 %v2676, %v2675
      %v2688 = vpack.c.bf16 %v2678, %v2677
      %v2689 = vpack.c.bf16 %v2680, %v2679
      %v2690 = vpack.c.bf16 %v2682, %v2681
      %v2699 = vunpack.c.l.b16 %v2683
      %v2700 = vunpack.c.h.b16 %v2683
      %v2701 = vunpack.c.l.b16 %v2684
      %v2702 = vunpack.c.h.b16 %v2684
      %v2703 = vunpack.c.l.b16 %v2685
      %v2704 = vunpack.c.h.b16 %v2685
      %v2705 = vunpack.c.l.b16 %v2686
      %v2706 = vunpack.c.h.b16 %v2686
      %v2707 = vunpack.c.l.b16 %v2687
      %v2708 = vunpack.c.h.b16 %v2687
      %v2709 = vunpack.c.l.b16 %v2688
      %v2710 = vunpack.c.h.b16 %v2688
      %v2711 = vunpack.c.l.b16 %v2689
      %v2712 = vunpack.c.h.b16 %v2689
      %v2713 = vunpack.c.l.b16 %v2690
      %v2714 = vunpack.c.h.b16 %v2690
      %v2715 = vpack.c.b16 %v2699, %v2699
      %v2716 = vpack.c.b16 %v2700, %v2700
      %v2717 = vpack.c.b16 %v2701, %v2701
      %v2718 = vpack.c.b16 %v2702, %v2702
      %v2719 = vpack.c.b16 %v2703, %v2703
      %v2720 = vpack.c.b16 %v2704, %v2704
      %v2721 = vpack.c.b16 %v2705, %v2705
      %v2722 = vpack.c.b16 %v2706, %v2706
      %v2723 = vpack.c.b16 %v2707, %v2707
      %v2724 = vpack.c.b16 %v2708, %v2708
      %v2725 = vpack.c.b16 %v2709, %v2709
      %v2726 = vpack.c.b16 %v2710, %v2710
      %v2727 = vpack.c.b16 %v2711, %v2711
      %v2728 = vpack.c.b16 %v2712, %v2712
      %v2729 = vpack.c.b16 %v2713, %v2713
      %v2730 = vpack.c.b16 %v2714, %v2714
      %vm2747 = vcmask 60416
      %2748 = vst.msk [vmem:[%s207] sm:$0xf] %vm2747, %v2715
      %2749 = vst.msk [vmem:[%s207 + $0x4] sm:$0xf] %vm2747, %v2716
      %2750 = vst.msk [vmem:[%s207 + $0x8] sm:$0xf] %vm2747, %v2717
      %2751 = vst.msk [vmem:[%s207 + $0xc] sm:$0xf] %vm2747, %v2718
      %2752 = vst.msk [vmem:[%s207 + $0x10] sm:$0xf] %vm2747, %v2719
      %2753 = vst.msk [vmem:[%s207 + $0x14] sm:$0xf] %vm2747, %v2720
      %2754 = vst.msk [vmem:[%s207 + $0x18] sm:$0xf] %vm2747, %v2721
      %2755 = vst.msk [vmem:[%s207 + $0x1c] sm:$0xf] %vm2747, %v2722
      %2756 = vst.msk [vmem:[%s207 + $0x20] sm:$0xf] %vm2747, %v2723
      %2757 = vst.msk [vmem:[%s207 + $0x24] sm:$0xf] %vm2747, %v2724
      %2758 = vst.msk [vmem:[%s207 + $0x28] sm:$0xf] %vm2747, %v2725
      %2759 = vst.msk [vmem:[%s207 + $0x2c] sm:$0xf] %vm2747, %v2726
      %2760 = vst.msk [vmem:[%s207 + $0x30] sm:$0xf] %vm2747, %v2727
      %2761 = vst.msk [vmem:[%s207 + $0x34] sm:$0xf] %vm2747, %v2728
      %2762 = vst.msk [vmem:[%s207 + $0x38] sm:$0xf] %vm2747, %v2729
      %2763 = vst.msk [vmem:[%s207 + $0x3c] sm:$0xf] %vm2747, %v2730
      %s2764 = ssub.s32 16, %s218
      %p2765 = scmp.lt.s32.totalorder %s2764, 8
      %s2766 = scalar_select %p2765, %s2764, 8
      %s2767 = smul.u32 %s2766, 16
      %s2768 = scvt.s32.f32 %s2767
      %v2769 = vlaneseq
      %v2770 = vshrl.u32 %v2769, 7
      %v2771 = vadd.s32 %v2770, 8
      %v2772 = vadd.s32 %v2770, 16
      %v2773 = vadd.s32 %v2770, 24
      %v2774 = vadd.s32 %v2770, 32
      %v2775 = vadd.s32 %v2770, 40
      %v2776 = vadd.s32 %v2770, 48
      %v2777 = vadd.s32 %v2770, 56
      %v2778 = vadd.s32 %v2770, 64
      %v2779 = vadd.s32 %v2770, 72
      %v2780 = vadd.s32 %v2770, 80
      %v2781 = vadd.s32 %v2770, 88
      %v2782 = vadd.s32 %v2770, 96
      %v2783 = vadd.s32 %v2770, 104
      %v2784 = vadd.s32 %v2770, 112
      %v2785 = vadd.s32 %v2770, 120
      %v2786 = vstv %s2767
      %vm2787 = vcmp.lt.s32.totalorder %v2770, %v2786
      %vm2788 = vcmp.lt.s32.totalorder %v2771, %v2786
      %vm2789 = vcmp.lt.s32.totalorder %v2772, %v2786
      %vm2790 = vcmp.lt.s32.totalorder %v2773, %v2786
      %vm2791 = vcmp.lt.s32.totalorder %v2774, %v2786
      %vm2792 = vcmp.lt.s32.totalorder %v2775, %v2786
      %vm2793 = vcmp.lt.s32.totalorder %v2776, %v2786
      %vm2794 = vcmp.lt.s32.totalorder %v2777, %v2786
      %vm2795 = vcmp.lt.s32.totalorder %v2778, %v2786
      %vm2796 = vcmp.lt.s32.totalorder %v2779, %v2786
      %vm2797 = vcmp.lt.s32.totalorder %v2780, %v2786
      %vm2798 = vcmp.lt.s32.totalorder %v2781, %v2786
      %vm2799 = vcmp.lt.s32.totalorder %v2782, %v2786
      %vm2800 = vcmp.lt.s32.totalorder %v2783, %v2786
      %vm2801 = vcmp.lt.s32.totalorder %v2784, %v2786
      %vm2802 = vcmp.lt.s32.totalorder %v2785, %v2786
      %v2803 = vsel %vm2787, 1, 0
      %v2804 = vsel %vm2788, 1, 0
      %v2805 = vsel %vm2789, 1, 0
      %v2806 = vsel %vm2790, 1, 0
      %v2807 = vsel %vm2791, 1, 0
      %v2808 = vsel %vm2792, 1, 0
      %v2809 = vsel %vm2793, 1, 0
      %v2810 = vsel %vm2794, 1, 0
      %v2811 = vsel %vm2795, 1, 0
      %v2812 = vsel %vm2796, 1, 0
      %v2813 = vsel %vm2797, 1, 0
      %v2814 = vsel %vm2798, 1, 0
      %v2815 = vsel %vm2799, 1, 0
      %v2816 = vsel %vm2800, 1, 0
      %v2817 = vsel %vm2801, 1, 0
      %v2818 = vsel %vm2802, 1, 0
      %vm2819 = vcmp.eq.s32.totalorder %v2803, 1
      %vm2820 = vcmp.eq.s32.totalorder %v2804, 1
      %vm2821 = vcmp.eq.s32.totalorder %v2805, 1
      %vm2822 = vcmp.eq.s32.totalorder %v2806, 1
      %vm2823 = vcmp.eq.s32.totalorder %v2807, 1
      %vm2824 = vcmp.eq.s32.totalorder %v2808, 1
      %vm2825 = vcmp.eq.s32.totalorder %v2809, 1
      %vm2826 = vcmp.eq.s32.totalorder %v2810, 1
      %vm2827 = vcmp.eq.s32.totalorder %v2811, 1
      %vm2828 = vcmp.eq.s32.totalorder %v2812, 1
      %vm2829 = vcmp.eq.s32.totalorder %v2813, 1
      %vm2830 = vcmp.eq.s32.totalorder %v2814, 1
      %vm2831 = vcmp.eq.s32.totalorder %v2815, 1
      %vm2832 = vcmp.eq.s32.totalorder %v2816, 1
      %vm2833 = vcmp.eq.s32.totalorder %v2817, 1
      %vm2834 = vcmp.eq.s32.totalorder %v2818, 1
      %v2835 = vsel %vm2819, %v2667, 0.0
      %v2836 = vsel %vm2820, %v2668, 0.0
      %v2837 = vsel %vm2821, %v2669, 0.0
      %v2838 = vsel %vm2822, %v2670, 0.0
      %v2839 = vsel %vm2823, %v2671, 0.0
      %v2840 = vsel %vm2824, %v2672, 0.0
      %v2841 = vsel %vm2825, %v2673, 0.0
      %v2842 = vsel %vm2826, %v2674, 0.0
      %v2843 = vsel %vm2827, %v2675, 0.0
      %v2844 = vsel %vm2828, %v2676, 0.0
      %v2845 = vsel %vm2829, %v2677, 0.0
      %v2846 = vsel %vm2830, %v2678, 0.0
      %v2847 = vsel %vm2831, %v2679, 0.0
      %v2848 = vsel %vm2832, %v2680, 0.0
      %v2849 = vsel %vm2833, %v2681, 0.0
      %v2850 = vsel %vm2834, %v2682, 0.0
      %vm2851 = vcmask 64512
      %v2852 = vsel %vm2851, %v2835, 0.0
      %v2853 = vsel %vm2851, %v2836, 0.0
      %v2854 = vadd.f32 %v2852, %v2853
      %v2855 = vsel %vm2851, %v2837, 0.0
      %v2856 = vadd.f32 %v2854, %v2855
      %v2857 = vsel %vm2851, %v2838, 0.0
      %v2858 = vadd.f32 %v2856, %v2857
      %v2859 = vsel %vm2851, %v2839, 0.0
      %v2860 = vadd.f32 %v2858, %v2859
      %v2861 = vsel %vm2851, %v2840, 0.0
      %v2862 = vadd.f32 %v2860, %v2861
      %v2863 = vsel %vm2851, %v2841, 0.0
      %v2864 = vadd.f32 %v2862, %v2863
      %v2865 = vsel %vm2851, %v2842, 0.0
      %v2866 = vadd.f32 %v2864, %v2865
      %v2867 = vsel %vm2851, %v2843, 0.0
      %v2868 = vadd.f32 %v2866, %v2867
      %v2869 = vsel %vm2851, %v2844, 0.0
      %v2870 = vadd.f32 %v2868, %v2869
      %v2871 = vsel %vm2851, %v2845, 0.0
      %v2872 = vadd.f32 %v2870, %v2871
      %v2873 = vsel %vm2851, %v2846, 0.0
      %v2874 = vadd.f32 %v2872, %v2873
      %v2875 = vsel %vm2851, %v2847, 0.0
      %v2876 = vadd.f32 %v2874, %v2875
      %v2877 = vsel %vm2851, %v2848, 0.0
      %v2878 = vadd.f32 %v2876, %v2877
      %v2879 = vsel %vm2851, %v2849, 0.0
      %v2880 = vadd.f32 %v2878, %v2879
      %v2881 = vsel %vm2851, %v2850, 0.0
      %v2882 = vadd.f32 %v2880, %v2881
      %v2883 = vrot.slane %v2882, 4
      %v2884 = vadd.f32 %v2882, %v2883
      %v2885 = vrot.slane %v2884, 2
      %v2886 = vadd.f32 %v2884, %v2885
      %v2887 = vrot.slane %v2886, 1
      %v2888 = vadd.f32 %v2886, %v2887
      %v2889 = vstv %s2768
      %v2890 = vrcp.pop %v2889
      %v2891 = vmul.f32 %v2888, %v2890
      %v2892 = vsub.f32 %v2667, %v2891
      %v2893 = vsub.f32 %v2668, %v2891
      %v2894 = vsub.f32 %v2669, %v2891
      %v2895 = vsub.f32 %v2670, %v2891
      %v2896 = vsub.f32 %v2671, %v2891
      %v2897 = vsub.f32 %v2672, %v2891
      %v2898 = vsub.f32 %v2673, %v2891
      %v2899 = vsub.f32 %v2674, %v2891
      %v2900 = vsub.f32 %v2675, %v2891
      %v2901 = vsub.f32 %v2676, %v2891
      %v2902 = vsub.f32 %v2677, %v2891
      %v2903 = vsub.f32 %v2678, %v2891
      %v2904 = vsub.f32 %v2679, %v2891
      %v2905 = vsub.f32 %v2680, %v2891
      %v2906 = vsub.f32 %v2681, %v2891
      %v2907 = vsub.f32 %v2682, %v2891
      %v2908 = vsel %vm2819, %v2892, 0.0
      %v2909 = vsel %vm2820, %v2893, 0.0
      %v2910 = vsel %vm2821, %v2894, 0.0
      %v2911 = vsel %vm2822, %v2895, 0.0
      %v2912 = vsel %vm2823, %v2896, 0.0
      %v2913 = vsel %vm2824, %v2897, 0.0
      %v2914 = vsel %vm2825, %v2898, 0.0
      %v2915 = vsel %vm2826, %v2899, 0.0
      %v2916 = vsel %vm2827, %v2900, 0.0
      %v2917 = vsel %vm2828, %v2901, 0.0
      %v2918 = vsel %vm2829, %v2902, 0.0
      %v2919 = vsel %vm2830, %v2903, 0.0
      %v2920 = vsel %vm2831, %v2904, 0.0
      %v2921 = vsel %vm2832, %v2905, 0.0
      %v2922 = vsel %vm2833, %v2906, 0.0
      %v2923 = vsel %vm2834, %v2907, 0.0
      %v2924 = vmul.f32 %v2908, %v2908
      %v2925 = vmul.f32 %v2909, %v2909
      %v2926 = vmul.f32 %v2910, %v2910
      %v2927 = vmul.f32 %v2911, %v2911
      %v2928 = vmul.f32 %v2912, %v2912
      %v2929 = vmul.f32 %v2913, %v2913
      %v2930 = vmul.f32 %v2914, %v2914
      %v2931 = vmul.f32 %v2915, %v2915
      %v2932 = vmul.f32 %v2916, %v2916
      %v2933 = vmul.f32 %v2917, %v2917
      %v2934 = vmul.f32 %v2918, %v2918
      %v2935 = vmul.f32 %v2919, %v2919
      %v2936 = vmul.f32 %v2920, %v2920
      %v2937 = vmul.f32 %v2921, %v2921
      %v2938 = vmul.f32 %v2922, %v2922
      %v2939 = vmul.f32 %v2923, %v2923
      %v2940 = vsel %vm2851, %v2924, 0.0
      %v2941 = vsel %vm2851, %v2925, 0.0
      %v2942 = vadd.f32 %v2940, %v2941
      %v2943 = vsel %vm2851, %v2926, 0.0
      %v2944 = vadd.f32 %v2942, %v2943
      %v2945 = vsel %vm2851, %v2927, 0.0
      %v2946 = vadd.f32 %v2944, %v2945
      %v2947 = vsel %vm2851, %v2928, 0.0
      %v2948 = vadd.f32 %v2946, %v2947
      %v2949 = vsel %vm2851, %v2929, 0.0
      %v2950 = vadd.f32 %v2948, %v2949
      %v2951 = vsel %vm2851, %v2930, 0.0
      %v2952 = vadd.f32 %v2950, %v2951
      %v2953 = vsel %vm2851, %v2931, 0.0
      %v2954 = vadd.f32 %v2952, %v2953
      %v2955 = vsel %vm2851, %v2932, 0.0
      %v2956 = vadd.f32 %v2954, %v2955
      %v2957 = vsel %vm2851, %v2933, 0.0
      %v2958 = vadd.f32 %v2956, %v2957
      %v2959 = vsel %vm2851, %v2934, 0.0
      %v2960 = vadd.f32 %v2958, %v2959
      %v2961 = vsel %vm2851, %v2935, 0.0
      %v2962 = vadd.f32 %v2960, %v2961
      %v2963 = vsel %vm2851, %v2936, 0.0
      %v2964 = vadd.f32 %v2962, %v2963
      %v2965 = vsel %vm2851, %v2937, 0.0
      %v2966 = vadd.f32 %v2964, %v2965
      %v2967 = vsel %vm2851, %v2938, 0.0
      %v2968 = vadd.f32 %v2966, %v2967
      %v2969 = vsel %vm2851, %v2939, 0.0
      %v2970 = vadd.f32 %v2968, %v2969
      %v2971 = vrot.slane %v2970, 4
      %v2972 = vadd.f32 %v2970, %v2971
      %v2973 = vrot.slane %v2972, 2
      %v2974 = vadd.f32 %v2972, %v2973
      %v2975 = vrot.slane %v2974, 1
      %v2976 = vadd.f32 %v2974, %v2975
      %vm2977 = vcmask 1040384
      %v2978 = vsel %vm2977, %v2891, %v2976
      %vm2979 = vcmask 58368
      %2980 = vst.msk [vmem:[%s216] sm:$0x3] %vm2979, %v2978
      %s2981 = smul.u32 8, %s20
      %p2982 = scmp.lt.s32.totalorder %s19, 1
      %s2983 = scalar_select %p2982, %s19, 1
      %p2984 = scmp.lt.s32.totalorder %s2981, 15
      %s2985 = scalar_select %p2984, %s2981, 15
      %s2986 = smul.addr %s2985, 2
      %s2987 = smul.addr %s2983, 32
      %s2988 = sadd.s32 %s2986, %s2987
      %s2989 = smul.addr %s2988, 4
      %s2990 = scalar_lea.vmem %s2, %s2989
      %p2991 = scmp.lt.s32.totalorder %s19, 1
      %s2992 = scalar_select %p2991, %s19, 1
      %p2993 = scmp.lt.s32.totalorder %s20, 1
      %s2994 = scalar_select %p2993, %s20, 1
      %s2995 = smul.addr %s2992, 2
      %s2996 = sadd.s32 %s2994, %s2995
      %s2997 = smul.addr %s2996, 2
      %s2998 = scalar_lea.vmem %s3, %s2997
      // Predicated region
      $region29: #{conv_bn_relu_forward.2} parent=27 // pred_check
        %p2999 = pneg %p94
      $region30: #{conv_bn_relu_forward.2} parent=27 // pred_check_branch
        %3001 = sbr.rel (%p2999) target = $region32
      $region31: #{conv_bn_relu_forward.2} parent=27 // pred_region
        %s3002 = smul.u32 8, %s20
      $region32: #{conv_bn_relu_forward.2} parent=27 // pred_fallthru
        _
      // Predicated region
      $region33: #{conv_bn_relu_forward.2} parent=27 // pred_check
        %p3003 = pneg %p122
      $region34: #{conv_bn_relu_forward.2} parent=27 // pred_check_branch
        %3005 = sbr.rel (%p3003) target = $region36
      $region35: #{conv_bn_relu_forward.2} parent=27 // pred_region
        _
      $region36: #{conv_bn_relu_forward.2} parent=27 // pred_fallthru
        _
    $region28: #{conv_bn_relu_forward.2} parent=5 // pred_fallthru
      _
    %p3006 = scmp.le.s32.totalorder 2, %s10
    // Predicated region
    $region37: #{conv_bn_relu_forward.2} parent=5 // pred_check
      %p3007 = pneg %p3006
    $region38: #{conv_bn_relu_forward.2} parent=5 // pred_check_branch
      %3009 = sbr.rel (%p3007) target = $region40
    $region39: #{conv_bn_relu_forward.2} parent=5 // pred_region
      %s3010 = ssub.s32 %s10, 2
      // Predicated region
      $region41: #{conv_bn_relu_forward.2} parent=39 // pred_check
        %p3011 = pneg %p100
      $region42: #{conv_bn_relu_forward.2} parent=39 // pred_check_branch
        %3013 = sbr.rel (%p3011) target = $region44
      $region43: #{conv_bn_relu_forward.2} parent=39 // pred_region
        %s3014 = smul.u32 8, %s22
        %p3015 = scmp.lt.s32.totalorder %s21, 1
        %s3016 = scalar_select %p3015, %s21, 1
        %p3017 = scmp.lt.s32.totalorder %s3014, 15
        %s3018 = scalar_select %p3017, %s3014, 15
        %s3019 = smul.addr %s3018, 2
        %s3020 = smul.addr %s3016, 32
        %s3021 = sadd.s32 %s3019, %s3020
        %s3022 = smul.addr %s3021, 4
        %s3023 = scalar_lea.vmem %s2, %s3022
      $region44: #{conv_bn_relu_forward.2} parent=39 // pred_fallthru
        _
      // Predicated region
      $region45: #{conv_bn_relu_forward.2} parent=39 // pred_check
        %p3024 = pneg %p128
      $region46: #{conv_bn_relu_forward.2} parent=39 // pred_check_branch
        %3026 = sbr.rel (%p3024) target = $region48
      $region47: #{conv_bn_relu_forward.2} parent=39 // pred_region
        %p3027 = scmp.lt.s32.totalorder %s21, 1
        %s3028 = scalar_select %p3027, %s21, 1
        %p3029 = scmp.lt.s32.totalorder %s22, 1
        %s3030 = scalar_select %p3029, %s22, 1
        %s3031 = smul.addr %s3028, 2
        %s3032 = sadd.s32 %s3030, %s3031
        %s3033 = smul.addr %s3032, 2
        %s3034 = scalar_lea.vmem %s3, %s3033
      $region48: #{conv_bn_relu_forward.2} parent=39 // pred_fallthru
        _
    $region40: #{conv_bn_relu_forward.2} parent=5 // pred_fallthru
      _
  $region6: #{conv_bn_relu_forward.2} parent=0 // loop_footer
    %s14 = sadd.s32 1, %s10
  $region7: #{conv_bn_relu_forward.2} parent=0 // loop_footer_branch
    %9 = sbr.rel target = $region3
  $region8: #{conv_bn_relu_forward.2} parent=0 // loop_exit
    _

</llo_original>
